<compile_context>
chip_gen: v6e
topology: v6e:2x2x1
jax: 0.10.0
libtpu: 0.0.40
codegen_flags: <defaults>
</compile_context>

<pallas_src>
import functools

import jax
import jax.numpy as jnp
from jax.experimental import pallas as pl
from jax.experimental.pallas import tpu as pltpu


def _toy_rnn_kernel(
    # inputs
    sf_emb_ref, lf_emb_ref, lf_mask_ref,
    lf_wih_ref, lf_whh_ref, lf_bgi_ref, lf_bhn_ref,
    sf_wih_ref, sf_whh_ref, sf_bgi_ref, sf_bhn_ref,
    attn_wx_ref, attn_wh_ref, attn_b_ref,
    comb_wx_ref, comb_wh_ref, comb_b_ref,
    fc_w_ref, fc_b_ref,
    # outputs
    prob_ref, attn_out_ref,
    *, H, B, T_sf, T_lf, L,
):
    f32 = jnp.float32

    # ---------------- lf GRU (packed-sequence semantics via output masking) ----
    # Hoisted input projection for ALL lf timesteps: one MXU push.
    gi_all = jnp.dot(lf_emb_ref[...], lf_wih_ref[...],
                     preferred_element_type=f32) + lf_bgi_ref[...]      # (T_lf*B, 3H)
    lf_whh = lf_whh_ref[...]
    lf_bhn = jnp.broadcast_to(lf_bhn_ref[...], (B, H))                  # hoisted bcast

    h = jnp.zeros((B, H), f32)
    rows_per_b = [[] for _ in range(B)]          # per-batch (1,H) output rows
    for t in range(T_lf):                        # static unroll (tiny trip count)
        gi = gi_all[t * B:(t + 1) * B]
        gh = jnp.dot(h, lf_whh, preferred_element_type=f32)
        r = jax.nn.sigmoid(gi[:, 0:H] + gh[:, 0:H])
        z = jax.nn.sigmoid(gi[:, H:2 * H] + gh[:, H:2 * H])
        n = jnp.tanh(gi[:, 2 * H:] + r * (gh[:, 2 * H:] + lf_bhn))
        h = (1.0 - z) * n + z * h
        hm = h * lf_mask_ref[t]                  # zero rows past lf_lens[b]
        for b in range(B):
            rows_per_b[b].append(hm[b:b + 1, :])

    # Per-batch attention memory, padded to max_length with zeros (built once).
    pad = [jnp.zeros((L - T_lf, H), f32)] if L > T_lf else []
    lf_rows = [jnp.concatenate(rows_per_b[b] + pad, axis=0) for b in range(B)]  # (L,H)

    # ---------------- sf loop: attention + attn_combine + relu + GRU -----------
    sf_emb = sf_emb_ref[...]                                             # (T_sf*B, H)
    # Hoisted sf_x-dependent halves for ALL timesteps (biases folded in).
    attn_x_all = jnp.dot(sf_emb, attn_wx_ref[...],
                         preferred_element_type=f32) + attn_b_ref[...]   # (T_sf*B, L)
    comb_x_all = jnp.dot(sf_emb, comb_wx_ref[...],
                         preferred_element_type=f32) + comb_b_ref[...]   # (T_sf*B, H)
    attn_wh = attn_wh_ref[...]
    comb_wh = comb_wh_ref[...]
    sf_wih = sf_wih_ref[...]
    sf_whh = sf_whh_ref[...]
    sf_bgi = jnp.broadcast_to(sf_bgi_ref[...], (B, 3 * H))               # hoisted
    sf_bhn = jnp.broadcast_to(sf_bhn_ref[...], (B, H))                   # hoisted

    h = jnp.zeros((B, H), f32)                   # initHidden
    acc = jnp.zeros((B, H), f32)                 # sum of sf GRU outputs (for mean)
    for t in range(T_sf):                        # static unroll
        lo, hi = t * B, (t + 1) * B
        logits = attn_x_all[lo:hi] + jnp.dot(h, attn_wh,
                                             preferred_element_type=f32)  # (B, L)
        m = jnp.max(logits, axis=1, keepdims=True)
        e = jnp.exp(logits - m)
        attn_w = e * pl.reciprocal(jnp.sum(e, axis=1, keepdims=True),
                                   approx=True)                           # softmax
        attn_out_ref[t] = attn_w

        # bmm(attn_w[B,1,L], lf_output[B,L,H]) as per-b (1,L)@(L,H) MXU dots.
        applied = jnp.concatenate(
            [jnp.dot(attn_w[b:b + 1, :], lf_rows[b], preferred_element_type=f32)
             for b in range(B)], axis=0)                                   # (B, H)

        comb = jnp.maximum(
            comb_x_all[lo:hi] + jnp.dot(applied, comb_wh,
                                        preferred_element_type=f32), 0.0)  # relu

        # sf GRU cell (PyTorch gate order r, z, n)
        gi = jnp.dot(comb, sf_wih, preferred_element_type=f32) + sf_bgi
        gh = jnp.dot(h, sf_whh, preferred_element_type=f32)
        r = jax.nn.sigmoid(gi[:, 0:H] + gh[:, 0:H])
        z = jax.nn.sigmoid(gi[:, H:2 * H] + gh[:, H:2 * H])
        n = jnp.tanh(gi[:, 2 * H:] + r * (gh[:, 2 * H:] + sf_bhn))
        h = (1.0 - z) * n + z * h
        acc = acc + h                            # GRU output at step t == h

    # ---------------- mean over time, fc, log_softmax --------------------------
    mean_out = acc * (1.0 / T_sf)
    fc_logits = jnp.dot(mean_out, fc_w_ref[...],
                        preferred_element_type=f32) + fc_b_ref[...]
    m = jnp.max(fc_logits, axis=1, keepdims=True)
    lse = jnp.log(jnp.sum(jnp.exp(fc_logits - m), axis=1, keepdims=True)) + m
    prob_ref[...] = fc_logits - lse


def toy_embed_rnn_sequence_avg(params, sfs, lfs, sf_lens, lf_lens, *, max_length):
    """JAX/Pallas forward matching ToyEmbedRNNSequenceAvg.forward."""
    del sf_lens  # unused by the reference forward as well

    # Embedding lookups are glue (gather) in plain JAX.
    sf_emb = jnp.take(params["embed"], sfs, axis=0).astype(jnp.float32)  # (T_sf, B, H)
    lf_emb = jnp.take(params["embed"], lfs, axis=0).astype(jnp.float32)  # (T_lf, B, H)

    T_sf, B, H = sf_emb.shape
    T_lf = lf_emb.shape[0]
    L = max_length
    O = params["fc_b"].shape[-1]
    assert T_lf <= L, "lf sequence longer than max_length"

    # Flatten time into rows so the kernel can hoist per-timestep input projections
    # into single matmuls (pure metadata reshape in XLA, no in-kernel reshapes).
    sf_emb_flat = sf_emb.reshape(T_sf * B, H)
    lf_emb_flat = lf_emb.reshape(T_lf * B, H)

    # pack_padded_sequence / pad_packed_sequence semantics: precomputed length mask.
    lf_mask = (jnp.arange(T_lf, dtype=jnp.int32)[:, None]
               < lf_lens.astype(jnp.int32)[None, :]).astype(jnp.float32)   # (T_lf, B)
    lf_mask = jnp.broadcast_to(lf_mask[:, :, None], (T_lf, B, H))

    # Pre-fold GRU biases: r/z gates take b_ih + b_hh; n-gate keeps b_hh_n separate
    # (it sits inside the r * (h @ W_hn + b_hn) term).
    def fold_bias(bih, bhh):
        bgi = jnp.concatenate([bih[:, :2 * H] + bhh[:, :2 * H], bih[:, 2 * H:]], axis=1)
        return bgi, bhh[:, 2 * H:]

    lf_bgi, lf_bhn = fold_bias(params["lf_bih"], params["lf_bhh"])
    sf_bgi, sf_bhn = fold_bias(params["sf_bih"], params["sf_bhh"])

    # Split the cat([x, h]) weights so the kernel never concatenates on the lane axis.
    attn_wx, attn_wh = params["attn_w_t"][:H], params["attn_w_t"][H:]
    comb_wx, comb_wh = params["comb_w_t"][:H], params["comb_w_t"][H:]

    kernel = functools.partial(_toy_rnn_kernel, H=H, B=B, T_sf=T_sf, T_lf=T_lf, L=L)
    vmem = pl.BlockSpec(memory_space=pltpu.MemorySpace.VMEM)

    prob, attn_w = pl.pallas_call(
        kernel,
        out_shape=(
            jax.ShapeDtypeStruct((B, O), jnp.float32),        # log-probs
            jax.ShapeDtypeStruct((T_sf, B, L), jnp.float32),  # attention weights
        ),
        in_specs=[vmem] * 19,
        out_specs=(vmem, vmem),
    )(
        sf_emb_flat, lf_emb_flat, lf_mask,
        params["lf_wih_t"], params["lf_whh_t"], lf_bgi, lf_bhn,
        params["sf_wih_t"], params["sf_whh_t"], sf_bgi, sf_bhn,
        attn_wx, attn_wh, params["attn_b"],
        comb_wx, comb_wh, params["comb_b"],
        params["fc_w_t"], params["fc_b"],
    )
    return prob, attn_w


def init_params(key, vocab, H, L, O):
    """Deterministic synthetic parameters (shapes match the PyTorch module).

    Linear/GRU weights are stored pre-transposed so the kernel does x @ W_t + b.
    """
    ks = jax.random.split(key, 15)

    def w(k, shape, scale=0.1):
        return jax.random.normal(k, shape, jnp.float32) * scale

    return dict(
        embed=w(ks[0], (vocab, H), 1.0),
        # nn.GRU(hidden, hidden): weight_ih (3H,H) -> transposed (H,3H), gate order r,z,n
        lf_wih_t=w(ks[1], (H, 3 * H)), lf_whh_t=w(ks[2], (H, 3 * H)),
        lf_bih=w(ks[3], (1, 3 * H)), lf_bhh=w(ks[4], (1, 3 * H)),
        sf_wih_t=w(ks[5], (H, 3 * H)), sf_whh_t=w(ks[6], (H, 3 * H)),
        sf_bih=w(ks[7], (1, 3 * H)), sf_bhh=w(ks[8], (1, 3 * H)),
        # attn: Linear(2H -> max_length)
        attn_w_t=w(ks[9], (2 * H, L)), attn_b=w(ks[10], (1, L)),
        # attn_combine: Linear(2H -> H)
        comb_w_t=w(ks[11], (2 * H, H)), comb_b=w(ks[12], (1, H)),
        # fc: Linear(H -> output_size)
        fc_w_t=w(ks[13], (H, O)), fc_b=w(ks[14], (1, O)),
    )


if __name__ == "__main__":
    # Small shapes consistent with the module's forward.
    VOCAB, H, O, MAX_LEN = 16, 32, 4, 8      # input_size, hidden, output, max_length
    B, T_SF, T_LF = 2, 5, 6                  # batch, sf steps, lf steps (<= max_length)

    root = jax.random.PRNGKey(0)
    k_params, k_sf, k_lf = jax.random.split(root, 3)

    params = init_params(k_params, VOCAB, H, MAX_LEN, O)
    sfs = jax.random.randint(k_sf, (T_SF, B), 0, VOCAB, dtype=jnp.int32)   # (T_sf, B)
    lfs = jax.random.randint(k_lf, (T_LF, B), 0, VOCAB, dtype=jnp.int32)   # (T_lf, B)
    sf_lens = jnp.array([T_SF, 3], dtype=jnp.int32)   # unused (as in PyTorch forward)
    lf_lens = jnp.array([T_LF, 4], dtype=jnp.int32)

    prob, attn_weights = toy_embed_rnn_sequence_avg(
        params, sfs, lfs, sf_lens, lf_lens, max_length=MAX_LEN)
    jax.block_until_ready((prob, attn_weights))

    assert prob.shape == (B, O)
    assert attn_weights.shape == (T_SF, B, MAX_LEN)
    print("KERNEL_OK")
</pallas_src>

<mosaic_0001>
module attributes {stable_mosaic.version = 11 : i64} {
  func.func @_toy_rnn_kernel(%arg0: memref<10x32xf32, #tpu.memory_space<vmem>>, %arg1: memref<12x32xf32, #tpu.memory_space<vmem>>, %arg2: memref<6x2x32xf32, #tpu.memory_space<vmem>>, %arg3: memref<32x96xf32, #tpu.memory_space<vmem>>, %arg4: memref<32x96xf32, #tpu.memory_space<vmem>>, %arg5: memref<1x96xf32, #tpu.memory_space<vmem>>, %arg6: memref<1x32xf32, #tpu.memory_space<vmem>>, %arg7: memref<32x96xf32, #tpu.memory_space<vmem>>, %arg8: memref<32x96xf32, #tpu.memory_space<vmem>>, %arg9: memref<1x96xf32, #tpu.memory_space<vmem>>, %arg10: memref<1x32xf32, #tpu.memory_space<vmem>>, %arg11: memref<32x8xf32, #tpu.memory_space<vmem>>, %arg12: memref<32x8xf32, #tpu.memory_space<vmem>>, %arg13: memref<1x8xf32, #tpu.memory_space<vmem>>, %arg14: memref<32x32xf32, #tpu.memory_space<vmem>>, %arg15: memref<32x32xf32, #tpu.memory_space<vmem>>, %arg16: memref<1x32xf32, #tpu.memory_space<vmem>>, %arg17: memref<32x4xf32, #tpu.memory_space<vmem>>, %arg18: memref<1x4xf32, #tpu.memory_space<vmem>>, %arg19: memref<2x4xf32, #tpu.memory_space<vmem>>, %arg20: memref<5x2x8xf32, #tpu.memory_space<vmem>>) attributes {dimension_semantics = [], scalar_prefetch = 0 : i64, scratch_operands = 0 : i64, tpu.core_type = #tpu.core_type<tc>} {
    %c0 = arith.constant 0 : index
    %c0_0 = arith.constant 0 : index
    %0 = vector.load %arg1[%c0, %c0_0] : memref<12x32xf32, #tpu.memory_space<vmem>>, vector<12x32xf32>
    %c0_1 = arith.constant 0 : index
    %c0_2 = arith.constant 0 : index
    %1 = vector.load %arg3[%c0_1, %c0_2] : memref<32x96xf32, #tpu.memory_space<vmem>>, vector<32x96xf32>
    %cst = arith.constant dense<0.000000e+00> : vector<12x96xf32>
    %2 = tpu.matmul %0, %1, %cst {dimension_numbers = #tpu.dot_dimension_numbers<[1], [0], [0], [1], [0, 0, 1, 1], [], []>} : vector<12x32xf32>, vector<32x96xf32>, vector<12x96xf32> -> vector<12x96xf32>
    %c0_3 = arith.constant 0 : index
    %c0_4 = arith.constant 0 : index
    %3 = vector.load %arg5[%c0_3, %c0_4] : memref<1x96xf32, #tpu.memory_space<vmem>>, vector<1x96xf32>
    %4 = vector.broadcast %3 : vector<1x96xf32> to vector<12x96xf32>
    %5 = arith.addf %2, %4 : vector<12x96xf32>
    %c0_5 = arith.constant 0 : index
    %c0_6 = arith.constant 0 : index
    %6 = vector.load %arg4[%c0_5, %c0_6] : memref<32x96xf32, #tpu.memory_space<vmem>>, vector<32x96xf32>
    %c0_7 = arith.constant 0 : index
    %c0_8 = arith.constant 0 : index
    %7 = vector.load %arg6[%c0_7, %c0_8] : memref<1x32xf32, #tpu.memory_space<vmem>>, vector<1x32xf32>
    %8 = vector.shape_cast %7 : vector<1x32xf32> to vector<1x32xf32>
    %9 = vector.broadcast %8 : vector<1x32xf32> to vector<2x32xf32>
    %cst_9 = arith.constant 0.000000e+00 : f32
    %10 = vector.broadcast %cst_9 : f32 to vector<2x32xf32>
    %11 = vector.extract_strided_slice %5 {offsets = [0, 0], sizes = [2, 96], strides = [1, 1]} : vector<12x96xf32> to vector<2x96xf32>
    %cst_10 = arith.constant dense<0.000000e+00> : vector<2x96xf32>
    %12 = tpu.matmul %10, %6, %cst_10 {dimension_numbers = #tpu.dot_dimension_numbers<[1], [0], [0], [1], [0, 0, 1, 1], [], []>} : vector<2x32xf32>, vector<32x96xf32>, vector<2x96xf32> -> vector<2x96xf32>
    %13 = vector.extract_strided_slice %11 {offsets = [0, 0], sizes = [2, 32], strides = [1, 1]} : vector<2x96xf32> to vector<2x32xf32>
    %14 = vector.extract_strided_slice %12 {offsets = [0, 0], sizes = [2, 32], strides = [1, 1]} : vector<2x96xf32> to vector<2x32xf32>
    %15 = arith.addf %13, %14 : vector<2x32xf32>
    %16 = arith.negf %15 : vector<2x32xf32>
    %17 = math.exp %16 : vector<2x32xf32>
    %cst_11 = arith.constant 1.000000e+00 : f32
    %18 = vector.broadcast %cst_11 : f32 to vector<2x32xf32>
    %19 = arith.addf %18, %17 : vector<2x32xf32>
    %20 = arith.divf %18, %19 : vector<2x32xf32>
    %21 = vector.extract_strided_slice %11 {offsets = [0, 32], sizes = [2, 32], strides = [1, 1]} : vector<2x96xf32> to vector<2x32xf32>
    %22 = vector.extract_strided_slice %12 {offsets = [0, 32], sizes = [2, 32], strides = [1, 1]} : vector<2x96xf32> to vector<2x32xf32>
    %23 = arith.addf %21, %22 : vector<2x32xf32>
    %24 = arith.negf %23 : vector<2x32xf32>
    %25 = math.exp %24 : vector<2x32xf32>
    %cst_12 = arith.constant 1.000000e+00 : f32
    %26 = vector.broadcast %cst_12 : f32 to vector<2x32xf32>
    %27 = arith.addf %26, %25 : vector<2x32xf32>
    %28 = arith.divf %26, %27 : vector<2x32xf32>
    %29 = vector.extract_strided_slice %11 {offsets = [0, 64], sizes = [2, 32], strides = [1, 1]} : vector<2x96xf32> to vector<2x32xf32>
    %30 = vector.extract_strided_slice %12 {offsets = [0, 64], sizes = [2, 32], strides = [1, 1]} : vector<2x96xf32> to vector<2x32xf32>
    %31 = arith.addf %30, %9 : vector<2x32xf32>
    %32 = arith.mulf %20, %31 : vector<2x32xf32>
    %33 = arith.addf %29, %32 : vector<2x32xf32>
    %34 = math.tanh %33 : vector<2x32xf32>
    %cst_13 = arith.constant 1.000000e+00 : f32
    %35 = vector.broadcast %cst_13 : f32 to vector<2x32xf32>
    %36 = arith.subf %35, %28 : vector<2x32xf32>
    %37 = arith.mulf %36, %34 : vector<2x32xf32>
    %38 = arith.mulf %28, %10 : vector<2x32xf32>
    %39 = arith.addf %37, %38 : vector<2x32xf32>
    %c0_14 = arith.constant 0 : index
    %c0_15 = arith.constant 0 : index
    %c0_16 = arith.constant 0 : index
    %40 = vector.load %arg2[%c0_14, %c0_15, %c0_16] : memref<6x2x32xf32, #tpu.memory_space<vmem>>, vector<1x2x32xf32>
    %41 = vector.shape_cast %40 : vector<1x2x32xf32> to vector<2x32xf32>
    %42 = arith.mulf %39, %41 : vector<2x32xf32>
    %43 = vector.extract_strided_slice %42 {offsets = [0, 0], sizes = [1, 32], strides = [1, 1]} : vector<2x32xf32> to vector<1x32xf32>
    %44 = vector.extract_strided_slice %42 {offsets = [1, 0], sizes = [1, 32], strides = [1, 1]} : vector<2x32xf32> to vector<1x32xf32>
    %45 = vector.extract_strided_slice %5 {offsets = [2, 0], sizes = [2, 96], strides = [1, 1]} : vector<12x96xf32> to vector<2x96xf32>
    %cst_17 = arith.constant dense<0.000000e+00> : vector<2x96xf32>
    %46 = tpu.matmul %39, %6, %cst_17 {dimension_numbers = #tpu.dot_dimension_numbers<[1], [0], [0], [1], [0, 0, 1, 1], [], []>} : vector<2x32xf32>, vector<32x96xf32>, vector<2x96xf32> -> vector<2x96xf32>
    %47 = vector.extract_strided_slice %45 {offsets = [0, 0], sizes = [2, 32], strides = [1, 1]} : vector<2x96xf32> to vector<2x32xf32>
    %48 = vector.extract_strided_slice %46 {offsets = [0, 0], sizes = [2, 32], strides = [1, 1]} : vector<2x96xf32> to vector<2x32xf32>
    %49 = arith.addf %47, %48 : vector<2x32xf32>
    %50 = arith.negf %49 : vector<2x32xf32>
    %51 = math.exp %50 : vector<2x32xf32>
    %cst_18 = arith.constant 1.000000e+00 : f32
    %52 = vector.broadcast %cst_18 : f32 to vector<2x32xf32>
    %53 = arith.addf %52, %51 : vector<2x32xf32>
    %54 = arith.divf %52, %53 : vector<2x32xf32>
    %55 = vector.extract_strided_slice %45 {offsets = [0, 32], sizes = [2, 32], strides = [1, 1]} : vector<2x96xf32> to vector<2x32xf32>
    %56 = vector.extract_strided_slice %46 {offsets = [0, 32], sizes = [2, 32], strides = [1, 1]} : vector<2x96xf32> to vector<2x32xf32>
    %57 = arith.addf %55, %56 : vector<2x32xf32>
    %58 = arith.negf %57 : vector<2x32xf32>
    %59 = math.exp %58 : vector<2x32xf32>
    %cst_19 = arith.constant 1.000000e+00 : f32
    %60 = vector.broadcast %cst_19 : f32 to vector<2x32xf32>
    %61 = arith.addf %60, %59 : vector<2x32xf32>
    %62 = arith.divf %60, %61 : vector<2x32xf32>
    %63 = vector.extract_strided_slice %45 {offsets = [0, 64], sizes = [2, 32], strides = [1, 1]} : vector<2x96xf32> to vector<2x32xf32>
    %64 = vector.extract_strided_slice %46 {offsets = [0, 64], sizes = [2, 32], strides = [1, 1]} : vector<2x96xf32> to vector<2x32xf32>
    %65 = arith.addf %64, %9 : vector<2x32xf32>
    %66 = arith.mulf %54, %65 : vector<2x32xf32>
    %67 = arith.addf %63, %66 : vector<2x32xf32>
    %68 = math.tanh %67 : vector<2x32xf32>
    %cst_20 = arith.constant 1.000000e+00 : f32
    %69 = vector.broadcast %cst_20 : f32 to vector<2x32xf32>
    %70 = arith.subf %69, %62 : vector<2x32xf32>
    %71 = arith.mulf %70, %68 : vector<2x32xf32>
    %72 = arith.mulf %62, %39 : vector<2x32xf32>
    %73 = arith.addf %71, %72 : vector<2x32xf32>
    %c1 = arith.constant 1 : index
    %c0_21 = arith.constant 0 : index
    %c0_22 = arith.constant 0 : index
    %74 = vector.load %arg2[%c1, %c0_21, %c0_22] : memref<6x2x32xf32, #tpu.memory_space<vmem>>, vector<1x2x32xf32>
    %75 = vector.shape_cast %74 : vector<1x2x32xf32> to vector<2x32xf32>
    %76 = arith.mulf %73, %75 : vector<2x32xf32>
    %77 = vector.extract_strided_slice %76 {offsets = [0, 0], sizes = [1, 32], strides = [1, 1]} : vector<2x32xf32> to vector<1x32xf32>
    %78 = vector.extract_strided_slice %76 {offsets = [1, 0], sizes = [1, 32], strides = [1, 1]} : vector<2x32xf32> to vector<1x32xf32>
    %79 = vector.extract_strided_slice %5 {offsets = [4, 0], sizes = [2, 96], strides = [1, 1]} : vector<12x96xf32> to vector<2x96xf32>
    %cst_23 = arith.constant dense<0.000000e+00> : vector<2x96xf32>
    %80 = tpu.matmul %73, %6, %cst_23 {dimension_numbers = #tpu.dot_dimension_numbers<[1], [0], [0], [1], [0, 0, 1, 1], [], []>} : vector<2x32xf32>, vector<32x96xf32>, vector<2x96xf32> -> vector<2x96xf32>
    %81 = vector.extract_strided_slice %79 {offsets = [0, 0], sizes = [2, 32], strides = [1, 1]} : vector<2x96xf32> to vector<2x32xf32>
    %82 = vector.extract_strided_slice %80 {offsets = [0, 0], sizes = [2, 32], strides = [1, 1]} : vector<2x96xf32> to vector<2x32xf32>
    %83 = arith.addf %81, %82 : vector<2x32xf32>
    %84 = arith.negf %83 : vector<2x32xf32>
    %85 = math.exp %84 : vector<2x32xf32>
    %cst_24 = arith.constant 1.000000e+00 : f32
    %86 = vector.broadcast %cst_24 : f32 to vector<2x32xf32>
    %87 = arith.addf %86, %85 : vector<2x32xf32>
    %88 = arith.divf %86, %87 : vector<2x32xf32>
    %89 = vector.extract_strided_slice %79 {offsets = [0, 32], sizes = [2, 32], strides = [1, 1]} : vector<2x96xf32> to vector<2x32xf32>
    %90 = vector.extract_strided_slice %80 {offsets = [0, 32], sizes = [2, 32], strides = [1, 1]} : vector<2x96xf32> to vector<2x32xf32>
    %91 = arith.addf %89, %90 : vector<2x32xf32>
    %92 = arith.negf %91 : vector<2x32xf32>
    %93 = math.exp %92 : vector<2x32xf32>
    %cst_25 = arith.constant 1.000000e+00 : f32
    %94 = vector.broadcast %cst_25 : f32 to vector<2x32xf32>
    %95 = arith.addf %94, %93 : vector<2x32xf32>
    %96 = arith.divf %94, %95 : vector<2x32xf32>
    %97 = vector.extract_strided_slice %79 {offsets = [0, 64], sizes = [2, 32], strides = [1, 1]} : vector<2x96xf32> to vector<2x32xf32>
    %98 = vector.extract_strided_slice %80 {offsets = [0, 64], sizes = [2, 32], strides = [1, 1]} : vector<2x96xf32> to vector<2x32xf32>
    %99 = arith.addf %98, %9 : vector<2x32xf32>
    %100 = arith.mulf %88, %99 : vector<2x32xf32>
    %101 = arith.addf %97, %100 : vector<2x32xf32>
    %102 = math.tanh %101 : vector<2x32xf32>
    %cst_26 = arith.constant 1.000000e+00 : f32
    %103 = vector.broadcast %cst_26 : f32 to vector<2x32xf32>
    %104 = arith.subf %103, %96 : vector<2x32xf32>
    %105 = arith.mulf %104, %102 : vector<2x32xf32>
    %106 = arith.mulf %96, %73 : vector<2x32xf32>
    %107 = arith.addf %105, %106 : vector<2x32xf32>
    %c2 = arith.constant 2 : index
    %c0_27 = arith.constant 0 : index
    %c0_28 = arith.constant 0 : index
    %108 = vector.load %arg2[%c2, %c0_27, %c0_28] : memref<6x2x32xf32, #tpu.memory_space<vmem>>, vector<1x2x32xf32>
    %109 = vector.shape_cast %108 : vector<1x2x32xf32> to vector<2x32xf32>
    %110 = arith.mulf %107, %109 : vector<2x32xf32>
    %111 = vector.extract_strided_slice %110 {offsets = [0, 0], sizes = [1, 32], strides = [1, 1]} : vector<2x32xf32> to vector<1x32xf32>
    %112 = vector.extract_strided_slice %110 {offsets = [1, 0], sizes = [1, 32], strides = [1, 1]} : vector<2x32xf32> to vector<1x32xf32>
    %113 = vector.extract_strided_slice %5 {offsets = [6, 0], sizes = [2, 96], strides = [1, 1]} : vector<12x96xf32> to vector<2x96xf32>
    %cst_29 = arith.constant dense<0.000000e+00> : vector<2x96xf32>
    %114 = tpu.matmul %107, %6, %cst_29 {dimension_numbers = #tpu.dot_dimension_numbers<[1], [0], [0], [1], [0, 0, 1, 1], [], []>} : vector<2x32xf32>, vector<32x96xf32>, vector<2x96xf32> -> vector<2x96xf32>
    %115 = vector.extract_strided_slice %113 {offsets = [0, 0], sizes = [2, 32], strides = [1, 1]} : vector<2x96xf32> to vector<2x32xf32>
    %116 = vector.extract_strided_slice %114 {offsets = [0, 0], sizes = [2, 32], strides = [1, 1]} : vector<2x96xf32> to vector<2x32xf32>
    %117 = arith.addf %115, %116 : vector<2x32xf32>
    %118 = arith.negf %117 : vector<2x32xf32>
    %119 = math.exp %118 : vector<2x32xf32>
    %cst_30 = arith.constant 1.000000e+00 : f32
    %120 = vector.broadcast %cst_30 : f32 to vector<2x32xf32>
    %121 = arith.addf %120, %119 : vector<2x32xf32>
    %122 = arith.divf %120, %121 : vector<2x32xf32>
    %123 = vector.extract_strided_slice %113 {offsets = [0, 32], sizes = [2, 32], strides = [1, 1]} : vector<2x96xf32> to vector<2x32xf32>
    %124 = vector.extract_strided_slice %114 {offsets = [0, 32], sizes = [2, 32], strides = [1, 1]} : vector<2x96xf32> to vector<2x32xf32>
    %125 = arith.addf %123, %124 : vector<2x32xf32>
    %126 = arith.negf %125 : vector<2x32xf32>
    %127 = math.exp %126 : vector<2x32xf32>
    %cst_31 = arith.constant 1.000000e+00 : f32
    %128 = vector.broadcast %cst_31 : f32 to vector<2x32xf32>
    %129 = arith.addf %128, %127 : vector<2x32xf32>
    %130 = arith.divf %128, %129 : vector<2x32xf32>
    %131 = vector.extract_strided_slice %113 {offsets = [0, 64], sizes = [2, 32], strides = [1, 1]} : vector<2x96xf32> to vector<2x32xf32>
    %132 = vector.extract_strided_slice %114 {offsets = [0, 64], sizes = [2, 32], strides = [1, 1]} : vector<2x96xf32> to vector<2x32xf32>
    %133 = arith.addf %132, %9 : vector<2x32xf32>
    %134 = arith.mulf %122, %133 : vector<2x32xf32>
    %135 = arith.addf %131, %134 : vector<2x32xf32>
    %136 = math.tanh %135 : vector<2x32xf32>
    %cst_32 = arith.constant 1.000000e+00 : f32
    %137 = vector.broadcast %cst_32 : f32 to vector<2x32xf32>
    %138 = arith.subf %137, %130 : vector<2x32xf32>
    %139 = arith.mulf %138, %136 : vector<2x32xf32>
    %140 = arith.mulf %130, %107 : vector<2x32xf32>
    %141 = arith.addf %139, %140 : vector<2x32xf32>
    %c3 = arith.constant 3 : index
    %c0_33 = arith.constant 0 : index
    %c0_34 = arith.constant 0 : index
    %142 = vector.load %arg2[%c3, %c0_33, %c0_34] : memref<6x2x32xf32, #tpu.memory_space<vmem>>, vector<1x2x32xf32>
    %143 = vector.shape_cast %142 : vector<1x2x32xf32> to vector<2x32xf32>
    %144 = arith.mulf %141, %143 : vector<2x32xf32>
    %145 = vector.extract_strided_slice %144 {offsets = [0, 0], sizes = [1, 32], strides = [1, 1]} : vector<2x32xf32> to vector<1x32xf32>
    %146 = vector.extract_strided_slice %144 {offsets = [1, 0], sizes = [1, 32], strides = [1, 1]} : vector<2x32xf32> to vector<1x32xf32>
    %147 = vector.extract_strided_slice %5 {offsets = [8, 0], sizes = [2, 96], strides = [1, 1]} : vector<12x96xf32> to vector<2x96xf32>
    %cst_35 = arith.constant dense<0.000000e+00> : vector<2x96xf32>
    %148 = tpu.matmul %141, %6, %cst_35 {dimension_numbers = #tpu.dot_dimension_numbers<[1], [0], [0], [1], [0, 0, 1, 1], [], []>} : vector<2x32xf32>, vector<32x96xf32>, vector<2x96xf32> -> vector<2x96xf32>
    %149 = vector.extract_strided_slice %147 {offsets = [0, 0], sizes = [2, 32], strides = [1, 1]} : vector<2x96xf32> to vector<2x32xf32>
    %150 = vector.extract_strided_slice %148 {offsets = [0, 0], sizes = [2, 32], strides = [1, 1]} : vector<2x96xf32> to vector<2x32xf32>
    %151 = arith.addf %149, %150 : vector<2x32xf32>
    %152 = arith.negf %151 : vector<2x32xf32>
    %153 = math.exp %152 : vector<2x32xf32>
    %cst_36 = arith.constant 1.000000e+00 : f32
    %154 = vector.broadcast %cst_36 : f32 to vector<2x32xf32>
    %155 = arith.addf %154, %153 : vector<2x32xf32>
    %156 = arith.divf %154, %155 : vector<2x32xf32>
    %157 = vector.extract_strided_slice %147 {offsets = [0, 32], sizes = [2, 32], strides = [1, 1]} : vector<2x96xf32> to vector<2x32xf32>
    %158 = vector.extract_strided_slice %148 {offsets = [0, 32], sizes = [2, 32], strides = [1, 1]} : vector<2x96xf32> to vector<2x32xf32>
    %159 = arith.addf %157, %158 : vector<2x32xf32>
    %160 = arith.negf %159 : vector<2x32xf32>
    %161 = math.exp %160 : vector<2x32xf32>
    %cst_37 = arith.constant 1.000000e+00 : f32
    %162 = vector.broadcast %cst_37 : f32 to vector<2x32xf32>
    %163 = arith.addf %162, %161 : vector<2x32xf32>
    %164 = arith.divf %162, %163 : vector<2x32xf32>
    %165 = vector.extract_strided_slice %147 {offsets = [0, 64], sizes = [2, 32], strides = [1, 1]} : vector<2x96xf32> to vector<2x32xf32>
    %166 = vector.extract_strided_slice %148 {offsets = [0, 64], sizes = [2, 32], strides = [1, 1]} : vector<2x96xf32> to vector<2x32xf32>
    %167 = arith.addf %166, %9 : vector<2x32xf32>
    %168 = arith.mulf %156, %167 : vector<2x32xf32>
    %169 = arith.addf %165, %168 : vector<2x32xf32>
    %170 = math.tanh %169 : vector<2x32xf32>
    %cst_38 = arith.constant 1.000000e+00 : f32
    %171 = vector.broadcast %cst_38 : f32 to vector<2x32xf32>
    %172 = arith.subf %171, %164 : vector<2x32xf32>
    %173 = arith.mulf %172, %170 : vector<2x32xf32>
    %174 = arith.mulf %164, %141 : vector<2x32xf32>
    %175 = arith.addf %173, %174 : vector<2x32xf32>
    %c4 = arith.constant 4 : index
    %c0_39 = arith.constant 0 : index
    %c0_40 = arith.constant 0 : index
    %176 = vector.load %arg2[%c4, %c0_39, %c0_40] : memref<6x2x32xf32, #tpu.memory_space<vmem>>, vector<1x2x32xf32>
    %177 = vector.shape_cast %176 : vector<1x2x32xf32> to vector<2x32xf32>
    %178 = arith.mulf %175, %177 : vector<2x32xf32>
    %179 = vector.extract_strided_slice %178 {offsets = [0, 0], sizes = [1, 32], strides = [1, 1]} : vector<2x32xf32> to vector<1x32xf32>
    %180 = vector.extract_strided_slice %178 {offsets = [1, 0], sizes = [1, 32], strides = [1, 1]} : vector<2x32xf32> to vector<1x32xf32>
    %181 = vector.extract_strided_slice %5 {offsets = [10, 0], sizes = [2, 96], strides = [1, 1]} : vector<12x96xf32> to vector<2x96xf32>
    %cst_41 = arith.constant dense<0.000000e+00> : vector<2x96xf32>
    %182 = tpu.matmul %175, %6, %cst_41 {dimension_numbers = #tpu.dot_dimension_numbers<[1], [0], [0], [1], [0, 0, 1, 1], [], []>} : vector<2x32xf32>, vector<32x96xf32>, vector<2x96xf32> -> vector<2x96xf32>
    %183 = vector.extract_strided_slice %181 {offsets = [0, 0], sizes = [2, 32], strides = [1, 1]} : vector<2x96xf32> to vector<2x32xf32>
    %184 = vector.extract_strided_slice %182 {offsets = [0, 0], sizes = [2, 32], strides = [1, 1]} : vector<2x96xf32> to vector<2x32xf32>
    %185 = arith.addf %183, %184 : vector<2x32xf32>
    %186 = arith.negf %185 : vector<2x32xf32>
    %187 = math.exp %186 : vector<2x32xf32>
    %cst_42 = arith.constant 1.000000e+00 : f32
    %188 = vector.broadcast %cst_42 : f32 to vector<2x32xf32>
    %189 = arith.addf %188, %187 : vector<2x32xf32>
    %190 = arith.divf %188, %189 : vector<2x32xf32>
    %191 = vector.extract_strided_slice %181 {offsets = [0, 32], sizes = [2, 32], strides = [1, 1]} : vector<2x96xf32> to vector<2x32xf32>
    %192 = vector.extract_strided_slice %182 {offsets = [0, 32], sizes = [2, 32], strides = [1, 1]} : vector<2x96xf32> to vector<2x32xf32>
    %193 = arith.addf %191, %192 : vector<2x32xf32>
    %194 = arith.negf %193 : vector<2x32xf32>
    %195 = math.exp %194 : vector<2x32xf32>
    %cst_43 = arith.constant 1.000000e+00 : f32
    %196 = vector.broadcast %cst_43 : f32 to vector<2x32xf32>
    %197 = arith.addf %196, %195 : vector<2x32xf32>
    %198 = arith.divf %196, %197 : vector<2x32xf32>
    %199 = vector.extract_strided_slice %181 {offsets = [0, 64], sizes = [2, 32], strides = [1, 1]} : vector<2x96xf32> to vector<2x32xf32>
    %200 = vector.extract_strided_slice %182 {offsets = [0, 64], sizes = [2, 32], strides = [1, 1]} : vector<2x96xf32> to vector<2x32xf32>
    %201 = arith.addf %200, %9 : vector<2x32xf32>
    %202 = arith.mulf %190, %201 : vector<2x32xf32>
    %203 = arith.addf %199, %202 : vector<2x32xf32>
    %204 = math.tanh %203 : vector<2x32xf32>
    %cst_44 = arith.constant 1.000000e+00 : f32
    %205 = vector.broadcast %cst_44 : f32 to vector<2x32xf32>
    %206 = arith.subf %205, %198 : vector<2x32xf32>
    %207 = arith.mulf %206, %204 : vector<2x32xf32>
    %208 = arith.mulf %198, %175 : vector<2x32xf32>
    %209 = arith.addf %207, %208 : vector<2x32xf32>
    %c5 = arith.constant 5 : index
    %c0_45 = arith.constant 0 : index
    %c0_46 = arith.constant 0 : index
    %210 = vector.load %arg2[%c5, %c0_45, %c0_46] : memref<6x2x32xf32, #tpu.memory_space<vmem>>, vector<1x2x32xf32>
    %211 = vector.shape_cast %210 : vector<1x2x32xf32> to vector<2x32xf32>
    %212 = arith.mulf %209, %211 : vector<2x32xf32>
    %213 = vector.extract_strided_slice %212 {offsets = [0, 0], sizes = [1, 32], strides = [1, 1]} : vector<2x32xf32> to vector<1x32xf32>
    %214 = vector.extract_strided_slice %212 {offsets = [1, 0], sizes = [1, 32], strides = [1, 1]} : vector<2x32xf32> to vector<1x32xf32>
    %cst_47 = arith.constant 0.000000e+00 : f32
    %215 = vector.broadcast %cst_47 : f32 to vector<2x32xf32>
    %216 = tpu.concatenate %43, %77, %111, %145, %179, %213, %215 in 0 : vector<1x32xf32>, vector<1x32xf32>, vector<1x32xf32>, vector<1x32xf32>, vector<1x32xf32>, vector<1x32xf32>, vector<2x32xf32> -> vector<8x32xf32>
    %217 = tpu.concatenate %44, %78, %112, %146, %180, %214, %215 in 0 : vector<1x32xf32>, vector<1x32xf32>, vector<1x32xf32>, vector<1x32xf32>, vector<1x32xf32>, vector<1x32xf32>, vector<2x32xf32> -> vector<8x32xf32>
    %c0_48 = arith.constant 0 : index
    %c0_49 = arith.constant 0 : index
    %218 = vector.load %arg0[%c0_48, %c0_49] : memref<10x32xf32, #tpu.memory_space<vmem>>, vector<10x32xf32>
    %c0_50 = arith.constant 0 : index
    %c0_51 = arith.constant 0 : index
    %219 = vector.load %arg11[%c0_50, %c0_51] : memref<32x8xf32, #tpu.memory_space<vmem>>, vector<32x8xf32>
    %cst_52 = arith.constant dense<0.000000e+00> : vector<10x8xf32>
    %220 = tpu.matmul %218, %219, %cst_52 {dimension_numbers = #tpu.dot_dimension_numbers<[1], [0], [0], [1], [0, 0, 1, 1], [], []>} : vector<10x32xf32>, vector<32x8xf32>, vector<10x8xf32> -> vector<10x8xf32>
    %c0_53 = arith.constant 0 : index
    %c0_54 = arith.constant 0 : index
    %221 = vector.load %arg13[%c0_53, %c0_54] : memref<1x8xf32, #tpu.memory_space<vmem>>, vector<1x8xf32>
    %222 = vector.broadcast %221 : vector<1x8xf32> to vector<10x8xf32>
    %223 = arith.addf %220, %222 : vector<10x8xf32>
    %c0_55 = arith.constant 0 : index
    %c0_56 = arith.constant 0 : index
    %224 = vector.load %arg14[%c0_55, %c0_56] : memref<32x32xf32, #tpu.memory_space<vmem>>, vector<32x32xf32>
    %cst_57 = arith.constant dense<0.000000e+00> : vector<10x32xf32>
    %225 = tpu.matmul %218, %224, %cst_57 {dimension_numbers = #tpu.dot_dimension_numbers<[1], [0], [0], [1], [0, 0, 1, 1], [], []>} : vector<10x32xf32>, vector<32x32xf32>, vector<10x32xf32> -> vector<10x32xf32>
    %c0_58 = arith.constant 0 : index
    %c0_59 = arith.constant 0 : index
    %226 = vector.load %arg16[%c0_58, %c0_59] : memref<1x32xf32, #tpu.memory_space<vmem>>, vector<1x32xf32>
    %227 = vector.broadcast %226 : vector<1x32xf32> to vector<10x32xf32>
    %228 = arith.addf %225, %227 : vector<10x32xf32>
    %c0_60 = arith.constant 0 : index
    %c0_61 = arith.constant 0 : index
    %229 = vector.load %arg12[%c0_60, %c0_61] : memref<32x8xf32, #tpu.memory_space<vmem>>, vector<32x8xf32>
    %c0_62 = arith.constant 0 : index
    %c0_63 = arith.constant 0 : index
    %230 = vector.load %arg15[%c0_62, %c0_63] : memref<32x32xf32, #tpu.memory_space<vmem>>, vector<32x32xf32>
    %c0_64 = arith.constant 0 : index
    %c0_65 = arith.constant 0 : index
    %231 = vector.load %arg7[%c0_64, %c0_65] : memref<32x96xf32, #tpu.memory_space<vmem>>, vector<32x96xf32>
    %c0_66 = arith.constant 0 : index
    %c0_67 = arith.constant 0 : index
    %232 = vector.load %arg8[%c0_66, %c0_67] : memref<32x96xf32, #tpu.memory_space<vmem>>, vector<32x96xf32>
    %c0_68 = arith.constant 0 : index
    %c0_69 = arith.constant 0 : index
    %233 = vector.load %arg9[%c0_68, %c0_69] : memref<1x96xf32, #tpu.memory_space<vmem>>, vector<1x96xf32>
    %234 = vector.shape_cast %233 : vector<1x96xf32> to vector<1x96xf32>
    %235 = vector.broadcast %234 : vector<1x96xf32> to vector<2x96xf32>
    %c0_70 = arith.constant 0 : index
    %c0_71 = arith.constant 0 : index
    %236 = vector.load %arg10[%c0_70, %c0_71] : memref<1x32xf32, #tpu.memory_space<vmem>>, vector<1x32xf32>
    %237 = vector.shape_cast %236 : vector<1x32xf32> to vector<1x32xf32>
    %238 = vector.broadcast %237 : vector<1x32xf32> to vector<2x32xf32>
    %cst_72 = arith.constant 0.000000e+00 : f32
    %239 = vector.broadcast %cst_72 : f32 to vector<2x32xf32>
    %cst_73 = arith.constant 0.000000e+00 : f32
    %240 = vector.broadcast %cst_73 : f32 to vector<2x32xf32>
    %241 = vector.extract_strided_slice %223 {offsets = [0, 0], sizes = [2, 8], strides = [1, 1]} : vector<10x8xf32> to vector<2x8xf32>
    %cst_74 = arith.constant dense<0.000000e+00> : vector<2x8xf32>
    %242 = tpu.matmul %239, %229, %cst_74 {dimension_numbers = #tpu.dot_dimension_numbers<[1], [0], [0], [1], [0, 0, 1, 1], [], []>} : vector<2x32xf32>, vector<32x8xf32>, vector<2x8xf32> -> vector<2x8xf32>
    %243 = arith.addf %241, %242 : vector<2x8xf32>
    %cst_75 = arith.constant dense<0xFF800000> : vector<2xf32>
    %244 = vector.multi_reduction <maximumf>, %243, %cst_75 [1] : vector<2x8xf32> to vector<2xf32>
    %245 = vector.shape_cast %244 : vector<2xf32> to vector<2x1xf32>
    %246 = vector.broadcast %245 : vector<2x1xf32> to vector<2x8xf32>
    %247 = arith.subf %243, %246 : vector<2x8xf32>
    %248 = math.exp %247 : vector<2x8xf32>
    %cst_76 = arith.constant dense<0.000000e+00> : vector<2xf32>
    %249 = vector.multi_reduction <add>, %248, %cst_76 [1] : vector<2x8xf32> to vector<2xf32>
    %250 = vector.shape_cast %249 : vector<2xf32> to vector<2x1xf32>
    %251 = tpu.reciprocal %250 {approx = true} : vector<2x1xf32> -> vector<2x1xf32>
    %252 = vector.broadcast %251 : vector<2x1xf32> to vector<2x8xf32>
    %253 = arith.mulf %248, %252 : vector<2x8xf32>
    %c0_77 = arith.constant 0 : index
    %c0_78 = arith.constant 0 : index
    %c0_79 = arith.constant 0 : index
    %254 = vector.load %arg20[%c0_77, %c0_78, %c0_79] : memref<5x2x8xf32, #tpu.memory_space<vmem>>, vector<1x2x8xf32>
    %255 = vector.shape_cast %254 : vector<1x2x8xf32> to vector<2x8xf32>
    %256 = vector.shape_cast %253 : vector<2x8xf32> to vector<1x2x8xf32>
    tpu.vector_store %arg20[%c0_77, %c0_78, %c0_79], %256 {strides = array<i32>} : memref<5x2x8xf32, #tpu.memory_space<vmem>>, vector<1x2x8xf32>,
    %257 = vector.extract_strided_slice %253 {offsets = [0, 0], sizes = [1, 8], strides = [1, 1]} : vector<2x8xf32> to vector<1x8xf32>
    %cst_80 = arith.constant dense<0.000000e+00> : vector<1x32xf32>
    %258 = tpu.matmul %257, %216, %cst_80 {dimension_numbers = #tpu.dot_dimension_numbers<[1], [0], [0], [1], [0, 0, 1, 1], [], []>} : vector<1x8xf32>, vector<8x32xf32>, vector<1x32xf32> -> vector<1x32xf32>
    %259 = vector.extract_strided_slice %253 {offsets = [1, 0], sizes = [1, 8], strides = [1, 1]} : vector<2x8xf32> to vector<1x8xf32>
    %cst_81 = arith.constant dense<0.000000e+00> : vector<1x32xf32>
    %260 = tpu.matmul %259, %217, %cst_81 {dimension_numbers = #tpu.dot_dimension_numbers<[1], [0], [0], [1], [0, 0, 1, 1], [], []>} : vector<1x8xf32>, vector<8x32xf32>, vector<1x32xf32> -> vector<1x32xf32>
    %261 = tpu.concatenate %258, %260 in 0 : vector<1x32xf32>, vector<1x32xf32> -> vector<2x32xf32>
    %262 = vector.extract_strided_slice %228 {offsets = [0, 0], sizes = [2, 32], strides = [1, 1]} : vector<10x32xf32> to vector<2x32xf32>
    %cst_82 = arith.constant dense<0.000000e+00> : vector<2x32xf32>
    %263 = tpu.matmul %261, %230, %cst_82 {dimension_numbers = #tpu.dot_dimension_numbers<[1], [0], [0], [1], [0, 0, 1, 1], [], []>} : vector<2x32xf32>, vector<32x32xf32>, vector<2x32xf32> -> vector<2x32xf32>
    %264 = arith.addf %262, %263 : vector<2x32xf32>
    %cst_83 = arith.constant 0.000000e+00 : f32
    %265 = vector.broadcast %cst_83 : f32 to vector<2x32xf32>
    %266 = arith.maximumf %264, %265 : vector<2x32xf32>
    %cst_84 = arith.constant dense<0.000000e+00> : vector<2x96xf32>
    %267 = tpu.matmul %266, %231, %cst_84 {dimension_numbers = #tpu.dot_dimension_numbers<[1], [0], [0], [1], [0, 0, 1, 1], [], []>} : vector<2x32xf32>, vector<32x96xf32>, vector<2x96xf32> -> vector<2x96xf32>
    %268 = arith.addf %267, %235 : vector<2x96xf32>
    %cst_85 = arith.constant dense<0.000000e+00> : vector<2x96xf32>
    %269 = tpu.matmul %239, %232, %cst_85 {dimension_numbers = #tpu.dot_dimension_numbers<[1], [0], [0], [1], [0, 0, 1, 1], [], []>} : vector<2x32xf32>, vector<32x96xf32>, vector<2x96xf32> -> vector<2x96xf32>
    %270 = vector.extract_strided_slice %268 {offsets = [0, 0], sizes = [2, 32], strides = [1, 1]} : vector<2x96xf32> to vector<2x32xf32>
    %271 = vector.extract_strided_slice %269 {offsets = [0, 0], sizes = [2, 32], strides = [1, 1]} : vector<2x96xf32> to vector<2x32xf32>
    %272 = arith.addf %270, %271 : vector<2x32xf32>
    %273 = arith.negf %272 : vector<2x32xf32>
    %274 = math.exp %273 : vector<2x32xf32>
    %cst_86 = arith.constant 1.000000e+00 : f32
    %275 = vector.broadcast %cst_86 : f32 to vector<2x32xf32>
    %276 = arith.addf %275, %274 : vector<2x32xf32>
    %277 = arith.divf %275, %276 : vector<2x32xf32>
    %278 = vector.extract_strided_slice %268 {offsets = [0, 32], sizes = [2, 32], strides = [1, 1]} : vector<2x96xf32> to vector<2x32xf32>
    %279 = vector.extract_strided_slice %269 {offsets = [0, 32], sizes = [2, 32], strides = [1, 1]} : vector<2x96xf32> to vector<2x32xf32>
    %280 = arith.addf %278, %279 : vector<2x32xf32>
    %281 = arith.negf %280 : vector<2x32xf32>
    %282 = math.exp %281 : vector<2x32xf32>
    %cst_87 = arith.constant 1.000000e+00 : f32
    %283 = vector.broadcast %cst_87 : f32 to vector<2x32xf32>
    %284 = arith.addf %283, %282 : vector<2x32xf32>
    %285 = arith.divf %283, %284 : vector<2x32xf32>
    %286 = vector.extract_strided_slice %268 {offsets = [0, 64], sizes = [2, 32], strides = [1, 1]} : vector<2x96xf32> to vector<2x32xf32>
    %287 = vector.extract_strided_slice %269 {offsets = [0, 64], sizes = [2, 32], strides = [1, 1]} : vector<2x96xf32> to vector<2x32xf32>
    %288 = arith.addf %287, %238 : vector<2x32xf32>
    %289 = arith.mulf %277, %288 : vector<2x32xf32>
    %290 = arith.addf %286, %289 : vector<2x32xf32>
    %291 = math.tanh %290 : vector<2x32xf32>
    %cst_88 = arith.constant 1.000000e+00 : f32
    %292 = vector.broadcast %cst_88 : f32 to vector<2x32xf32>
    %293 = arith.subf %292, %285 : vector<2x32xf32>
    %294 = arith.mulf %293, %291 : vector<2x32xf32>
    %295 = arith.mulf %285, %239 : vector<2x32xf32>
    %296 = arith.addf %294, %295 : vector<2x32xf32>
    %297 = arith.addf %240, %296 : vector<2x32xf32>
    %298 = vector.extract_strided_slice %223 {offsets = [2, 0], sizes = [2, 8], strides = [1, 1]} : vector<10x8xf32> to vector<2x8xf32>
    %cst_89 = arith.constant dense<0.000000e+00> : vector<2x8xf32>
    %299 = tpu.matmul %296, %229, %cst_89 {dimension_numbers = #tpu.dot_dimension_numbers<[1], [0], [0], [1], [0, 0, 1, 1], [], []>} : vector<2x32xf32>, vector<32x8xf32>, vector<2x8xf32> -> vector<2x8xf32>
    %300 = arith.addf %298, %299 : vector<2x8xf32>
    %cst_90 = arith.constant dense<0xFF800000> : vector<2xf32>
    %301 = vector.multi_reduction <maximumf>, %300, %cst_90 [1] : vector<2x8xf32> to vector<2xf32>
    %302 = vector.shape_cast %301 : vector<2xf32> to vector<2x1xf32>
    %303 = vector.broadcast %302 : vector<2x1xf32> to vector<2x8xf32>
    %304 = arith.subf %300, %303 : vector<2x8xf32>
    %305 = math.exp %304 : vector<2x8xf32>
    %cst_91 = arith.constant dense<0.000000e+00> : vector<2xf32>
    %306 = vector.multi_reduction <add>, %305, %cst_91 [1] : vector<2x8xf32> to vector<2xf32>
    %307 = vector.shape_cast %306 : vector<2xf32> to vector<2x1xf32>
    %308 = tpu.reciprocal %307 {approx = true} : vector<2x1xf32> -> vector<2x1xf32>
    %309 = vector.broadcast %308 : vector<2x1xf32> to vector<2x8xf32>
    %310 = arith.mulf %305, %309 : vector<2x8xf32>
    %c1_92 = arith.constant 1 : index
    %c0_93 = arith.constant 0 : index
    %c0_94 = arith.constant 0 : index
    %311 = vector.load %arg20[%c1_92, %c0_93, %c0_94] : memref<5x2x8xf32, #tpu.memory_space<vmem>>, vector<1x2x8xf32>
    %312 = vector.shape_cast %311 : vector<1x2x8xf32> to vector<2x8xf32>
    %313 = vector.shape_cast %310 : vector<2x8xf32> to vector<1x2x8xf32>
    tpu.vector_store %arg20[%c1_92, %c0_93, %c0_94], %313 {strides = array<i32>} : memref<5x2x8xf32, #tpu.memory_space<vmem>>, vector<1x2x8xf32>,
    %314 = vector.extract_strided_slice %310 {offsets = [0, 0], sizes = [1, 8], strides = [1, 1]} : vector<2x8xf32> to vector<1x8xf32>
    %cst_95 = arith.constant dense<0.000000e+00> : vector<1x32xf32>
    %315 = tpu.matmul %314, %216, %cst_95 {dimension_numbers = #tpu.dot_dimension_numbers<[1], [0], [0], [1], [0, 0, 1, 1], [], []>} : vector<1x8xf32>, vector<8x32xf32>, vector<1x32xf32> -> vector<1x32xf32>
    %316 = vector.extract_strided_slice %310 {offsets = [1, 0], sizes = [1, 8], strides = [1, 1]} : vector<2x8xf32> to vector<1x8xf32>
    %cst_96 = arith.constant dense<0.000000e+00> : vector<1x32xf32>
    %317 = tpu.matmul %316, %217, %cst_96 {dimension_numbers = #tpu.dot_dimension_numbers<[1], [0], [0], [1], [0, 0, 1, 1], [], []>} : vector<1x8xf32>, vector<8x32xf32>, vector<1x32xf32> -> vector<1x32xf32>
    %318 = tpu.concatenate %315, %317 in 0 : vector<1x32xf32>, vector<1x32xf32> -> vector<2x32xf32>
    %319 = vector.extract_strided_slice %228 {offsets = [2, 0], sizes = [2, 32], strides = [1, 1]} : vector<10x32xf32> to vector<2x32xf32>
    %cst_97 = arith.constant dense<0.000000e+00> : vector<2x32xf32>
    %320 = tpu.matmul %318, %230, %cst_97 {dimension_numbers = #tpu.dot_dimension_numbers<[1], [0], [0], [1], [0, 0, 1, 1], [], []>} : vector<2x32xf32>, vector<32x32xf32>, vector<2x32xf32> -> vector<2x32xf32>
    %321 = arith.addf %319, %320 : vector<2x32xf32>
    %cst_98 = arith.constant 0.000000e+00 : f32
    %322 = vector.broadcast %cst_98 : f32 to vector<2x32xf32>
    %323 = arith.maximumf %321, %322 : vector<2x32xf32>
    %cst_99 = arith.constant dense<0.000000e+00> : vector<2x96xf32>
    %324 = tpu.matmul %323, %231, %cst_99 {dimension_numbers = #tpu.dot_dimension_numbers<[1], [0], [0], [1], [0, 0, 1, 1], [], []>} : vector<2x32xf32>, vector<32x96xf32>, vector<2x96xf32> -> vector<2x96xf32>
    %325 = arith.addf %324, %235 : vector<2x96xf32>
    %cst_100 = arith.constant dense<0.000000e+00> : vector<2x96xf32>
    %326 = tpu.matmul %296, %232, %cst_100 {dimension_numbers = #tpu.dot_dimension_numbers<[1], [0], [0], [1], [0, 0, 1, 1], [], []>} : vector<2x32xf32>, vector<32x96xf32>, vector<2x96xf32> -> vector<2x96xf32>
    %327 = vector.extract_strided_slice %325 {offsets = [0, 0], sizes = [2, 32], strides = [1, 1]} : vector<2x96xf32> to vector<2x32xf32>
    %328 = vector.extract_strided_slice %326 {offsets = [0, 0], sizes = [2, 32], strides = [1, 1]} : vector<2x96xf32> to vector<2x32xf32>
    %329 = arith.addf %327, %328 : vector<2x32xf32>
    %330 = arith.negf %329 : vector<2x32xf32>
    %331 = math.exp %330 : vector<2x32xf32>
    %cst_101 = arith.constant 1.000000e+00 : f32
    %332 = vector.broadcast %cst_101 : f32 to vector<2x32xf32>
    %333 = arith.addf %332, %331 : vector<2x32xf32>
    %334 = arith.divf %332, %333 : vector<2x32xf32>
    %335 = vector.extract_strided_slice %325 {offsets = [0, 32], sizes = [2, 32], strides = [1, 1]} : vector<2x96xf32> to vector<2x32xf32>
    %336 = vector.extract_strided_slice %326 {offsets = [0, 32], sizes = [2, 32], strides = [1, 1]} : vector<2x96xf32> to vector<2x32xf32>
    %337 = arith.addf %335, %336 : vector<2x32xf32>
    %338 = arith.negf %337 : vector<2x32xf32>
    %339 = math.exp %338 : vector<2x32xf32>
    %cst_102 = arith.constant 1.000000e+00 : f32
    %340 = vector.broadcast %cst_102 : f32 to vector<2x32xf32>
    %341 = arith.addf %340, %339 : vector<2x32xf32>
    %342 = arith.divf %340, %341 : vector<2x32xf32>
    %343 = vector.extract_strided_slice %325 {offsets = [0, 64], sizes = [2, 32], strides = [1, 1]} : vector<2x96xf32> to vector<2x32xf32>
    %344 = vector.extract_strided_slice %326 {offsets = [0, 64], sizes = [2, 32], strides = [1, 1]} : vector<2x96xf32> to vector<2x32xf32>
    %345 = arith.addf %344, %238 : vector<2x32xf32>
    %346 = arith.mulf %334, %345 : vector<2x32xf32>
    %347 = arith.addf %343, %346 : vector<2x32xf32>
    %348 = math.tanh %347 : vector<2x32xf32>
    %cst_103 = arith.constant 1.000000e+00 : f32
    %349 = vector.broadcast %cst_103 : f32 to vector<2x32xf32>
    %350 = arith.subf %349, %342 : vector<2x32xf32>
    %351 = arith.mulf %350, %348 : vector<2x32xf32>
    %352 = arith.mulf %342, %296 : vector<2x32xf32>
    %353 = arith.addf %351, %352 : vector<2x32xf32>
    %354 = arith.addf %297, %353 : vector<2x32xf32>
    %355 = vector.extract_strided_slice %223 {offsets = [4, 0], sizes = [2, 8], strides = [1, 1]} : vector<10x8xf32> to vector<2x8xf32>
    %cst_104 = arith.constant dense<0.000000e+00> : vector<2x8xf32>
    %356 = tpu.matmul %353, %229, %cst_104 {dimension_numbers = #tpu.dot_dimension_numbers<[1], [0], [0], [1], [0, 0, 1, 1], [], []>} : vector<2x32xf32>, vector<32x8xf32>, vector<2x8xf32> -> vector<2x8xf32>
    %357 = arith.addf %355, %356 : vector<2x8xf32>
    %cst_105 = arith.constant dense<0xFF800000> : vector<2xf32>
    %358 = vector.multi_reduction <maximumf>, %357, %cst_105 [1] : vector<2x8xf32> to vector<2xf32>
    %359 = vector.shape_cast %358 : vector<2xf32> to vector<2x1xf32>
    %360 = vector.broadcast %359 : vector<2x1xf32> to vector<2x8xf32>
    %361 = arith.subf %357, %360 : vector<2x8xf32>
    %362 = math.exp %361 : vector<2x8xf32>
    %cst_106 = arith.constant dense<0.000000e+00> : vector<2xf32>
    %363 = vector.multi_reduction <add>, %362, %cst_106 [1] : vector<2x8xf32> to vector<2xf32>
    %364 = vector.shape_cast %363 : vector<2xf32> to vector<2x1xf32>
    %365 = tpu.reciprocal %364 {approx = true} : vector<2x1xf32> -> vector<2x1xf32>
    %366 = vector.broadcast %365 : vector<2x1xf32> to vector<2x8xf32>
    %367 = arith.mulf %362, %366 : vector<2x8xf32>
    %c2_107 = arith.constant 2 : index
    %c0_108 = arith.constant 0 : index
    %c0_109 = arith.constant 0 : index
    %368 = vector.load %arg20[%c2_107, %c0_108, %c0_109] : memref<5x2x8xf32, #tpu.memory_space<vmem>>, vector<1x2x8xf32>
    %369 = vector.shape_cast %368 : vector<1x2x8xf32> to vector<2x8xf32>
    %370 = vector.shape_cast %367 : vector<2x8xf32> to vector<1x2x8xf32>
    tpu.vector_store %arg20[%c2_107, %c0_108, %c0_109], %370 {strides = array<i32>} : memref<5x2x8xf32, #tpu.memory_space<vmem>>, vector<1x2x8xf32>,
    %371 = vector.extract_strided_slice %367 {offsets = [0, 0], sizes = [1, 8], strides = [1, 1]} : vector<2x8xf32> to vector<1x8xf32>
    %cst_110 = arith.constant dense<0.000000e+00> : vector<1x32xf32>
    %372 = tpu.matmul %371, %216, %cst_110 {dimension_numbers = #tpu.dot_dimension_numbers<[1], [0], [0], [1], [0, 0, 1, 1], [], []>} : vector<1x8xf32>, vector<8x32xf32>, vector<1x32xf32> -> vector<1x32xf32>
    %373 = vector.extract_strided_slice %367 {offsets = [1, 0], sizes = [1, 8], strides = [1, 1]} : vector<2x8xf32> to vector<1x8xf32>
    %cst_111 = arith.constant dense<0.000000e+00> : vector<1x32xf32>
    %374 = tpu.matmul %373, %217, %cst_111 {dimension_numbers = #tpu.dot_dimension_numbers<[1], [0], [0], [1], [0, 0, 1, 1], [], []>} : vector<1x8xf32>, vector<8x32xf32>, vector<1x32xf32> -> vector<1x32xf32>
    %375 = tpu.concatenate %372, %374 in 0 : vector<1x32xf32>, vector<1x32xf32> -> vector<2x32xf32>
    %376 = vector.extract_strided_slice %228 {offsets = [4, 0], sizes = [2, 32], strides = [1, 1]} : vector<10x32xf32> to vector<2x32xf32>
    %cst_112 = arith.constant dense<0.000000e+00> : vector<2x32xf32>
    %377 = tpu.matmul %375, %230, %cst_112 {dimension_numbers = #tpu.dot_dimension_numbers<[1], [0], [0], [1], [0, 0, 1, 1], [], []>} : vector<2x32xf32>, vector<32x32xf32>, vector<2x32xf32> -> vector<2x32xf32>
    %378 = arith.addf %376, %377 : vector<2x32xf32>
    %cst_113 = arith.constant 0.000000e+00 : f32
    %379 = vector.broadcast %cst_113 : f32 to vector<2x32xf32>
    %380 = arith.maximumf %378, %379 : vector<2x32xf32>
    %cst_114 = arith.constant dense<0.000000e+00> : vector<2x96xf32>
    %381 = tpu.matmul %380, %231, %cst_114 {dimension_numbers = #tpu.dot_dimension_numbers<[1], [0], [0], [1], [0, 0, 1, 1], [], []>} : vector<2x32xf32>, vector<32x96xf32>, vector<2x96xf32> -> vector<2x96xf32>
    %382 = arith.addf %381, %235 : vector<2x96xf32>
    %cst_115 = arith.constant dense<0.000000e+00> : vector<2x96xf32>
    %383 = tpu.matmul %353, %232, %cst_115 {dimension_numbers = #tpu.dot_dimension_numbers<[1], [0], [0], [1], [0, 0, 1, 1], [], []>} : vector<2x32xf32>, vector<32x96xf32>, vector<2x96xf32> -> vector<2x96xf32>
    %384 = vector.extract_strided_slice %382 {offsets = [0, 0], sizes = [2, 32], strides = [1, 1]} : vector<2x96xf32> to vector<2x32xf32>
    %385 = vector.extract_strided_slice %383 {offsets = [0, 0], sizes = [2, 32], strides = [1, 1]} : vector<2x96xf32> to vector<2x32xf32>
    %386 = arith.addf %384, %385 : vector<2x32xf32>
    %387 = arith.negf %386 : vector<2x32xf32>
    %388 = math.exp %387 : vector<2x32xf32>
    %cst_116 = arith.constant 1.000000e+00 : f32
    %389 = vector.broadcast %cst_116 : f32 to vector<2x32xf32>
    %390 = arith.addf %389, %388 : vector<2x32xf32>
    %391 = arith.divf %389, %390 : vector<2x32xf32>
    %392 = vector.extract_strided_slice %382 {offsets = [0, 32], sizes = [2, 32], strides = [1, 1]} : vector<2x96xf32> to vector<2x32xf32>
    %393 = vector.extract_strided_slice %383 {offsets = [0, 32], sizes = [2, 32], strides = [1, 1]} : vector<2x96xf32> to vector<2x32xf32>
    %394 = arith.addf %392, %393 : vector<2x32xf32>
    %395 = arith.negf %394 : vector<2x32xf32>
    %396 = math.exp %395 : vector<2x32xf32>
    %cst_117 = arith.constant 1.000000e+00 : f32
    %397 = vector.broadcast %cst_117 : f32 to vector<2x32xf32>
    %398 = arith.addf %397, %396 : vector<2x32xf32>
    %399 = arith.divf %397, %398 : vector<2x32xf32>
    %400 = vector.extract_strided_slice %382 {offsets = [0, 64], sizes = [2, 32], strides = [1, 1]} : vector<2x96xf32> to vector<2x32xf32>
    %401 = vector.extract_strided_slice %383 {offsets = [0, 64], sizes = [2, 32], strides = [1, 1]} : vector<2x96xf32> to vector<2x32xf32>
    %402 = arith.addf %401, %238 : vector<2x32xf32>
    %403 = arith.mulf %391, %402 : vector<2x32xf32>
    %404 = arith.addf %400, %403 : vector<2x32xf32>
    %405 = math.tanh %404 : vector<2x32xf32>
    %cst_118 = arith.constant 1.000000e+00 : f32
    %406 = vector.broadcast %cst_118 : f32 to vector<2x32xf32>
    %407 = arith.subf %406, %399 : vector<2x32xf32>
    %408 = arith.mulf %407, %405 : vector<2x32xf32>
    %409 = arith.mulf %399, %353 : vector<2x32xf32>
    %410 = arith.addf %408, %409 : vector<2x32xf32>
    %411 = arith.addf %354, %410 : vector<2x32xf32>
    %412 = vector.extract_strided_slice %223 {offsets = [6, 0], sizes = [2, 8], strides = [1, 1]} : vector<10x8xf32> to vector<2x8xf32>
    %cst_119 = arith.constant dense<0.000000e+00> : vector<2x8xf32>
    %413 = tpu.matmul %410, %229, %cst_119 {dimension_numbers = #tpu.dot_dimension_numbers<[1], [0], [0], [1], [0, 0, 1, 1], [], []>} : vector<2x32xf32>, vector<32x8xf32>, vector<2x8xf32> -> vector<2x8xf32>
    %414 = arith.addf %412, %413 : vector<2x8xf32>
    %cst_120 = arith.constant dense<0xFF800000> : vector<2xf32>
    %415 = vector.multi_reduction <maximumf>, %414, %cst_120 [1] : vector<2x8xf32> to vector<2xf32>
    %416 = vector.shape_cast %415 : vector<2xf32> to vector<2x1xf32>
    %417 = vector.broadcast %416 : vector<2x1xf32> to vector<2x8xf32>
    %418 = arith.subf %414, %417 : vector<2x8xf32>
    %419 = math.exp %418 : vector<2x8xf32>
    %cst_121 = arith.constant dense<0.000000e+00> : vector<2xf32>
    %420 = vector.multi_reduction <add>, %419, %cst_121 [1] : vector<2x8xf32> to vector<2xf32>
    %421 = vector.shape_cast %420 : vector<2xf32> to vector<2x1xf32>
    %422 = tpu.reciprocal %421 {approx = true} : vector<2x1xf32> -> vector<2x1xf32>
    %423 = vector.broadcast %422 : vector<2x1xf32> to vector<2x8xf32>
    %424 = arith.mulf %419, %423 : vector<2x8xf32>
    %c3_122 = arith.constant 3 : index
    %c0_123 = arith.constant 0 : index
    %c0_124 = arith.constant 0 : index
    %425 = vector.load %arg20[%c3_122, %c0_123, %c0_124] : memref<5x2x8xf32, #tpu.memory_space<vmem>>, vector<1x2x8xf32>
    %426 = vector.shape_cast %425 : vector<1x2x8xf32> to vector<2x8xf32>
    %427 = vector.shape_cast %424 : vector<2x8xf32> to vector<1x2x8xf32>
    tpu.vector_store %arg20[%c3_122, %c0_123, %c0_124], %427 {strides = array<i32>} : memref<5x2x8xf32, #tpu.memory_space<vmem>>, vector<1x2x8xf32>,
    %428 = vector.extract_strided_slice %424 {offsets = [0, 0], sizes = [1, 8], strides = [1, 1]} : vector<2x8xf32> to vector<1x8xf32>
    %cst_125 = arith.constant dense<0.000000e+00> : vector<1x32xf32>
    %429 = tpu.matmul %428, %216, %cst_125 {dimension_numbers = #tpu.dot_dimension_numbers<[1], [0], [0], [1], [0, 0, 1, 1], [], []>} : vector<1x8xf32>, vector<8x32xf32>, vector<1x32xf32> -> vector<1x32xf32>
    %430 = vector.extract_strided_slice %424 {offsets = [1, 0], sizes = [1, 8], strides = [1, 1]} : vector<2x8xf32> to vector<1x8xf32>
    %cst_126 = arith.constant dense<0.000000e+00> : vector<1x32xf32>
    %431 = tpu.matmul %430, %217, %cst_126 {dimension_numbers = #tpu.dot_dimension_numbers<[1], [0], [0], [1], [0, 0, 1, 1], [], []>} : vector<1x8xf32>, vector<8x32xf32>, vector<1x32xf32> -> vector<1x32xf32>
    %432 = tpu.concatenate %429, %431 in 0 : vector<1x32xf32>, vector<1x32xf32> -> vector<2x32xf32>
    %433 = vector.extract_strided_slice %228 {offsets = [6, 0], sizes = [2, 32], strides = [1, 1]} : vector<10x32xf32> to vector<2x32xf32>
    %cst_127 = arith.constant dense<0.000000e+00> : vector<2x32xf32>
    %434 = tpu.matmul %432, %230, %cst_127 {dimension_numbers = #tpu.dot_dimension_numbers<[1], [0], [0], [1], [0, 0, 1, 1], [], []>} : vector<2x32xf32>, vector<32x32xf32>, vector<2x32xf32> -> vector<2x32xf32>
    %435 = arith.addf %433, %434 : vector<2x32xf32>
    %cst_128 = arith.constant 0.000000e+00 : f32
    %436 = vector.broadcast %cst_128 : f32 to vector<2x32xf32>
    %437 = arith.maximumf %435, %436 : vector<2x32xf32>
    %cst_129 = arith.constant dense<0.000000e+00> : vector<2x96xf32>
    %438 = tpu.matmul %437, %231, %cst_129 {dimension_numbers = #tpu.dot_dimension_numbers<[1], [0], [0], [1], [0, 0, 1, 1], [], []>} : vector<2x32xf32>, vector<32x96xf32>, vector<2x96xf32> -> vector<2x96xf32>
    %439 = arith.addf %438, %235 : vector<2x96xf32>
    %cst_130 = arith.constant dense<0.000000e+00> : vector<2x96xf32>
    %440 = tpu.matmul %410, %232, %cst_130 {dimension_numbers = #tpu.dot_dimension_numbers<[1], [0], [0], [1], [0, 0, 1, 1], [], []>} : vector<2x32xf32>, vector<32x96xf32>, vector<2x96xf32> -> vector<2x96xf32>
    %441 = vector.extract_strided_slice %439 {offsets = [0, 0], sizes = [2, 32], strides = [1, 1]} : vector<2x96xf32> to vector<2x32xf32>
    %442 = vector.extract_strided_slice %440 {offsets = [0, 0], sizes = [2, 32], strides = [1, 1]} : vector<2x96xf32> to vector<2x32xf32>
    %443 = arith.addf %441, %442 : vector<2x32xf32>
    %444 = arith.negf %443 : vector<2x32xf32>
    %445 = math.exp %444 : vector<2x32xf32>
    %cst_131 = arith.constant 1.000000e+00 : f32
    %446 = vector.broadcast %cst_131 : f32 to vector<2x32xf32>
    %447 = arith.addf %446, %445 : vector<2x32xf32>
    %448 = arith.divf %446, %447 : vector<2x32xf32>
    %449 = vector.extract_strided_slice %439 {offsets = [0, 32], sizes = [2, 32], strides = [1, 1]} : vector<2x96xf32> to vector<2x32xf32>
    %450 = vector.extract_strided_slice %440 {offsets = [0, 32], sizes = [2, 32], strides = [1, 1]} : vector<2x96xf32> to vector<2x32xf32>
    %451 = arith.addf %449, %450 : vector<2x32xf32>
    %452 = arith.negf %451 : vector<2x32xf32>
    %453 = math.exp %452 : vector<2x32xf32>
    %cst_132 = arith.constant 1.000000e+00 : f32
    %454 = vector.broadcast %cst_132 : f32 to vector<2x32xf32>
    %455 = arith.addf %454, %453 : vector<2x32xf32>
    %456 = arith.divf %454, %455 : vector<2x32xf32>
    %457 = vector.extract_strided_slice %439 {offsets = [0, 64], sizes = [2, 32], strides = [1, 1]} : vector<2x96xf32> to vector<2x32xf32>
    %458 = vector.extract_strided_slice %440 {offsets = [0, 64], sizes = [2, 32], strides = [1, 1]} : vector<2x96xf32> to vector<2x32xf32>
    %459 = arith.addf %458, %238 : vector<2x32xf32>
    %460 = arith.mulf %448, %459 : vector<2x32xf32>
    %461 = arith.addf %457, %460 : vector<2x32xf32>
    %462 = math.tanh %461 : vector<2x32xf32>
    %cst_133 = arith.constant 1.000000e+00 : f32
    %463 = vector.broadcast %cst_133 : f32 to vector<2x32xf32>
    %464 = arith.subf %463, %456 : vector<2x32xf32>
    %465 = arith.mulf %464, %462 : vector<2x32xf32>
    %466 = arith.mulf %456, %410 : vector<2x32xf32>
    %467 = arith.addf %465, %466 : vector<2x32xf32>
    %468 = arith.addf %411, %467 : vector<2x32xf32>
    %469 = vector.extract_strided_slice %223 {offsets = [8, 0], sizes = [2, 8], strides = [1, 1]} : vector<10x8xf32> to vector<2x8xf32>
    %cst_134 = arith.constant dense<0.000000e+00> : vector<2x8xf32>
    %470 = tpu.matmul %467, %229, %cst_134 {dimension_numbers = #tpu.dot_dimension_numbers<[1], [0], [0], [1], [0, 0, 1, 1], [], []>} : vector<2x32xf32>, vector<32x8xf32>, vector<2x8xf32> -> vector<2x8xf32>
    %471 = arith.addf %469, %470 : vector<2x8xf32>
    %cst_135 = arith.constant dense<0xFF800000> : vector<2xf32>
    %472 = vector.multi_reduction <maximumf>, %471, %cst_135 [1] : vector<2x8xf32> to vector<2xf32>
    %473 = vector.shape_cast %472 : vector<2xf32> to vector<2x1xf32>
    %474 = vector.broadcast %473 : vector<2x1xf32> to vector<2x8xf32>
    %475 = arith.subf %471, %474 : vector<2x8xf32>
    %476 = math.exp %475 : vector<2x8xf32>
    %cst_136 = arith.constant dense<0.000000e+00> : vector<2xf32>
    %477 = vector.multi_reduction <add>, %476, %cst_136 [1] : vector<2x8xf32> to vector<2xf32>
    %478 = vector.shape_cast %477 : vector<2xf32> to vector<2x1xf32>
    %479 = tpu.reciprocal %478 {approx = true} : vector<2x1xf32> -> vector<2x1xf32>
    %480 = vector.broadcast %479 : vector<2x1xf32> to vector<2x8xf32>
    %481 = arith.mulf %476, %480 : vector<2x8xf32>
    %c4_137 = arith.constant 4 : index
    %c0_138 = arith.constant 0 : index
    %c0_139 = arith.constant 0 : index
    %482 = vector.load %arg20[%c4_137, %c0_138, %c0_139] : memref<5x2x8xf32, #tpu.memory_space<vmem>>, vector<1x2x8xf32>
    %483 = vector.shape_cast %482 : vector<1x2x8xf32> to vector<2x8xf32>
    %484 = vector.shape_cast %481 : vector<2x8xf32> to vector<1x2x8xf32>
    tpu.vector_store %arg20[%c4_137, %c0_138, %c0_139], %484 {strides = array<i32>} : memref<5x2x8xf32, #tpu.memory_space<vmem>>, vector<1x2x8xf32>,
    %485 = vector.extract_strided_slice %481 {offsets = [0, 0], sizes = [1, 8], strides = [1, 1]} : vector<2x8xf32> to vector<1x8xf32>
    %cst_140 = arith.constant dense<0.000000e+00> : vector<1x32xf32>
    %486 = tpu.matmul %485, %216, %cst_140 {dimension_numbers = #tpu.dot_dimension_numbers<[1], [0], [0], [1], [0, 0, 1, 1], [], []>} : vector<1x8xf32>, vector<8x32xf32>, vector<1x32xf32> -> vector<1x32xf32>
    %487 = vector.extract_strided_slice %481 {offsets = [1, 0], sizes = [1, 8], strides = [1, 1]} : vector<2x8xf32> to vector<1x8xf32>
    %cst_141 = arith.constant dense<0.000000e+00> : vector<1x32xf32>
    %488 = tpu.matmul %487, %217, %cst_141 {dimension_numbers = #tpu.dot_dimension_numbers<[1], [0], [0], [1], [0, 0, 1, 1], [], []>} : vector<1x8xf32>, vector<8x32xf32>, vector<1x32xf32> -> vector<1x32xf32>
    %489 = tpu.concatenate %486, %488 in 0 : vector<1x32xf32>, vector<1x32xf32> -> vector<2x32xf32>
    %490 = vector.extract_strided_slice %228 {offsets = [8, 0], sizes = [2, 32], strides = [1, 1]} : vector<10x32xf32> to vector<2x32xf32>
    %cst_142 = arith.constant dense<0.000000e+00> : vector<2x32xf32>
    %491 = tpu.matmul %489, %230, %cst_142 {dimension_numbers = #tpu.dot_dimension_numbers<[1], [0], [0], [1], [0, 0, 1, 1], [], []>} : vector<2x32xf32>, vector<32x32xf32>, vector<2x32xf32> -> vector<2x32xf32>
    %492 = arith.addf %490, %491 : vector<2x32xf32>
    %cst_143 = arith.constant 0.000000e+00 : f32
    %493 = vector.broadcast %cst_143 : f32 to vector<2x32xf32>
    %494 = arith.maximumf %492, %493 : vector<2x32xf32>
    %cst_144 = arith.constant dense<0.000000e+00> : vector<2x96xf32>
    %495 = tpu.matmul %494, %231, %cst_144 {dimension_numbers = #tpu.dot_dimension_numbers<[1], [0], [0], [1], [0, 0, 1, 1], [], []>} : vector<2x32xf32>, vector<32x96xf32>, vector<2x96xf32> -> vector<2x96xf32>
    %496 = arith.addf %495, %235 : vector<2x96xf32>
    %cst_145 = arith.constant dense<0.000000e+00> : vector<2x96xf32>
    %497 = tpu.matmul %467, %232, %cst_145 {dimension_numbers = #tpu.dot_dimension_numbers<[1], [0], [0], [1], [0, 0, 1, 1], [], []>} : vector<2x32xf32>, vector<32x96xf32>, vector<2x96xf32> -> vector<2x96xf32>
    %498 = vector.extract_strided_slice %496 {offsets = [0, 0], sizes = [2, 32], strides = [1, 1]} : vector<2x96xf32> to vector<2x32xf32>
    %499 = vector.extract_strided_slice %497 {offsets = [0, 0], sizes = [2, 32], strides = [1, 1]} : vector<2x96xf32> to vector<2x32xf32>
    %500 = arith.addf %498, %499 : vector<2x32xf32>
    %501 = arith.negf %500 : vector<2x32xf32>
    %502 = math.exp %501 : vector<2x32xf32>
    %cst_146 = arith.constant 1.000000e+00 : f32
    %503 = vector.broadcast %cst_146 : f32 to vector<2x32xf32>
    %504 = arith.addf %503, %502 : vector<2x32xf32>
    %505 = arith.divf %503, %504 : vector<2x32xf32>
    %506 = vector.extract_strided_slice %496 {offsets = [0, 32], sizes = [2, 32], strides = [1, 1]} : vector<2x96xf32> to vector<2x32xf32>
    %507 = vector.extract_strided_slice %497 {offsets = [0, 32], sizes = [2, 32], strides = [1, 1]} : vector<2x96xf32> to vector<2x32xf32>
    %508 = arith.addf %506, %507 : vector<2x32xf32>
    %509 = arith.negf %508 : vector<2x32xf32>
    %510 = math.exp %509 : vector<2x32xf32>
    %cst_147 = arith.constant 1.000000e+00 : f32
    %511 = vector.broadcast %cst_147 : f32 to vector<2x32xf32>
    %512 = arith.addf %511, %510 : vector<2x32xf32>
    %513 = arith.divf %511, %512 : vector<2x32xf32>
    %514 = vector.extract_strided_slice %496 {offsets = [0, 64], sizes = [2, 32], strides = [1, 1]} : vector<2x96xf32> to vector<2x32xf32>
    %515 = vector.extract_strided_slice %497 {offsets = [0, 64], sizes = [2, 32], strides = [1, 1]} : vector<2x96xf32> to vector<2x32xf32>
    %516 = arith.addf %515, %238 : vector<2x32xf32>
    %517 = arith.mulf %505, %516 : vector<2x32xf32>
    %518 = arith.addf %514, %517 : vector<2x32xf32>
    %519 = math.tanh %518 : vector<2x32xf32>
    %cst_148 = arith.constant 1.000000e+00 : f32
    %520 = vector.broadcast %cst_148 : f32 to vector<2x32xf32>
    %521 = arith.subf %520, %513 : vector<2x32xf32>
    %522 = arith.mulf %521, %519 : vector<2x32xf32>
    %523 = arith.mulf %513, %467 : vector<2x32xf32>
    %524 = arith.addf %522, %523 : vector<2x32xf32>
    %525 = arith.addf %468, %524 : vector<2x32xf32>
    %cst_149 = arith.constant 2.000000e-01 : f32
    %526 = vector.broadcast %cst_149 : f32 to vector<2x32xf32>
    %527 = arith.mulf %525, %526 : vector<2x32xf32>
    %c0_150 = arith.constant 0 : index
    %c0_151 = arith.constant 0 : index
    %528 = vector.load %arg17[%c0_150, %c0_151] : memref<32x4xf32, #tpu.memory_space<vmem>>, vector<32x4xf32>
    %cst_152 = arith.constant dense<0.000000e+00> : vector<2x4xf32>
    %529 = tpu.matmul %527, %528, %cst_152 {dimension_numbers = #tpu.dot_dimension_numbers<[1], [0], [0], [1], [0, 0, 1, 1], [], []>} : vector<2x32xf32>, vector<32x4xf32>, vector<2x4xf32> -> vector<2x4xf32>
    %c0_153 = arith.constant 0 : index
    %c0_154 = arith.constant 0 : index
    %530 = vector.load %arg18[%c0_153, %c0_154] : memref<1x4xf32, #tpu.memory_space<vmem>>, vector<1x4xf32>
    %531 = vector.broadcast %530 : vector<1x4xf32> to vector<2x4xf32>
    %532 = arith.addf %529, %531 : vector<2x4xf32>
    %cst_155 = arith.constant dense<0xFF800000> : vector<2xf32>
    %533 = vector.multi_reduction <maximumf>, %532, %cst_155 [1] : vector<2x4xf32> to vector<2xf32>
    %534 = vector.shape_cast %533 : vector<2xf32> to vector<2x1xf32>
    %535 = vector.broadcast %534 : vector<2x1xf32> to vector<2x4xf32>
    %536 = arith.subf %532, %535 : vector<2x4xf32>
    %537 = math.exp %536 : vector<2x4xf32>
    %cst_156 = arith.constant dense<0.000000e+00> : vector<2xf32>
    %538 = vector.multi_reduction <add>, %537, %cst_156 [1] : vector<2x4xf32> to vector<2xf32>
    %539 = vector.shape_cast %538 : vector<2xf32> to vector<2x1xf32>
    %540 = math.log %539 : vector<2x1xf32>
    %541 = arith.addf %540, %534 : vector<2x1xf32>
    %542 = vector.broadcast %541 : vector<2x1xf32> to vector<2x4xf32>
    %543 = arith.subf %532, %542 : vector<2x4xf32>
    %c0_157 = arith.constant 0 : index
    %c0_158 = arith.constant 0 : index
    %544 = vector.load %arg19[%c0_157, %c0_158] : memref<2x4xf32, #tpu.memory_space<vmem>>, vector<2x4xf32>
    tpu.vector_store %arg19[%c0_157, %c0_158], %543 {strides = array<i32>} : memref<2x4xf32, #tpu.memory_space<vmem>>, vector<2x4xf32>,
    return
  }
}

</mosaic_0001>

<llo_original>
// kernel: tpu_custom_call.1
$region0: #{tpu_custom_call.1}
  #allocation0 [shape = 'u32[]', space=smem, size = 0x4, offset = 0x4, fixed_abs, tag = 'smem constant byte address 0x4 - core index']
  #allocation1 [shape = 'u32[144,128]{1,0:T(1,128)}', space=vmem, size = 0x12000, scoped, tag = 'internal scratch']
  %s0 = inlined_call_operand.hbm [shape: f32[10,32], index: 0, kind: input, shape index: {}]
  %s1 = inlined_call_operand.hbm [shape: f32[12,32], index: 1, kind: input, shape index: {}]
  %s2 = inlined_call_operand.hbm [shape: f32[6,2,32], index: 2, kind: input, shape index: {}]
  %s3 = inlined_call_operand.vmem [shape: f32[32,96], index: 3, kind: input, shape index: {}]
  %s4 = inlined_call_operand.vmem [shape: f32[32,96], index: 4, kind: input, shape index: {}]
  %s5 = inlined_call_operand.hbm [shape: f32[1,96], index: 5, kind: input, shape index: {}]
  %s6 = inlined_call_operand.hbm [shape: f32[1,32], index: 6, kind: input, shape index: {}]
  %s7 = inlined_call_operand.vmem [shape: f32[32,96], index: 7, kind: input, shape index: {}]
  %s8 = inlined_call_operand.vmem [shape: f32[32,96], index: 8, kind: input, shape index: {}]
  %s9 = inlined_call_operand.hbm [shape: f32[1,96], index: 9, kind: input, shape index: {}]
  %s10 = inlined_call_operand.hbm [shape: f32[1,32], index: 10, kind: input, shape index: {}]
  %s11 = inlined_call_operand.vmem [shape: f32[32,8], index: 11, kind: input, shape index: {}]
  %s12 = inlined_call_operand.vmem [shape: f32[32,8], index: 12, kind: input, shape index: {}]
  %s13 = inlined_call_operand.vmem [shape: f32[1,8], index: 13, kind: input, shape index: {}]
  %s14 = inlined_call_operand.hbm [shape: f32[32,32], index: 14, kind: input, shape index: {}]
  %s15 = inlined_call_operand.hbm [shape: f32[32,32], index: 15, kind: input, shape index: {}]
  %s16 = inlined_call_operand.vmem [shape: f32[1,32], index: 16, kind: input, shape index: {}]
  %s17 = inlined_call_operand.vmem [shape: f32[32,4], index: 17, kind: input, shape index: {}]
  %s18 = inlined_call_operand.vmem [shape: f32[1,4], index: 18, kind: input, shape index: {}]
  %s19 = inlined_call_operand.hbm [shape: f32[2,4], index: 19, kind: output, shape index: {0}]
  %s20 = inlined_call_operand.hbm [shape: f32[5,2,8], index: 20, kind: output, shape index: {1}]
  %21 = xla_tuple %s19, %s20
  %s22 = sld [smem:[#allocation0]]
  $region130: #{tpu_custom_call.1} parent=0
    _
  %s24 = ssub.s32 1, %s22
  %s25 = scalar_select 0, %s24, %s22
  $region1: #{tpu_custom_call.1} parent=0
    #allocation2 [shape = 'u8[8192]{0}', space=vmem, size = 0x2000, scoped, tag = 'input window, operand 0, single buffered']
    #allocation3 [shape = 's32[1]{0}', space=sflag, size = 0x4, scoped, tag = 'scoped memory for tpu_custom_call.1']
    #allocation4 [shape = 's32[1]{0}', space=sflag, size = 0x4, scoped, tag = 'scoped memory for tpu_custom_call.1']
    #allocation5 [shape = 'u8[8192]{0}', space=vmem, size = 0x2000, scoped, tag = 'input window, operand 1, single buffered']
    #allocation6 [shape = 's32[1]{0}', space=sflag, size = 0x4, scoped, tag = 'scoped memory for tpu_custom_call.1']
    #allocation7 [shape = 'u8[6144]{0}', space=vmem, size = 0x1800, scoped, tag = 'input window, operand 2, single buffered']
    #allocation8 [shape = 'u8[512]{0}', space=vmem, size = 0x400, scoped, tag = 'input window, operand 5, single buffered']
    #allocation9 [shape = 's32[1]{0}', space=sflag, size = 0x4, scoped, tag = 'scoped memory for tpu_custom_call.1']
    #allocation10 [shape = 'u8[512]{0}', space=vmem, size = 0x400, scoped, tag = 'input window, operand 6, single buffered']
    #allocation11 [shape = 'u8[512]{0}', space=vmem, size = 0x400, scoped, tag = 'input window, operand 9, single buffered']
    #allocation12 [shape = 's32[1]{0}', space=sflag, size = 0x4, scoped, tag = 'scoped memory for tpu_custom_call.1']
    #allocation13 [shape = 'u8[512]{0}', space=vmem, size = 0x400, scoped, tag = 'input window, operand 10, single buffered']
    #allocation14 [shape = 'u8[16384]{0}', space=vmem, size = 0x4000, scoped, tag = 'input window, operand 14, single buffered']
    #allocation15 [shape = 's32[1]{0}', space=sflag, size = 0x4, scoped, tag = 'scoped memory for tpu_custom_call.1']
    #allocation16 [shape = 'u8[16384]{0}', space=vmem, size = 0x4000, scoped, tag = 'input window, operand 15, single buffered']
    #allocation17 [shape = 'u8[1024]{0}', space=vmem, size = 0x400, scoped, tag = 'output window, operand 0, single buffered']
    #allocation18 [shape = 'u8[5120]{0}', space=vmem, size = 0x1400, scoped, tag = 'output window, operand 1, single buffered']
    #allocation19 [shape = 's32[1]{0}', space=sflag, size = 0x4, scoped, tag = 'scoped memory for tpu_custom_call.1']
    %26 = vsyncpa [#allocation3], 0
    %27 = vsyncpa [#allocation6], 0
    %28 = vsyncpa [#allocation9], 0
    %29 = vsyncpa [#allocation12], 0
    %30 = vsyncpa [#allocation15], 0
    %31 = vsyncpa [#allocation4], 0
    %32 = vsyncpa [#allocation19], 0
    // Predicated region
    $region2: #{tpu_custom_call.1} parent=1 // pred_check
      _
    $region3: #{tpu_custom_call.1} parent=1 // pred_check_branch
      %34 = sbr.rel (0) target = $region5
    $region4: #{tpu_custom_call.1} parent=1 // pred_region
      %s36 = ssub.s32 256, 256
      %37 = vsyncadd [#allocation3], %s36
      %s38 = sshll.u32 [#allocation2], 4
      %s39 = int_to_ptr.vmem [resolvable:$true] %s38
      %44 = dma.hbm_to_vmem [thread:$0]  %s0, 256, %s39, [#allocation3], 128, 128, 8
    $region5: #{tpu_custom_call.1} parent=1 // pred_fallthru
      _
    // Predicated region
    $region6: #{tpu_custom_call.1} parent=1 // pred_check
      _
    $region7: #{tpu_custom_call.1} parent=1 // pred_check_branch
      %46 = sbr.rel (0) target = $region9
    $region8: #{tpu_custom_call.1} parent=1 // pred_region
      %s48 = ssub.s32 256, 256
      %49 = vsyncadd [#allocation6], %s48
      %s50 = sshll.u32 [#allocation5], 4
      %s51 = int_to_ptr.vmem [resolvable:$true] %s50
      %56 = dma.hbm_to_vmem [thread:$0]  %s1, 256, %s51, [#allocation6], 128, 128, 8
    $region9: #{tpu_custom_call.1} parent=1 // pred_fallthru
      _
    // Predicated region
    $region10: #{tpu_custom_call.1} parent=1 // pred_check
      _
    $region11: #{tpu_custom_call.1} parent=1 // pred_check_branch
      %58 = sbr.rel (0) target = $region13
    $region12: #{tpu_custom_call.1} parent=1 // pred_region
      %s60 = ssub.s32 192, 192
      %61 = vsyncadd [#allocation6], %s60
      %s62 = sshll.u32 [#allocation7], 4
      %s63 = int_to_ptr.vmem [resolvable:$true] %s62
      %68 = dma.hbm_to_vmem [thread:$0]  %s2, 192, %s63, [#allocation6], 32, 32, 2
    $region13: #{tpu_custom_call.1} parent=1 // pred_fallthru
      _
    // Predicated region
    $region14: #{tpu_custom_call.1} parent=1 // pred_check
      _
    $region15: #{tpu_custom_call.1} parent=1 // pred_check_branch
      %70 = sbr.rel (0) target = $region17
    $region16: #{tpu_custom_call.1} parent=1 // pred_region
      _
    $region17: #{tpu_custom_call.1} parent=1 // pred_fallthru
      _
    // Predicated region
    $region18: #{tpu_custom_call.1} parent=1 // pred_check
      _
    $region19: #{tpu_custom_call.1} parent=1 // pred_check_branch
      %72 = sbr.rel (0) target = $region21
    $region20: #{tpu_custom_call.1} parent=1 // pred_region
      _
    $region21: #{tpu_custom_call.1} parent=1 // pred_fallthru
      _
    // Predicated region
    $region22: #{tpu_custom_call.1} parent=1 // pred_check
      _
    $region23: #{tpu_custom_call.1} parent=1 // pred_check_branch
      %74 = sbr.rel (0) target = $region25
    $region24: #{tpu_custom_call.1} parent=1 // pred_region
      %s76 = ssub.s32 16, 16
      %77 = vsyncadd [#allocation9], %s76
      %s79 = sshll.u32 [#allocation8], 4
      %s80 = int_to_ptr.vmem [resolvable:$true] %s79
      %82 = dma.hbm_to_vmem [thread:$0]  %s5, 16, %s80, [#allocation9]
    $region25: #{tpu_custom_call.1} parent=1 // pred_fallthru
      _
    // Predicated region
    $region26: #{tpu_custom_call.1} parent=1 // pred_check
      _
    $region27: #{tpu_custom_call.1} parent=1 // pred_check_branch
      %84 = sbr.rel (0) target = $region29
    $region28: #{tpu_custom_call.1} parent=1 // pred_region
      %s86 = ssub.s32 16, 16
      %87 = vsyncadd [#allocation9], %s86
      %s89 = sshll.u32 [#allocation10], 4
      %s90 = int_to_ptr.vmem [resolvable:$true] %s89
      %92 = dma.hbm_to_vmem [thread:$0]  %s6, 16, %s90, [#allocation9]
    $region29: #{tpu_custom_call.1} parent=1 // pred_fallthru
      _
    // Predicated region
    $region30: #{tpu_custom_call.1} parent=1 // pred_check
      _
    $region31: #{tpu_custom_call.1} parent=1 // pred_check_branch
      %94 = sbr.rel (0) target = $region33
    $region32: #{tpu_custom_call.1} parent=1 // pred_region
      _
    $region33: #{tpu_custom_call.1} parent=1 // pred_fallthru
      _
    // Predicated region
    $region34: #{tpu_custom_call.1} parent=1 // pred_check
      _
    $region35: #{tpu_custom_call.1} parent=1 // pred_check_branch
      %96 = sbr.rel (0) target = $region37
    $region36: #{tpu_custom_call.1} parent=1 // pred_region
      _
    $region37: #{tpu_custom_call.1} parent=1 // pred_fallthru
      _
    // Predicated region
    $region38: #{tpu_custom_call.1} parent=1 // pred_check
      _
    $region39: #{tpu_custom_call.1} parent=1 // pred_check_branch
      %98 = sbr.rel (0) target = $region41
    $region40: #{tpu_custom_call.1} parent=1 // pred_region
      %s100 = ssub.s32 16, 16
      %101 = vsyncadd [#allocation12], %s100
      %s103 = sshll.u32 [#allocation11], 4
      %s104 = int_to_ptr.vmem [resolvable:$true] %s103
      %106 = dma.hbm_to_vmem [thread:$0]  %s9, 16, %s104, [#allocation12]
    $region41: #{tpu_custom_call.1} parent=1 // pred_fallthru
      _
    // Predicated region
    $region42: #{tpu_custom_call.1} parent=1 // pred_check
      _
    $region43: #{tpu_custom_call.1} parent=1 // pred_check_branch
      %108 = sbr.rel (0) target = $region45
    $region44: #{tpu_custom_call.1} parent=1 // pred_region
      %s110 = ssub.s32 16, 16
      %111 = vsyncadd [#allocation12], %s110
      %s113 = sshll.u32 [#allocation13], 4
      %s114 = int_to_ptr.vmem [resolvable:$true] %s113
      %116 = dma.hbm_to_vmem [thread:$0]  %s10, 16, %s114, [#allocation12]
    $region45: #{tpu_custom_call.1} parent=1 // pred_fallthru
      _
    // Predicated region
    $region46: #{tpu_custom_call.1} parent=1 // pred_check
      _
    $region47: #{tpu_custom_call.1} parent=1 // pred_check_branch
      %118 = sbr.rel (0) target = $region49
    $region48: #{tpu_custom_call.1} parent=1 // pred_region
      _
    $region49: #{tpu_custom_call.1} parent=1 // pred_fallthru
      _
    // Predicated region
    $region50: #{tpu_custom_call.1} parent=1 // pred_check
      _
    $region51: #{tpu_custom_call.1} parent=1 // pred_check_branch
      %120 = sbr.rel (0) target = $region53
    $region52: #{tpu_custom_call.1} parent=1 // pred_region
      _
    $region53: #{tpu_custom_call.1} parent=1 // pred_fallthru
      _
    // Predicated region
    $region54: #{tpu_custom_call.1} parent=1 // pred_check
      _
    $region55: #{tpu_custom_call.1} parent=1 // pred_check_branch
      %122 = sbr.rel (0) target = $region57
    $region56: #{tpu_custom_call.1} parent=1 // pred_region
      _
    $region57: #{tpu_custom_call.1} parent=1 // pred_fallthru
      _
    // Predicated region
    $region58: #{tpu_custom_call.1} parent=1 // pred_check
      _
    $region59: #{tpu_custom_call.1} parent=1 // pred_check_branch
      %124 = sbr.rel (0) target = $region61
    $region60: #{tpu_custom_call.1} parent=1 // pred_region
      %s126 = ssub.s32 512, 512
      %127 = vsyncadd [#allocation15], %s126
      %s128 = sshll.u32 [#allocation14], 4
      %s129 = int_to_ptr.vmem [resolvable:$true] %s128
      %134 = dma.hbm_to_vmem [thread:$0]  %s14, 512, %s129, [#allocation15], 128, 128, 8
    $region61: #{tpu_custom_call.1} parent=1 // pred_fallthru
      _
    // Predicated region
    $region62: #{tpu_custom_call.1} parent=1 // pred_check
      _
    $region63: #{tpu_custom_call.1} parent=1 // pred_check_branch
      %136 = sbr.rel (0) target = $region65
    $region64: #{tpu_custom_call.1} parent=1 // pred_region
      %s138 = ssub.s32 512, 512
      %139 = vsyncadd [#allocation15], %s138
      %s140 = sshll.u32 [#allocation16], 4
      %s141 = int_to_ptr.vmem [resolvable:$true] %s140
      %146 = dma.hbm_to_vmem [thread:$0]  %s15, 512, %s141, [#allocation15], 128, 128, 8
    $region65: #{tpu_custom_call.1} parent=1 // pred_fallthru
      _
    // Predicated region
    $region66: #{tpu_custom_call.1} parent=1 // pred_check
      _
    $region67: #{tpu_custom_call.1} parent=1 // pred_check_branch
      %148 = sbr.rel (0) target = $region69
    $region68: #{tpu_custom_call.1} parent=1 // pred_region
      _
    $region69: #{tpu_custom_call.1} parent=1 // pred_fallthru
      _
    // Predicated region
    $region70: #{tpu_custom_call.1} parent=1 // pred_check
      _
    $region71: #{tpu_custom_call.1} parent=1 // pred_check_branch
      %150 = sbr.rel (0) target = $region73
    $region72: #{tpu_custom_call.1} parent=1 // pred_region
      _
    $region73: #{tpu_custom_call.1} parent=1 // pred_fallthru
      _
    // Predicated region
    $region74: #{tpu_custom_call.1} parent=1 // pred_check
      _
    $region75: #{tpu_custom_call.1} parent=1 // pred_check_branch
      %152 = sbr.rel (0) target = $region77
    $region76: #{tpu_custom_call.1} parent=1 // pred_region
      _
    $region77: #{tpu_custom_call.1} parent=1 // pred_fallthru
      _
    // Predicated region
    $region78: #{tpu_custom_call.1} parent=1 // pred_check
      _
    $region79: #{tpu_custom_call.1} parent=1 // pred_check_branch
      %154 = sbr.rel (0) target = $region81
    $region80: #{tpu_custom_call.1} parent=1 // pred_region
      %155 = dma.done [#allocation3], 256
    $region81: #{tpu_custom_call.1} parent=1 // pred_fallthru
      _
    // Predicated region
    $region82: #{tpu_custom_call.1} parent=1 // pred_check
      _
    $region83: #{tpu_custom_call.1} parent=1 // pred_check_branch
      %157 = sbr.rel (0) target = $region85
    $region84: #{tpu_custom_call.1} parent=1 // pred_region
      %158 = dma.done [#allocation6], 256
    $region85: #{tpu_custom_call.1} parent=1 // pred_fallthru
      _
    // Predicated region
    $region86: #{tpu_custom_call.1} parent=1 // pred_check
      _
    $region87: #{tpu_custom_call.1} parent=1 // pred_check_branch
      %160 = sbr.rel (0) target = $region89
    $region88: #{tpu_custom_call.1} parent=1 // pred_region
      %161 = dma.done [#allocation6], 192
    $region89: #{tpu_custom_call.1} parent=1 // pred_fallthru
      _
    // Predicated region
    $region90: #{tpu_custom_call.1} parent=1 // pred_check
      _
    $region91: #{tpu_custom_call.1} parent=1 // pred_check_branch
      %163 = sbr.rel (0) target = $region93
    $region92: #{tpu_custom_call.1} parent=1 // pred_region
      %164 = dma.done [#allocation9], 16
    $region93: #{tpu_custom_call.1} parent=1 // pred_fallthru
      _
    // Predicated region
    $region94: #{tpu_custom_call.1} parent=1 // pred_check
      _
    $region95: #{tpu_custom_call.1} parent=1 // pred_check_branch
      %166 = sbr.rel (0) target = $region97
    $region96: #{tpu_custom_call.1} parent=1 // pred_region
      %167 = dma.done [#allocation9], 16
    $region97: #{tpu_custom_call.1} parent=1 // pred_fallthru
      _
    // Predicated region
    $region98: #{tpu_custom_call.1} parent=1 // pred_check
      _
    $region99: #{tpu_custom_call.1} parent=1 // pred_check_branch
      %169 = sbr.rel (0) target = $region101
    $region100: #{tpu_custom_call.1} parent=1 // pred_region
      %170 = dma.done [#allocation12], 16
    $region101: #{tpu_custom_call.1} parent=1 // pred_fallthru
      _
    // Predicated region
    $region102: #{tpu_custom_call.1} parent=1 // pred_check
      _
    $region103: #{tpu_custom_call.1} parent=1 // pred_check_branch
      %172 = sbr.rel (0) target = $region105
    $region104: #{tpu_custom_call.1} parent=1 // pred_region
      %173 = dma.done [#allocation12], 16
    $region105: #{tpu_custom_call.1} parent=1 // pred_fallthru
      _
    // Predicated region
    $region106: #{tpu_custom_call.1} parent=1 // pred_check
      _
    $region107: #{tpu_custom_call.1} parent=1 // pred_check_branch
      %175 = sbr.rel (0) target = $region109
    $region108: #{tpu_custom_call.1} parent=1 // pred_region
      %176 = dma.done [#allocation15], 512
    $region109: #{tpu_custom_call.1} parent=1 // pred_fallthru
      _
    // Predicated region
    $region110: #{tpu_custom_call.1} parent=1 // pred_check
      _
    $region111: #{tpu_custom_call.1} parent=1 // pred_check_branch
      %178 = sbr.rel (0) target = $region113
    $region112: #{tpu_custom_call.1} parent=1 // pred_region
      %179 = dma.done [#allocation15], 512
    $region113: #{tpu_custom_call.1} parent=1 // pred_fallthru
      _
    %v180 = vld [vmem:[#allocation5] sm:$0xff]
    %v181 = vld [vmem:[#allocation5 + $0x8] sm:$0xf]
    %v182 = vld [vmem:[%s3] sm:$0xff]
    %v183 = vld [vmem:[%s3 + $0x8] sm:$0xff]
    %v184 = vld [vmem:[%s3 + $0x10] sm:$0xff]
    %v185 = vld [vmem:[%s3 + $0x18] sm:$0xff]
    %v186 = vld [vmem:[#allocation8] sm:$0x1]
    %v188 = vlaneseq
    %v189 = vshrl.u32 %v188, 7
    %v190 = vsub.s32 0, %v189
    %v191 = vrot.slane %v186, %v190
    %vm193 = vcmask 261120
    %v195 = vsel %vm193, %v180, 0
    %v198 = vsel %vm193, %v181, 0
    %200 = vmatprep.subr.mxu0 0.0
    %201 = vmatpush1.msra.mxu0 0.0
    %202 = vmatprep.subr.mxu0 0.0
    %203 = vmatpush1.msra.mxu0 0.0
    %204 = vmatprep.subr.mxu0 0.0
    %205 = vmatpush1.msra.mxu0 0.0
    %206 = vmatprep.subr.mxu0 0.0
    %207 = vmatpush1.msra.mxu0 0.0
    %208 = vmatprep.subr.mxu0 0.0
    %209 = vmatpush1.msra.mxu0 0.0
    %210 = vmatprep.subr.mxu0 0.0
    %211 = vmatpush1.msra.mxu0 0.0
    %212 = vmatprep.subr.mxu0 0.0
    %213 = vmatpush1.msra.mxu0 0.0
    %214 = vmatprep.subr.mxu0 0.0
    %215 = vmatpush1.msra.mxu0 0.0
    %216 = vmatprep.subr.mxu0 0.0
    %217 = vmatpush1.msra.mxu0 0.0
    %218 = vmatprep.subr.mxu0 0.0
    %219 = vmatpush1.msra.mxu0 0.0
    %220 = vmatprep.subr.mxu0 0.0
    %221 = vmatpush1.msra.mxu0 0.0
    %222 = vmatprep.subr.mxu0 0.0
    %223 = vmatpush1.msra.mxu0 0.0
    %224 = vmatprep.subr.mxu0 0.0
    %225 = vmatpush1.msra.mxu0 %v185
    %226 = vmatprep.subr.mxu0 0.0
    %227 = vmatpush1.msra.mxu0 %v184
    %228 = vmatprep.subr.mxu0 0.0
    %229 = vmatpush1.msra.mxu0 %v183
    %230 = vmatprep.subr.mxu0 0.0
    %231 = vmatpush1.msra.mxu0 %v182
    %232 = vmatprep.subr.mxu0 0.0
    %233 = vmatpush2.msra.mxu0 0.0
    %234 = vmatprep.subr.mxu0 0.0
    %235 = vmatpush2.msra.mxu0 0.0
    %236 = vmatprep.subr.mxu0 0.0
    %237 = vmatpush2.msra.mxu0 0.0
    %238 = vmatprep.subr.mxu0 0.0
    %239 = vmatpush2.msra.mxu0 0.0
    %240 = vmatprep.subr.mxu0 0.0
    %241 = vmatpush2.msra.mxu0 0.0
    %242 = vmatprep.subr.mxu0 0.0
    %243 = vmatpush2.msra.mxu0 0.0
    %244 = vmatprep.subr.mxu0 0.0
    %245 = vmatpush2.msra.mxu0 0.0
    %246 = vmatprep.subr.mxu0 0.0
    %247 = vmatpush2.msra.mxu0 0.0
    %248 = vmatprep.subr.mxu0 0.0
    %249 = vmatpush2.msra.mxu0 0.0
    %250 = vmatprep.subr.mxu0 0.0
    %251 = vmatpush2.msra.mxu0 0.0
    %252 = vmatprep.subr.mxu0 0.0
    %253 = vmatpush2.msra.mxu0 0.0
    %254 = vmatprep.subr.mxu0 0.0
    %255 = vmatpush2.msra.mxu0 0.0
    %256 = vmatprep.subr.mxu0 0.0
    %257 = vmatpush2.msra.mxu0 0.0
    %258 = vmatprep.subr.mxu0 0.0
    %259 = vmatpush2.msra.mxu0 0.0
    %260 = vmatprep.subr.mxu0 0.0
    %261 = vmatpush2.msra.mxu0 0.0
    %262 = vmatprep.subr.mxu0 0.0
    %263 = vmatpush2.msra.mxu0 0.0
    %264 = vmatprep.mubr.f32.mxu0 0.0
    %265 = vmatmul.mubr.f32.gmra.mxu0 %v195
    %v266 = vpop.f32.mrf.mxu0
    %v267 = vadd.f32 %v191, %v266
    %v268 = vpop.f32.mrf.mxu0
    %269 = vmatprep.mubr.f32.mxu0 0.0
    %270 = vmatmul.mubr.f32.gmra.mxu0 %v198
    %v271 = vpop.f32.mrf.mxu0
    %v272 = vadd.f32 %v191, %v271
    %v273 = vpop.f32.mrf.mxu0
    %274 = vdwg.mxu0
    %v275 = vld [vmem:[%s4] sm:$0xff]
    %v276 = vld [vmem:[%s4 + $0x8] sm:$0xff]
    %v277 = vld [vmem:[%s4 + $0x10] sm:$0xff]
    %v278 = vld [vmem:[%s4 + $0x18] sm:$0xff]
    %v279 = vld [vmem:[#allocation10] sm:$0x1]
    %v281 = vlaneseq
    %v282 = vshrl.u32 %v281, 7
    %v283 = vsub.s32 0, %v282
    %v284 = vrot.slane %v279, %v283
    %v286 = vsel %vm193, 0.0, 0
    %288 = vmatprep.subr.mxu0 0.0
    %289 = vmatpush1.msra.mxu0 0.0
    %290 = vmatprep.subr.mxu0 0.0
    %291 = vmatpush1.msra.mxu0 0.0
    %292 = vmatprep.subr.mxu0 0.0
    %293 = vmatpush1.msra.mxu0 0.0
    %294 = vmatprep.subr.mxu0 0.0
    %295 = vmatpush1.msra.mxu0 0.0
    %296 = vmatprep.subr.mxu0 0.0
    %297 = vmatpush1.msra.mxu0 0.0
    %298 = vmatprep.subr.mxu0 0.0
    %299 = vmatpush1.msra.mxu0 0.0
    %300 = vmatprep.subr.mxu0 0.0
    %301 = vmatpush1.msra.mxu0 0.0
    %302 = vmatprep.subr.mxu0 0.0
    %303 = vmatpush1.msra.mxu0 0.0
    %304 = vmatprep.subr.mxu0 0.0
    %305 = vmatpush1.msra.mxu0 0.0
    %306 = vmatprep.subr.mxu0 0.0
    %307 = vmatpush1.msra.mxu0 0.0
    %308 = vmatprep.subr.mxu0 0.0
    %309 = vmatpush1.msra.mxu0 0.0
    %310 = vmatprep.subr.mxu0 0.0
    %311 = vmatpush1.msra.mxu0 0.0
    %312 = vmatprep.subr.mxu0 0.0
    %313 = vmatpush1.msra.mxu0 %v278
    %314 = vmatprep.subr.mxu0 0.0
    %315 = vmatpush1.msra.mxu0 %v277
    %316 = vmatprep.subr.mxu0 0.0
    %317 = vmatpush1.msra.mxu0 %v276
    %318 = vmatprep.subr.mxu0 0.0
    %319 = vmatpush1.msra.mxu0 %v275
    %320 = vmatprep.subr.mxu0 0.0
    %321 = vmatpush2.msra.mxu0 0.0
    %322 = vmatprep.subr.mxu0 0.0
    %323 = vmatpush2.msra.mxu0 0.0
    %324 = vmatprep.subr.mxu0 0.0
    %325 = vmatpush2.msra.mxu0 0.0
    %326 = vmatprep.subr.mxu0 0.0
    %327 = vmatpush2.msra.mxu0 0.0
    %328 = vmatprep.subr.mxu0 0.0
    %329 = vmatpush2.msra.mxu0 0.0
    %330 = vmatprep.subr.mxu0 0.0
    %331 = vmatpush2.msra.mxu0 0.0
    %332 = vmatprep.subr.mxu0 0.0
    %333 = vmatpush2.msra.mxu0 0.0
    %334 = vmatprep.subr.mxu0 0.0
    %335 = vmatpush2.msra.mxu0 0.0
    %336 = vmatprep.subr.mxu0 0.0
    %337 = vmatpush2.msra.mxu0 0.0
    %338 = vmatprep.subr.mxu0 0.0
    %339 = vmatpush2.msra.mxu0 0.0
    %340 = vmatprep.subr.mxu0 0.0
    %341 = vmatpush2.msra.mxu0 0.0
    %342 = vmatprep.subr.mxu0 0.0
    %343 = vmatpush2.msra.mxu0 0.0
    %344 = vmatprep.subr.mxu0 0.0
    %345 = vmatpush2.msra.mxu0 0.0
    %346 = vmatprep.subr.mxu0 0.0
    %347 = vmatpush2.msra.mxu0 0.0
    %348 = vmatprep.subr.mxu0 0.0
    %349 = vmatpush2.msra.mxu0 0.0
    %350 = vmatprep.subr.mxu0 0.0
    %351 = vmatpush2.msra.mxu0 0.0
    %352 = vmatprep.mubr.f32.mxu0 0.0
    %353 = vmatmul.mubr.f32.gmra.mxu0 %v286
    %v354 = vpop.f32.mrf.mxu0
    %v355 = vadd.f32 0.0, %v354
    %v356 = vpop.f32.mrf.mxu0
    %357 = vdwg.mxu0
    %v358 = vadd.f32 %v267, %v355
    %v359 = vxor.u32 %v358, 2147483648
    %v360 = vmul.f32 %v359, 1.442695
    %v361 = vpow.pop %v360
    %v362 = vadd.f32 %v361, 1.0
    %v363 = vrcp.pop %v362
    %v364 = vmul.f32 1.0, %v363
    %365 = vrot.lane.b32.xlu0 %v284, 64
    %v366 = vpop.permute.xlu0 %365
    %v368 = vadd.f32 %v355, %v366
    %370 = vrot.lane.b32.xlu0 %v368, 64
    %v371 = vpop.permute.xlu0 %370
    %v373 = vmul.f32 %v364, %v371
    %375 = vrot.lane.b32.xlu0 %v373, 64
    %v376 = vpop.permute.xlu0 %375
    %v378 = vadd.f32 %v267, %v376
    %v379 = vtanh.pop %v378
    %v380 = vsub.f32 1.0, %v364
    %382 = vrot.lane.b32.xlu0 %v379, 96
    %v383 = vpop.permute.xlu0 %382
    %v385 = vmul.f32 %v380, %v383
    %v386 = vmul.f32 %v364, 0.0
    %v387 = vadd.f32 %v385, %v386
    %v388 = vld [vmem:[#allocation7] sm:$0x3]
    %390 = vrot.lane.b32.xlu0 %v388, 32
    %v391 = vpop.permute.xlu0 %390
    %v393 = vmul.f32 %v387, %v391
    %395 = vrot.lane.b32.xlu0 %v387, 96
    %v396 = vpop.permute.xlu0 %395
    %v397 = vsel %vm193, %v396, 0
    %399 = vmatprep.subr.mxu0 0.0
    %400 = vmatpush1.msra.mxu0 0.0
    %401 = vmatprep.subr.mxu0 0.0
    %402 = vmatpush1.msra.mxu0 0.0
    %403 = vmatprep.subr.mxu0 0.0
    %404 = vmatpush1.msra.mxu0 0.0
    %405 = vmatprep.subr.mxu0 0.0
    %406 = vmatpush1.msra.mxu0 0.0
    %407 = vmatprep.subr.mxu0 0.0
    %408 = vmatpush1.msra.mxu0 0.0
    %409 = vmatprep.subr.mxu0 0.0
    %410 = vmatpush1.msra.mxu0 0.0
    %411 = vmatprep.subr.mxu0 0.0
    %412 = vmatpush1.msra.mxu0 0.0
    %413 = vmatprep.subr.mxu0 0.0
    %414 = vmatpush1.msra.mxu0 0.0
    %415 = vmatprep.subr.mxu0 0.0
    %416 = vmatpush1.msra.mxu0 0.0
    %417 = vmatprep.subr.mxu0 0.0
    %418 = vmatpush1.msra.mxu0 0.0
    %419 = vmatprep.subr.mxu0 0.0
    %420 = vmatpush1.msra.mxu0 0.0
    %421 = vmatprep.subr.mxu0 0.0
    %422 = vmatpush1.msra.mxu0 0.0
    %423 = vmatprep.subr.mxu0 0.0
    %424 = vmatpush1.msra.mxu0 %v278
    %425 = vmatprep.subr.mxu0 0.0
    %426 = vmatpush1.msra.mxu0 %v277
    %427 = vmatprep.subr.mxu0 0.0
    %428 = vmatpush1.msra.mxu0 %v276
    %429 = vmatprep.subr.mxu0 0.0
    %430 = vmatpush1.msra.mxu0 %v275
    %431 = vmatprep.subr.mxu0 0.0
    %432 = vmatpush2.msra.mxu0 0.0
    %433 = vmatprep.subr.mxu0 0.0
    %434 = vmatpush2.msra.mxu0 0.0
    %435 = vmatprep.subr.mxu0 0.0
    %436 = vmatpush2.msra.mxu0 0.0
    %437 = vmatprep.subr.mxu0 0.0
    %438 = vmatpush2.msra.mxu0 0.0
    %439 = vmatprep.subr.mxu0 0.0
    %440 = vmatpush2.msra.mxu0 0.0
    %441 = vmatprep.subr.mxu0 0.0
    %442 = vmatpush2.msra.mxu0 0.0
    %443 = vmatprep.subr.mxu0 0.0
    %444 = vmatpush2.msra.mxu0 0.0
    %445 = vmatprep.subr.mxu0 0.0
    %446 = vmatpush2.msra.mxu0 0.0
    %447 = vmatprep.subr.mxu0 0.0
    %448 = vmatpush2.msra.mxu0 0.0
    %449 = vmatprep.subr.mxu0 0.0
    %450 = vmatpush2.msra.mxu0 0.0
    %451 = vmatprep.subr.mxu0 0.0
    %452 = vmatpush2.msra.mxu0 0.0
    %453 = vmatprep.subr.mxu0 0.0
    %454 = vmatpush2.msra.mxu0 0.0
    %455 = vmatprep.subr.mxu0 0.0
    %456 = vmatpush2.msra.mxu0 0.0
    %457 = vmatprep.subr.mxu0 0.0
    %458 = vmatpush2.msra.mxu0 0.0
    %459 = vmatprep.subr.mxu0 0.0
    %460 = vmatpush2.msra.mxu0 0.0
    %461 = vmatprep.subr.mxu0 0.0
    %462 = vmatpush2.msra.mxu0 0.0
    %463 = vmatprep.mubr.f32.mxu0 0.0
    %464 = vmatmul.mubr.f32.gmra.mxu0 %v397
    %v465 = vpop.f32.mrf.mxu0
    %v466 = vadd.f32 0.0, %v465
    %v467 = vpop.f32.mrf.mxu0
    %468 = vdwg.mxu0
    %v470 = vrot.slane %v466, 6
    %v472 = vadd.f32 %v267, %v470
    %v473 = vxor.u32 %v472, 2147483648
    %v474 = vmul.f32 %v473, 1.442695
    %v475 = vpow.pop %v474
    %v476 = vadd.f32 %v475, 1.0
    %v477 = vrcp.pop %v476
    %v478 = vmul.f32 1.0, %v477
    %v479 = vadd.f32 %v466, %v366
    %v481 = vrot.slane %v479, 6
    %482 = vrot.lane.b32.xlu0 %v481, 64
    %v483 = vpop.permute.xlu0 %482
    %v485 = vmul.f32 %v478, %v483
    %487 = vrot.lane.b32.xlu0 %v485, 64
    %v488 = vpop.permute.xlu0 %487
    %v490 = vadd.f32 %v267, %v488
    %v491 = vtanh.pop %v490
    %v492 = vsub.f32 1.0, %v478
    %494 = vrot.lane.b32.xlu0 %v491, 96
    %v495 = vpop.permute.xlu0 %494
    %v497 = vmul.f32 %v492, %v495
    %v498 = vrot.slane %v387, 6
    %v500 = vmul.f32 %v478, %v498
    %v501 = vadd.f32 %v497, %v500
    %s502 = scalar_lea.vmem [#allocation7], 2
    %v503 = vld [vmem:[%s502] sm:$0x3]
    %v505 = vrot.slane %v503, 6
    %506 = vrot.lane.b32.xlu0 %v505, 32
    %v507 = vpop.permute.xlu0 %506
    %v509 = vmul.f32 %v501, %v507
    %v511 = vrot.slane %v501, 2
    %512 = vrot.lane.b32.xlu0 %v511, 96
    %v513 = vpop.permute.xlu0 %512
    %v514 = vsel %vm193, %v513, 0
    %516 = vmatprep.subr.mxu0 0.0
    %517 = vmatpush1.msra.mxu0 0.0
    %518 = vmatprep.subr.mxu0 0.0
    %519 = vmatpush1.msra.mxu0 0.0
    %520 = vmatprep.subr.mxu0 0.0
    %521 = vmatpush1.msra.mxu0 0.0
    %522 = vmatprep.subr.mxu0 0.0
    %523 = vmatpush1.msra.mxu0 0.0
    %524 = vmatprep.subr.mxu0 0.0
    %525 = vmatpush1.msra.mxu0 0.0
    %526 = vmatprep.subr.mxu0 0.0
    %527 = vmatpush1.msra.mxu0 0.0
    %528 = vmatprep.subr.mxu0 0.0
    %529 = vmatpush1.msra.mxu0 0.0
    %530 = vmatprep.subr.mxu0 0.0
    %531 = vmatpush1.msra.mxu0 0.0
    %532 = vmatprep.subr.mxu0 0.0
    %533 = vmatpush1.msra.mxu0 0.0
    %534 = vmatprep.subr.mxu0 0.0
    %535 = vmatpush1.msra.mxu0 0.0
    %536 = vmatprep.subr.mxu0 0.0
    %537 = vmatpush1.msra.mxu0 0.0
    %538 = vmatprep.subr.mxu0 0.0
    %539 = vmatpush1.msra.mxu0 0.0
    %540 = vmatprep.subr.mxu0 0.0
    %541 = vmatpush1.msra.mxu0 %v278
    %542 = vmatprep.subr.mxu0 0.0
    %543 = vmatpush1.msra.mxu0 %v277
    %544 = vmatprep.subr.mxu0 0.0
    %545 = vmatpush1.msra.mxu0 %v276
    %546 = vmatprep.subr.mxu0 0.0
    %547 = vmatpush1.msra.mxu0 %v275
    %548 = vmatprep.subr.mxu0 0.0
    %549 = vmatpush2.msra.mxu0 0.0
    %550 = vmatprep.subr.mxu0 0.0
    %551 = vmatpush2.msra.mxu0 0.0
    %552 = vmatprep.subr.mxu0 0.0
    %553 = vmatpush2.msra.mxu0 0.0
    %554 = vmatprep.subr.mxu0 0.0
    %555 = vmatpush2.msra.mxu0 0.0
    %556 = vmatprep.subr.mxu0 0.0
    %557 = vmatpush2.msra.mxu0 0.0
    %558 = vmatprep.subr.mxu0 0.0
    %559 = vmatpush2.msra.mxu0 0.0
    %560 = vmatprep.subr.mxu0 0.0
    %561 = vmatpush2.msra.mxu0 0.0
    %562 = vmatprep.subr.mxu0 0.0
    %563 = vmatpush2.msra.mxu0 0.0
    %564 = vmatprep.subr.mxu0 0.0
    %565 = vmatpush2.msra.mxu0 0.0
    %566 = vmatprep.subr.mxu0 0.0
    %567 = vmatpush2.msra.mxu0 0.0
    %568 = vmatprep.subr.mxu0 0.0
    %569 = vmatpush2.msra.mxu0 0.0
    %570 = vmatprep.subr.mxu0 0.0
    %571 = vmatpush2.msra.mxu0 0.0
    %572 = vmatprep.subr.mxu0 0.0
    %573 = vmatpush2.msra.mxu0 0.0
    %574 = vmatprep.subr.mxu0 0.0
    %575 = vmatpush2.msra.mxu0 0.0
    %576 = vmatprep.subr.mxu0 0.0
    %577 = vmatpush2.msra.mxu0 0.0
    %578 = vmatprep.subr.mxu0 0.0
    %579 = vmatpush2.msra.mxu0 0.0
    %580 = vmatprep.mubr.f32.mxu0 0.0
    %581 = vmatmul.mubr.f32.gmra.mxu0 %v514
    %v582 = vpop.f32.mrf.mxu0
    %v583 = vadd.f32 0.0, %v582
    %v584 = vpop.f32.mrf.mxu0
    %585 = vdwg.mxu0
    %v587 = vrot.slane %v583, 4
    %v589 = vadd.f32 %v267, %v587
    %v590 = vxor.u32 %v589, 2147483648
    %v591 = vmul.f32 %v590, 1.442695
    %v592 = vpow.pop %v591
    %v593 = vadd.f32 %v592, 1.0
    %v594 = vrcp.pop %v593
    %v595 = vmul.f32 1.0, %v594
    %v596 = vadd.f32 %v583, %v366
    %v598 = vrot.slane %v596, 4
    %599 = vrot.lane.b32.xlu0 %v598, 64
    %v600 = vpop.permute.xlu0 %599
    %v602 = vmul.f32 %v595, %v600
    %604 = vrot.lane.b32.xlu0 %v602, 64
    %v605 = vpop.permute.xlu0 %604
    %v607 = vadd.f32 %v267, %v605
    %v608 = vtanh.pop %v607
    %v609 = vsub.f32 1.0, %v595
    %611 = vrot.lane.b32.xlu0 %v608, 96
    %v612 = vpop.permute.xlu0 %611
    %v614 = vmul.f32 %v609, %v612
    %v615 = vrot.slane %v501, 6
    %v617 = vmul.f32 %v595, %v615
    %v618 = vadd.f32 %v614, %v617
    %s619 = scalar_lea.vmem [#allocation7], 4
    %v620 = vld [vmem:[%s619] sm:$0x3]
    %v622 = vrot.slane %v620, 4
    %623 = vrot.lane.b32.xlu0 %v622, 32
    %v624 = vpop.permute.xlu0 %623
    %v626 = vmul.f32 %v618, %v624
    %v628 = vrot.slane %v618, 4
    %629 = vrot.lane.b32.xlu0 %v628, 96
    %v630 = vpop.permute.xlu0 %629
    %v631 = vsel %vm193, %v630, 0
    %633 = vmatprep.subr.mxu0 0.0
    %634 = vmatpush1.msra.mxu0 0.0
    %635 = vmatprep.subr.mxu0 0.0
    %636 = vmatpush1.msra.mxu0 0.0
    %637 = vmatprep.subr.mxu0 0.0
    %638 = vmatpush1.msra.mxu0 0.0
    %639 = vmatprep.subr.mxu0 0.0
    %640 = vmatpush1.msra.mxu0 0.0
    %641 = vmatprep.subr.mxu0 0.0
    %642 = vmatpush1.msra.mxu0 0.0
    %643 = vmatprep.subr.mxu0 0.0
    %644 = vmatpush1.msra.mxu0 0.0
    %645 = vmatprep.subr.mxu0 0.0
    %646 = vmatpush1.msra.mxu0 0.0
    %647 = vmatprep.subr.mxu0 0.0
    %648 = vmatpush1.msra.mxu0 0.0
    %649 = vmatprep.subr.mxu0 0.0
    %650 = vmatpush1.msra.mxu0 0.0
    %651 = vmatprep.subr.mxu0 0.0
    %652 = vmatpush1.msra.mxu0 0.0
    %653 = vmatprep.subr.mxu0 0.0
    %654 = vmatpush1.msra.mxu0 0.0
    %655 = vmatprep.subr.mxu0 0.0
    %656 = vmatpush1.msra.mxu0 0.0
    %657 = vmatprep.subr.mxu0 0.0
    %658 = vmatpush1.msra.mxu0 %v278
    %659 = vmatprep.subr.mxu0 0.0
    %660 = vmatpush1.msra.mxu0 %v277
    %661 = vmatprep.subr.mxu0 0.0
    %662 = vmatpush1.msra.mxu0 %v276
    %663 = vmatprep.subr.mxu0 0.0
    %664 = vmatpush1.msra.mxu0 %v275
    %665 = vmatprep.subr.mxu0 0.0
    %666 = vmatpush2.msra.mxu0 0.0
    %667 = vmatprep.subr.mxu0 0.0
    %668 = vmatpush2.msra.mxu0 0.0
    %669 = vmatprep.subr.mxu0 0.0
    %670 = vmatpush2.msra.mxu0 0.0
    %671 = vmatprep.subr.mxu0 0.0
    %672 = vmatpush2.msra.mxu0 0.0
    %673 = vmatprep.subr.mxu0 0.0
    %674 = vmatpush2.msra.mxu0 0.0
    %675 = vmatprep.subr.mxu0 0.0
    %676 = vmatpush2.msra.mxu0 0.0
    %677 = vmatprep.subr.mxu0 0.0
    %678 = vmatpush2.msra.mxu0 0.0
    %679 = vmatprep.subr.mxu0 0.0
    %680 = vmatpush2.msra.mxu0 0.0
    %681 = vmatprep.subr.mxu0 0.0
    %682 = vmatpush2.msra.mxu0 0.0
    %683 = vmatprep.subr.mxu0 0.0
    %684 = vmatpush2.msra.mxu0 0.0
    %685 = vmatprep.subr.mxu0 0.0
    %686 = vmatpush2.msra.mxu0 0.0
    %687 = vmatprep.subr.mxu0 0.0
    %688 = vmatpush2.msra.mxu0 0.0
    %689 = vmatprep.subr.mxu0 0.0
    %690 = vmatpush2.msra.mxu0 0.0
    %691 = vmatprep.subr.mxu0 0.0
    %692 = vmatpush2.msra.mxu0 0.0
    %693 = vmatprep.subr.mxu0 0.0
    %694 = vmatpush2.msra.mxu0 0.0
    %695 = vmatprep.subr.mxu0 0.0
    %696 = vmatpush2.msra.mxu0 0.0
    %697 = vmatprep.mubr.f32.mxu0 0.0
    %698 = vmatmul.mubr.f32.gmra.mxu0 %v631
    %v699 = vpop.f32.mrf.mxu0
    %v700 = vadd.f32 0.0, %v699
    %v701 = vpop.f32.mrf.mxu0
    %702 = vdwg.mxu0
    %v704 = vrot.slane %v700, 2
    %v706 = vadd.f32 %v267, %v704
    %v707 = vxor.u32 %v706, 2147483648
    %v708 = vmul.f32 %v707, 1.442695
    %v709 = vpow.pop %v708
    %v710 = vadd.f32 %v709, 1.0
    %v711 = vrcp.pop %v710
    %v712 = vmul.f32 1.0, %v711
    %v713 = vadd.f32 %v700, %v366
    %v715 = vrot.slane %v713, 2
    %716 = vrot.lane.b32.xlu0 %v715, 64
    %v717 = vpop.permute.xlu0 %716
    %v719 = vmul.f32 %v712, %v717
    %721 = vrot.lane.b32.xlu0 %v719, 64
    %v722 = vpop.permute.xlu0 %721
    %v724 = vadd.f32 %v267, %v722
    %v725 = vtanh.pop %v724
    %v726 = vsub.f32 1.0, %v712
    %728 = vrot.lane.b32.xlu0 %v725, 96
    %v729 = vpop.permute.xlu0 %728
    %v731 = vmul.f32 %v726, %v729
    %v732 = vrot.slane %v618, 6
    %v734 = vmul.f32 %v712, %v732
    %v735 = vadd.f32 %v731, %v734
    %s736 = scalar_lea.vmem [#allocation7], 6
    %v737 = vld [vmem:[%s736] sm:$0x3]
    %v739 = vrot.slane %v737, 2
    %740 = vrot.lane.b32.xlu0 %v739, 32
    %v741 = vpop.permute.xlu0 %740
    %v743 = vmul.f32 %v735, %v741
    %v745 = vrot.slane %v735, 6
    %746 = vrot.lane.b32.xlu0 %v745, 96
    %v747 = vpop.permute.xlu0 %746
    %v748 = vsel %vm193, %v747, 0
    %750 = vmatprep.subr.mxu0 0.0
    %751 = vmatpush1.msra.mxu0 0.0
    %752 = vmatprep.subr.mxu0 0.0
    %753 = vmatpush1.msra.mxu0 0.0
    %754 = vmatprep.subr.mxu0 0.0
    %755 = vmatpush1.msra.mxu0 0.0
    %756 = vmatprep.subr.mxu0 0.0
    %757 = vmatpush1.msra.mxu0 0.0
    %758 = vmatprep.subr.mxu0 0.0
    %759 = vmatpush1.msra.mxu0 0.0
    %760 = vmatprep.subr.mxu0 0.0
    %761 = vmatpush1.msra.mxu0 0.0
    %762 = vmatprep.subr.mxu0 0.0
    %763 = vmatpush1.msra.mxu0 0.0
    %764 = vmatprep.subr.mxu0 0.0
    %765 = vmatpush1.msra.mxu0 0.0
    %766 = vmatprep.subr.mxu0 0.0
    %767 = vmatpush1.msra.mxu0 0.0
    %768 = vmatprep.subr.mxu0 0.0
    %769 = vmatpush1.msra.mxu0 0.0
    %770 = vmatprep.subr.mxu0 0.0
    %771 = vmatpush1.msra.mxu0 0.0
    %772 = vmatprep.subr.mxu0 0.0
    %773 = vmatpush1.msra.mxu0 0.0
    %774 = vmatprep.subr.mxu0 0.0
    %775 = vmatpush1.msra.mxu0 %v278
    %776 = vmatprep.subr.mxu0 0.0
    %777 = vmatpush1.msra.mxu0 %v277
    %778 = vmatprep.subr.mxu0 0.0
    %779 = vmatpush1.msra.mxu0 %v276
    %780 = vmatprep.subr.mxu0 0.0
    %781 = vmatpush1.msra.mxu0 %v275
    %782 = vmatprep.subr.mxu0 0.0
    %783 = vmatpush2.msra.mxu0 0.0
    %784 = vmatprep.subr.mxu0 0.0
    %785 = vmatpush2.msra.mxu0 0.0
    %786 = vmatprep.subr.mxu0 0.0
    %787 = vmatpush2.msra.mxu0 0.0
    %788 = vmatprep.subr.mxu0 0.0
    %789 = vmatpush2.msra.mxu0 0.0
    %790 = vmatprep.subr.mxu0 0.0
    %791 = vmatpush2.msra.mxu0 0.0
    %792 = vmatprep.subr.mxu0 0.0
    %793 = vmatpush2.msra.mxu0 0.0
    %794 = vmatprep.subr.mxu0 0.0
    %795 = vmatpush2.msra.mxu0 0.0
    %796 = vmatprep.subr.mxu0 0.0
    %797 = vmatpush2.msra.mxu0 0.0
    %798 = vmatprep.subr.mxu0 0.0
    %799 = vmatpush2.msra.mxu0 0.0
    %800 = vmatprep.subr.mxu0 0.0
    %801 = vmatpush2.msra.mxu0 0.0
    %802 = vmatprep.subr.mxu0 0.0
    %803 = vmatpush2.msra.mxu0 0.0
    %804 = vmatprep.subr.mxu0 0.0
    %805 = vmatpush2.msra.mxu0 0.0
    %806 = vmatprep.subr.mxu0 0.0
    %807 = vmatpush2.msra.mxu0 0.0
    %808 = vmatprep.subr.mxu0 0.0
    %809 = vmatpush2.msra.mxu0 0.0
    %810 = vmatprep.subr.mxu0 0.0
    %811 = vmatpush2.msra.mxu0 0.0
    %812 = vmatprep.subr.mxu0 0.0
    %813 = vmatpush2.msra.mxu0 0.0
    %814 = vmatprep.mubr.f32.mxu0 0.0
    %815 = vmatmul.mubr.f32.gmra.mxu0 %v748
    %v816 = vpop.f32.mrf.mxu0
    %v817 = vadd.f32 0.0, %v816
    %v818 = vpop.f32.mrf.mxu0
    %819 = vdwg.mxu0
    %v820 = vadd.f32 %v272, %v817
    %v821 = vxor.u32 %v820, 2147483648
    %v822 = vmul.f32 %v821, 1.442695
    %v823 = vpow.pop %v822
    %v824 = vadd.f32 %v823, 1.0
    %v825 = vrcp.pop %v824
    %v826 = vmul.f32 1.0, %v825
    %v827 = vadd.f32 %v817, %v366
    %829 = vrot.lane.b32.xlu0 %v827, 64
    %v830 = vpop.permute.xlu0 %829
    %v832 = vmul.f32 %v826, %v830
    %834 = vrot.lane.b32.xlu0 %v832, 64
    %v835 = vpop.permute.xlu0 %834
    %v837 = vadd.f32 %v272, %v835
    %v838 = vtanh.pop %v837
    %v839 = vsub.f32 1.0, %v826
    %841 = vrot.lane.b32.xlu0 %v838, 96
    %v842 = vpop.permute.xlu0 %841
    %v844 = vmul.f32 %v839, %v842
    %v846 = vmul.f32 %v826, %v745
    %v847 = vadd.f32 %v844, %v846
    %s848 = scalar_lea.vmem [#allocation7], 8
    %v849 = vld [vmem:[%s848] sm:$0x3]
    %851 = vrot.lane.b32.xlu0 %v849, 32
    %v852 = vpop.permute.xlu0 %851
    %v854 = vmul.f32 %v847, %v852
    %856 = vrot.lane.b32.xlu0 %v847, 96
    %v857 = vpop.permute.xlu0 %856
    %v858 = vsel %vm193, %v857, 0
    %860 = vmatprep.subr.mxu0 0.0
    %861 = vmatpush1.msra.mxu0 0.0
    %862 = vmatprep.subr.mxu0 0.0
    %863 = vmatpush1.msra.mxu0 0.0
    %864 = vmatprep.subr.mxu0 0.0
    %865 = vmatpush1.msra.mxu0 0.0
    %866 = vmatprep.subr.mxu0 0.0
    %867 = vmatpush1.msra.mxu0 0.0
    %868 = vmatprep.subr.mxu0 0.0
    %869 = vmatpush1.msra.mxu0 0.0
    %870 = vmatprep.subr.mxu0 0.0
    %871 = vmatpush1.msra.mxu0 0.0
    %872 = vmatprep.subr.mxu0 0.0
    %873 = vmatpush1.msra.mxu0 0.0
    %874 = vmatprep.subr.mxu0 0.0
    %875 = vmatpush1.msra.mxu0 0.0
    %876 = vmatprep.subr.mxu0 0.0
    %877 = vmatpush1.msra.mxu0 0.0
    %878 = vmatprep.subr.mxu0 0.0
    %879 = vmatpush1.msra.mxu0 0.0
    %880 = vmatprep.subr.mxu0 0.0
    %881 = vmatpush1.msra.mxu0 0.0
    %882 = vmatprep.subr.mxu0 0.0
    %883 = vmatpush1.msra.mxu0 0.0
    %884 = vmatprep.subr.mxu0 0.0
    %885 = vmatpush1.msra.mxu0 %v278
    %886 = vmatprep.subr.mxu0 0.0
    %887 = vmatpush1.msra.mxu0 %v277
    %888 = vmatprep.subr.mxu0 0.0
    %889 = vmatpush1.msra.mxu0 %v276
    %890 = vmatprep.subr.mxu0 0.0
    %891 = vmatpush1.msra.mxu0 %v275
    %892 = vmatprep.subr.mxu0 0.0
    %893 = vmatpush2.msra.mxu0 0.0
    %894 = vmatprep.subr.mxu0 0.0
    %895 = vmatpush2.msra.mxu0 0.0
    %896 = vmatprep.subr.mxu0 0.0
    %897 = vmatpush2.msra.mxu0 0.0
    %898 = vmatprep.subr.mxu0 0.0
    %899 = vmatpush2.msra.mxu0 0.0
    %900 = vmatprep.subr.mxu0 0.0
    %901 = vmatpush2.msra.mxu0 0.0
    %902 = vmatprep.subr.mxu0 0.0
    %903 = vmatpush2.msra.mxu0 0.0
    %904 = vmatprep.subr.mxu0 0.0
    %905 = vmatpush2.msra.mxu0 0.0
    %906 = vmatprep.subr.mxu0 0.0
    %907 = vmatpush2.msra.mxu0 0.0
    %908 = vmatprep.subr.mxu0 0.0
    %909 = vmatpush2.msra.mxu0 0.0
    %910 = vmatprep.subr.mxu0 0.0
    %911 = vmatpush2.msra.mxu0 0.0
    %912 = vmatprep.subr.mxu0 0.0
    %913 = vmatpush2.msra.mxu0 0.0
    %914 = vmatprep.subr.mxu0 0.0
    %915 = vmatpush2.msra.mxu0 0.0
    %916 = vmatprep.subr.mxu0 0.0
    %917 = vmatpush2.msra.mxu0 0.0
    %918 = vmatprep.subr.mxu0 0.0
    %919 = vmatpush2.msra.mxu0 0.0
    %920 = vmatprep.subr.mxu0 0.0
    %921 = vmatpush2.msra.mxu0 0.0
    %922 = vmatprep.subr.mxu0 0.0
    %923 = vmatpush2.msra.mxu0 0.0
    %924 = vmatprep.mubr.f32.mxu0 0.0
    %925 = vmatmul.mubr.f32.gmra.mxu0 %v858
    %v926 = vpop.f32.mrf.mxu0
    %v927 = vadd.f32 0.0, %v926
    %v928 = vpop.f32.mrf.mxu0
    %929 = vdwg.mxu0
    %v931 = vrot.slane %v927, 6
    %v933 = vadd.f32 %v272, %v931
    %v934 = vxor.u32 %v933, 2147483648
    %v935 = vmul.f32 %v934, 1.442695
    %v936 = vpow.pop %v935
    %v937 = vadd.f32 %v936, 1.0
    %v938 = vrcp.pop %v937
    %v939 = vmul.f32 1.0, %v938
    %v940 = vadd.f32 %v927, %v366
    %v942 = vrot.slane %v940, 6
    %943 = vrot.lane.b32.xlu0 %v942, 64
    %v944 = vpop.permute.xlu0 %943
    %v946 = vmul.f32 %v939, %v944
    %948 = vrot.lane.b32.xlu0 %v946, 64
    %v949 = vpop.permute.xlu0 %948
    %v951 = vadd.f32 %v272, %v949
    %v952 = vtanh.pop %v951
    %v953 = vsub.f32 1.0, %v939
    %955 = vrot.lane.b32.xlu0 %v952, 96
    %v956 = vpop.permute.xlu0 %955
    %v958 = vmul.f32 %v953, %v956
    %v959 = vrot.slane %v847, 6
    %v961 = vmul.f32 %v939, %v959
    %v962 = vadd.f32 %v958, %v961
    %s963 = scalar_lea.vmem [#allocation7], 10
    %v964 = vld [vmem:[%s963] sm:$0x3]
    %v966 = vrot.slane %v964, 6
    %967 = vrot.lane.b32.xlu0 %v966, 32
    %v968 = vpop.permute.xlu0 %967
    %v970 = vmul.f32 %v962, %v968
    %v972 = vrot.slane %v509, 1
    %v975 = vrot.slane %v626, 2
    %v978 = vrot.slane %v743, 3
    %v981 = vrot.slane %v854, 4
    %v984 = vrot.slane %v970, 5
    %vm986 = vcmask 1040384
    %v987 = vsel %vm986, %v393, %v972
    %vm988 = vcmask 1041408
    %v989 = vsel %vm988, %v987, %v975
    %vm990 = vcmask 1042432
    %v991 = vsel %vm990, %v989, %v978
    %vm992 = vcmask 1043456
    %v993 = vsel %vm992, %v991, %v981
    %vm994 = vcmask 1044480
    %v995 = vsel %vm994, %v993, %v984
    %vm996 = vcmask 1045504
    %v997 = vsel %vm996, %v995, 0.0
    %v999 = vrot.slane %v393, 1
    %v1001 = vrot.slane %v509, 2
    %v1003 = vrot.slane %v626, 3
    %v1005 = vrot.slane %v743, 4
    %v1007 = vrot.slane %v854, 5
    %v1009 = vrot.slane %v970, 6
    %v1011 = vsel %vm986, %v999, %v1001
    %v1012 = vsel %vm988, %v1011, %v1003
    %v1013 = vsel %vm990, %v1012, %v1005
    %v1014 = vsel %vm992, %v1013, %v1007
    %v1015 = vsel %vm994, %v1014, %v1009
    %v1016 = vsel %vm996, %v1015, 0.0
    %v1017 = vld [vmem:[#allocation2] sm:$0xff]
    %v1018 = vld [vmem:[#allocation2 + $0x8] sm:$0x3]
    %v1019 = vld [vmem:[%s11] sm:$0xff]
    %v1020 = vld [vmem:[%s11 + $0x8] sm:$0xff]
    %v1021 = vld [vmem:[%s11 + $0x10] sm:$0xff]
    %v1022 = vld [vmem:[%s11 + $0x18] sm:$0xff]
    %v1023 = vld [vmem:[%s13] sm:$0x1]
    %v1025 = vlaneseq
    %v1026 = vshrl.u32 %v1025, 7
    %v1027 = vsub.s32 0, %v1026
    %v1028 = vrot.slane %v1023, %v1027
    %v1031 = vsel %vm193, %v1017, 0
    %v1034 = vsel %vm193, %v1018, 0
    %1036 = vmatprep.subr.mxu0 0.0
    %1037 = vmatpush1.msra.mxu0 0.0
    %1038 = vmatprep.subr.mxu0 0.0
    %1039 = vmatpush1.msra.mxu0 0.0
    %1040 = vmatprep.subr.mxu0 0.0
    %1041 = vmatpush1.msra.mxu0 0.0
    %1042 = vmatprep.subr.mxu0 0.0
    %1043 = vmatpush1.msra.mxu0 0.0
    %1044 = vmatprep.subr.mxu0 0.0
    %1045 = vmatpush1.msra.mxu0 0.0
    %1046 = vmatprep.subr.mxu0 0.0
    %1047 = vmatpush1.msra.mxu0 0.0
    %1048 = vmatprep.subr.mxu0 0.0
    %1049 = vmatpush1.msra.mxu0 0.0
    %1050 = vmatprep.subr.mxu0 0.0
    %1051 = vmatpush1.msra.mxu0 0.0
    %1052 = vmatprep.subr.mxu0 0.0
    %1053 = vmatpush1.msra.mxu0 0.0
    %1054 = vmatprep.subr.mxu0 0.0
    %1055 = vmatpush1.msra.mxu0 0.0
    %1056 = vmatprep.subr.mxu0 0.0
    %1057 = vmatpush1.msra.mxu0 0.0
    %1058 = vmatprep.subr.mxu0 0.0
    %1059 = vmatpush1.msra.mxu0 0.0
    %1060 = vmatprep.subr.mxu0 0.0
    %1061 = vmatpush1.msra.mxu0 %v1022
    %1062 = vmatprep.subr.mxu0 0.0
    %1063 = vmatpush1.msra.mxu0 %v1021
    %1064 = vmatprep.subr.mxu0 0.0
    %1065 = vmatpush1.msra.mxu0 %v1020
    %1066 = vmatprep.subr.mxu0 0.0
    %1067 = vmatpush1.msra.mxu0 %v1019
    %1068 = vmatprep.subr.mxu0 0.0
    %1069 = vmatpush2.msra.mxu0 0.0
    %1070 = vmatprep.subr.mxu0 0.0
    %1071 = vmatpush2.msra.mxu0 0.0
    %1072 = vmatprep.subr.mxu0 0.0
    %1073 = vmatpush2.msra.mxu0 0.0
    %1074 = vmatprep.subr.mxu0 0.0
    %1075 = vmatpush2.msra.mxu0 0.0
    %1076 = vmatprep.subr.mxu0 0.0
    %1077 = vmatpush2.msra.mxu0 0.0
    %1078 = vmatprep.subr.mxu0 0.0
    %1079 = vmatpush2.msra.mxu0 0.0
    %1080 = vmatprep.subr.mxu0 0.0
    %1081 = vmatpush2.msra.mxu0 0.0
    %1082 = vmatprep.subr.mxu0 0.0
    %1083 = vmatpush2.msra.mxu0 0.0
    %1084 = vmatprep.subr.mxu0 0.0
    %1085 = vmatpush2.msra.mxu0 0.0
    %1086 = vmatprep.subr.mxu0 0.0
    %1087 = vmatpush2.msra.mxu0 0.0
    %1088 = vmatprep.subr.mxu0 0.0
    %1089 = vmatpush2.msra.mxu0 0.0
    %1090 = vmatprep.subr.mxu0 0.0
    %1091 = vmatpush2.msra.mxu0 0.0
    %1092 = vmatprep.subr.mxu0 0.0
    %1093 = vmatpush2.msra.mxu0 0.0
    %1094 = vmatprep.subr.mxu0 0.0
    %1095 = vmatpush2.msra.mxu0 0.0
    %1096 = vmatprep.subr.mxu0 0.0
    %1097 = vmatpush2.msra.mxu0 0.0
    %1098 = vmatprep.subr.mxu0 0.0
    %1099 = vmatpush2.msra.mxu0 0.0
    %1100 = vmatprep.mubr.f32.mxu0 0.0
    %1101 = vmatmul.mubr.f32.gmra.mxu0 %v1031
    %v1102 = vpop.f32.mrf.mxu0
    %v1103 = vadd.f32 %v1028, %v1102
    %v1104 = vpop.f32.mrf.mxu0
    %1105 = vmatprep.mubr.f32.mxu0 0.0
    %1106 = vmatmul.mubr.f32.gmra.mxu0 %v1034
    %v1107 = vpop.f32.mrf.mxu0
    %v1108 = vadd.f32 %v1028, %v1107
    %v1109 = vpop.f32.mrf.mxu0
    %1110 = vdwg.mxu0
    %v1111 = vld [vmem:[#allocation14] sm:$0xff]
    %v1112 = vld [vmem:[#allocation14 + $0x8] sm:$0xff]
    %v1113 = vld [vmem:[#allocation14 + $0x10] sm:$0xff]
    %v1114 = vld [vmem:[#allocation14 + $0x18] sm:$0xff]
    %v1115 = vld [vmem:[%s16] sm:$0x1]
    %v1117 = vlaneseq
    %v1118 = vshrl.u32 %v1117, 7
    %v1119 = vsub.s32 0, %v1118
    %v1120 = vrot.slane %v1115, %v1119
    %1122 = vmatprep.subr.mxu0 0.0
    %1123 = vmatpush1.msra.mxu0 0.0
    %1124 = vmatprep.subr.mxu0 0.0
    %1125 = vmatpush1.msra.mxu0 0.0
    %1126 = vmatprep.subr.mxu0 0.0
    %1127 = vmatpush1.msra.mxu0 0.0
    %1128 = vmatprep.subr.mxu0 0.0
    %1129 = vmatpush1.msra.mxu0 0.0
    %1130 = vmatprep.subr.mxu0 0.0
    %1131 = vmatpush1.msra.mxu0 0.0
    %1132 = vmatprep.subr.mxu0 0.0
    %1133 = vmatpush1.msra.mxu0 0.0
    %1134 = vmatprep.subr.mxu0 0.0
    %1135 = vmatpush1.msra.mxu0 0.0
    %1136 = vmatprep.subr.mxu0 0.0
    %1137 = vmatpush1.msra.mxu0 0.0
    %1138 = vmatprep.subr.mxu0 0.0
    %1139 = vmatpush1.msra.mxu0 0.0
    %1140 = vmatprep.subr.mxu0 0.0
    %1141 = vmatpush1.msra.mxu0 0.0
    %1142 = vmatprep.subr.mxu0 0.0
    %1143 = vmatpush1.msra.mxu0 0.0
    %1144 = vmatprep.subr.mxu0 0.0
    %1145 = vmatpush1.msra.mxu0 0.0
    %1146 = vmatprep.subr.mxu0 0.0
    %1147 = vmatpush1.msra.mxu0 %v1114
    %1148 = vmatprep.subr.mxu0 0.0
    %1149 = vmatpush1.msra.mxu0 %v1113
    %1150 = vmatprep.subr.mxu0 0.0
    %1151 = vmatpush1.msra.mxu0 %v1112
    %1152 = vmatprep.subr.mxu0 0.0
    %1153 = vmatpush1.msra.mxu0 %v1111
    %1154 = vmatprep.subr.mxu0 0.0
    %1155 = vmatpush2.msra.mxu0 0.0
    %1156 = vmatprep.subr.mxu0 0.0
    %1157 = vmatpush2.msra.mxu0 0.0
    %1158 = vmatprep.subr.mxu0 0.0
    %1159 = vmatpush2.msra.mxu0 0.0
    %1160 = vmatprep.subr.mxu0 0.0
    %1161 = vmatpush2.msra.mxu0 0.0
    %1162 = vmatprep.subr.mxu0 0.0
    %1163 = vmatpush2.msra.mxu0 0.0
    %1164 = vmatprep.subr.mxu0 0.0
    %1165 = vmatpush2.msra.mxu0 0.0
    %1166 = vmatprep.subr.mxu0 0.0
    %1167 = vmatpush2.msra.mxu0 0.0
    %1168 = vmatprep.subr.mxu0 0.0
    %1169 = vmatpush2.msra.mxu0 0.0
    %1170 = vmatprep.subr.mxu0 0.0
    %1171 = vmatpush2.msra.mxu0 0.0
    %1172 = vmatprep.subr.mxu0 0.0
    %1173 = vmatpush2.msra.mxu0 0.0
    %1174 = vmatprep.subr.mxu0 0.0
    %1175 = vmatpush2.msra.mxu0 0.0
    %1176 = vmatprep.subr.mxu0 0.0
    %1177 = vmatpush2.msra.mxu0 0.0
    %1178 = vmatprep.subr.mxu0 0.0
    %1179 = vmatpush2.msra.mxu0 0.0
    %1180 = vmatprep.subr.mxu0 0.0
    %1181 = vmatpush2.msra.mxu0 0.0
    %1182 = vmatprep.subr.mxu0 0.0
    %1183 = vmatpush2.msra.mxu0 0.0
    %1184 = vmatprep.subr.mxu0 0.0
    %1185 = vmatpush2.msra.mxu0 0.0
    %1186 = vmatprep.mubr.f32.mxu0 0.0
    %1187 = vmatmul.mubr.f32.gmra.mxu0 %v1031
    %v1188 = vpop.f32.mrf.mxu0
    %v1189 = vadd.f32 %v1120, %v1188
    %v1190 = vpop.f32.mrf.mxu0
    %1191 = vmatprep.mubr.f32.mxu0 0.0
    %1192 = vmatmul.mubr.f32.gmra.mxu0 %v1034
    %v1193 = vpop.f32.mrf.mxu0
    %v1194 = vadd.f32 %v1120, %v1193
    %v1195 = vpop.f32.mrf.mxu0
    %1196 = vdwg.mxu0
    %v1197 = vld [vmem:[%s12] sm:$0xff]
    %v1198 = vld [vmem:[%s12 + $0x8] sm:$0xff]
    %v1199 = vld [vmem:[%s12 + $0x10] sm:$0xff]
    %v1200 = vld [vmem:[%s12 + $0x18] sm:$0xff]
    %v1201 = vld [vmem:[#allocation16] sm:$0xff]
    %v1202 = vld [vmem:[#allocation16 + $0x8] sm:$0xff]
    %v1203 = vld [vmem:[#allocation16 + $0x10] sm:$0xff]
    %v1204 = vld [vmem:[#allocation16 + $0x18] sm:$0xff]
    %v1205 = vld [vmem:[%s7] sm:$0xff]
    %v1206 = vld [vmem:[%s7 + $0x8] sm:$0xff]
    %v1207 = vld [vmem:[%s7 + $0x10] sm:$0xff]
    %v1208 = vld [vmem:[%s7 + $0x18] sm:$0xff]
    %v1209 = vld [vmem:[%s8] sm:$0xff]
    %v1210 = vld [vmem:[%s8 + $0x8] sm:$0xff]
    %v1211 = vld [vmem:[%s8 + $0x10] sm:$0xff]
    %v1212 = vld [vmem:[%s8 + $0x18] sm:$0xff]
    %v1213 = vld [vmem:[#allocation11] sm:$0x1]
    %v1215 = vlaneseq
    %v1216 = vshrl.u32 %v1215, 7
    %v1217 = vsub.s32 0, %v1216
    %v1218 = vrot.slane %v1213, %v1217
    %v1220 = vld [vmem:[#allocation13] sm:$0x1]
    %v1222 = vlaneseq
    %v1223 = vshrl.u32 %v1222, 7
    %v1224 = vsub.s32 0, %v1223
    %v1225 = vrot.slane %v1220, %v1224
    %1226 = vmatprep.subr.mxu0 0.0
    %1227 = vmatpush1.msra.mxu0 0.0
    %1228 = vmatprep.subr.mxu0 0.0
    %1229 = vmatpush1.msra.mxu0 0.0
    %1230 = vmatprep.subr.mxu0 0.0
    %1231 = vmatpush1.msra.mxu0 0.0
    %1232 = vmatprep.subr.mxu0 0.0
    %1233 = vmatpush1.msra.mxu0 0.0
    %1234 = vmatprep.subr.mxu0 0.0
    %1235 = vmatpush1.msra.mxu0 0.0
    %1236 = vmatprep.subr.mxu0 0.0
    %1237 = vmatpush1.msra.mxu0 0.0
    %1238 = vmatprep.subr.mxu0 0.0
    %1239 = vmatpush1.msra.mxu0 0.0
    %1240 = vmatprep.subr.mxu0 0.0
    %1241 = vmatpush1.msra.mxu0 0.0
    %1242 = vmatprep.subr.mxu0 0.0
    %1243 = vmatpush1.msra.mxu0 0.0
    %1244 = vmatprep.subr.mxu0 0.0
    %1245 = vmatpush1.msra.mxu0 0.0
    %1246 = vmatprep.subr.mxu0 0.0
    %1247 = vmatpush1.msra.mxu0 0.0
    %1248 = vmatprep.subr.mxu0 0.0
    %1249 = vmatpush1.msra.mxu0 0.0
    %1250 = vmatprep.subr.mxu0 0.0
    %1251 = vmatpush1.msra.mxu0 %v1200
    %1252 = vmatprep.subr.mxu0 0.0
    %1253 = vmatpush1.msra.mxu0 %v1199
    %1254 = vmatprep.subr.mxu0 0.0
    %1255 = vmatpush1.msra.mxu0 %v1198
    %1256 = vmatprep.subr.mxu0 0.0
    %1257 = vmatpush1.msra.mxu0 %v1197
    %1258 = vmatprep.subr.mxu0 0.0
    %1259 = vmatpush2.msra.mxu0 0.0
    %1260 = vmatprep.subr.mxu0 0.0
    %1261 = vmatpush2.msra.mxu0 0.0
    %1262 = vmatprep.subr.mxu0 0.0
    %1263 = vmatpush2.msra.mxu0 0.0
    %1264 = vmatprep.subr.mxu0 0.0
    %1265 = vmatpush2.msra.mxu0 0.0
    %1266 = vmatprep.subr.mxu0 0.0
    %1267 = vmatpush2.msra.mxu0 0.0
    %1268 = vmatprep.subr.mxu0 0.0
    %1269 = vmatpush2.msra.mxu0 0.0
    %1270 = vmatprep.subr.mxu0 0.0
    %1271 = vmatpush2.msra.mxu0 0.0
    %1272 = vmatprep.subr.mxu0 0.0
    %1273 = vmatpush2.msra.mxu0 0.0
    %1274 = vmatprep.subr.mxu0 0.0
    %1275 = vmatpush2.msra.mxu0 0.0
    %1276 = vmatprep.subr.mxu0 0.0
    %1277 = vmatpush2.msra.mxu0 0.0
    %1278 = vmatprep.subr.mxu0 0.0
    %1279 = vmatpush2.msra.mxu0 0.0
    %1280 = vmatprep.subr.mxu0 0.0
    %1281 = vmatpush2.msra.mxu0 0.0
    %1282 = vmatprep.subr.mxu0 0.0
    %1283 = vmatpush2.msra.mxu0 0.0
    %1284 = vmatprep.subr.mxu0 0.0
    %1285 = vmatpush2.msra.mxu0 0.0
    %1286 = vmatprep.subr.mxu0 0.0
    %1287 = vmatpush2.msra.mxu0 0.0
    %1288 = vmatprep.subr.mxu0 0.0
    %1289 = vmatpush2.msra.mxu0 0.0
    %1290 = vmatprep.mubr.f32.mxu0 0.0
    %1291 = vmatmul.mubr.f32.gmra.mxu0 %v286
    %v1292 = vpop.f32.mrf.mxu0
    %v1293 = vadd.f32 0.0, %v1292
    %v1294 = vpop.f32.mrf.mxu0
    %1295 = vdwg.mxu0
    %v1296 = vadd.f32 %v1103, %v1293
    %vm1297 = vcmask 58368
    %v1298 = vsel %vm1297, %v1296, -inf
    %1299 = vmax.xlane.f32.xlu0 %v1298
    %v1300 = vpop.xlane.xlu0 %1299
    %v1301 = vsub.f32 %v1296, %v1300
    %v1302 = vmul.f32 %v1301, 1.442695
    %v1303 = vpow.pop %v1302
    %v1304 = vsel %vm1297, %v1303, 0.0
    %1305 = vadd.xlane.f32.xlu0 %v1304
    %v1306 = vpop.xlane.xlu0 %1305
    %v1307 = vrcp.pop %v1306
    %v1308 = vmul.f32 %v1303, %v1307
    %1309 = vst.msk [vmem:[#allocation18] sm:$0x3] %vm1297, %v1308
    %1311 = vrot.lane.b32.xlu0 %v997, 96
    %v1312 = vpop.permute.xlu0 %1311
    %vm1314 = vcmask 64512
    %v1316 = vsel %vm1314, %v1308, 0
    %1318 = vmatprep.subr.mxu0 0.0
    %1319 = vmatpush1.msra.mxu0 0.0
    %1320 = vmatprep.subr.mxu0 0.0
    %1321 = vmatpush1.msra.mxu0 0.0
    %1322 = vmatprep.subr.mxu0 0.0
    %1323 = vmatpush1.msra.mxu0 0.0
    %1324 = vmatprep.subr.mxu0 0.0
    %1325 = vmatpush1.msra.mxu0 0.0
    %1326 = vmatprep.subr.mxu0 0.0
    %1327 = vmatpush1.msra.mxu0 0.0
    %1328 = vmatprep.subr.mxu0 0.0
    %1329 = vmatpush1.msra.mxu0 0.0
    %1330 = vmatprep.subr.mxu0 0.0
    %1331 = vmatpush1.msra.mxu0 0.0
    %1332 = vmatprep.subr.mxu0 0.0
    %1333 = vmatpush1.msra.mxu0 0.0
    %1334 = vmatprep.subr.mxu0 0.0
    %1335 = vmatpush1.msra.mxu0 0.0
    %1336 = vmatprep.subr.mxu0 0.0
    %1337 = vmatpush1.msra.mxu0 0.0
    %1338 = vmatprep.subr.mxu0 0.0
    %1339 = vmatpush1.msra.mxu0 0.0
    %1340 = vmatprep.subr.mxu0 0.0
    %1341 = vmatpush1.msra.mxu0 0.0
    %1342 = vmatprep.subr.mxu0 0.0
    %1343 = vmatpush1.msra.mxu0 0.0
    %1344 = vmatprep.subr.mxu0 0.0
    %1345 = vmatpush1.msra.mxu0 0.0
    %1346 = vmatprep.subr.mxu0 0.0
    %1347 = vmatpush1.msra.mxu0 0.0
    %1348 = vmatprep.subr.mxu0 0.0
    %1349 = vmatpush1.msra.mxu0 %v1312
    %1350 = vmatprep.subr.mxu0 0.0
    %1351 = vmatpush2.msra.mxu0 0.0
    %1352 = vmatprep.subr.mxu0 0.0
    %1353 = vmatpush2.msra.mxu0 0.0
    %1354 = vmatprep.subr.mxu0 0.0
    %1355 = vmatpush2.msra.mxu0 0.0
    %1356 = vmatprep.subr.mxu0 0.0
    %1357 = vmatpush2.msra.mxu0 0.0
    %1358 = vmatprep.subr.mxu0 0.0
    %1359 = vmatpush2.msra.mxu0 0.0
    %1360 = vmatprep.subr.mxu0 0.0
    %1361 = vmatpush2.msra.mxu0 0.0
    %1362 = vmatprep.subr.mxu0 0.0
    %1363 = vmatpush2.msra.mxu0 0.0
    %1364 = vmatprep.subr.mxu0 0.0
    %1365 = vmatpush2.msra.mxu0 0.0
    %1366 = vmatprep.subr.mxu0 0.0
    %1367 = vmatpush2.msra.mxu0 0.0
    %1368 = vmatprep.subr.mxu0 0.0
    %1369 = vmatpush2.msra.mxu0 0.0
    %1370 = vmatprep.subr.mxu0 0.0
    %1371 = vmatpush2.msra.mxu0 0.0
    %1372 = vmatprep.subr.mxu0 0.0
    %1373 = vmatpush2.msra.mxu0 0.0
    %1374 = vmatprep.subr.mxu0 0.0
    %1375 = vmatpush2.msra.mxu0 0.0
    %1376 = vmatprep.subr.mxu0 0.0
    %1377 = vmatpush2.msra.mxu0 0.0
    %1378 = vmatprep.subr.mxu0 0.0
    %1379 = vmatpush2.msra.mxu0 0.0
    %1380 = vmatprep.subr.mxu0 0.0
    %1381 = vmatpush2.msra.mxu0 0.0
    %1382 = vmatprep.mubr.f32.mxu0 0.0
    %1383 = vmatmul.mubr.f32.gmra.mxu0 %v1316
    %v1384 = vpop.f32.mrf.mxu0
    %v1385 = vadd.f32 0.0, %v1384
    %v1386 = vpop.f32.mrf.mxu0
    %1387 = vdwg.mxu0
    %v1388 = vrot.slane %v1308, 1
    %1390 = vrot.lane.b32.xlu0 %v1016, 96
    %v1391 = vpop.permute.xlu0 %1390
    %v1393 = vsel %vm1314, %v1388, 0
    %1395 = vmatprep.subr.mxu0 0.0
    %1396 = vmatpush1.msra.mxu0 0.0
    %1397 = vmatprep.subr.mxu0 0.0
    %1398 = vmatpush1.msra.mxu0 0.0
    %1399 = vmatprep.subr.mxu0 0.0
    %1400 = vmatpush1.msra.mxu0 0.0
    %1401 = vmatprep.subr.mxu0 0.0
    %1402 = vmatpush1.msra.mxu0 0.0
    %1403 = vmatprep.subr.mxu0 0.0
    %1404 = vmatpush1.msra.mxu0 0.0
    %1405 = vmatprep.subr.mxu0 0.0
    %1406 = vmatpush1.msra.mxu0 0.0
    %1407 = vmatprep.subr.mxu0 0.0
    %1408 = vmatpush1.msra.mxu0 0.0
    %1409 = vmatprep.subr.mxu0 0.0
    %1410 = vmatpush1.msra.mxu0 0.0
    %1411 = vmatprep.subr.mxu0 0.0
    %1412 = vmatpush1.msra.mxu0 0.0
    %1413 = vmatprep.subr.mxu0 0.0
    %1414 = vmatpush1.msra.mxu0 0.0
    %1415 = vmatprep.subr.mxu0 0.0
    %1416 = vmatpush1.msra.mxu0 0.0
    %1417 = vmatprep.subr.mxu0 0.0
    %1418 = vmatpush1.msra.mxu0 0.0
    %1419 = vmatprep.subr.mxu0 0.0
    %1420 = vmatpush1.msra.mxu0 0.0
    %1421 = vmatprep.subr.mxu0 0.0
    %1422 = vmatpush1.msra.mxu0 0.0
    %1423 = vmatprep.subr.mxu0 0.0
    %1424 = vmatpush1.msra.mxu0 0.0
    %1425 = vmatprep.subr.mxu0 0.0
    %1426 = vmatpush1.msra.mxu0 %v1391
    %1427 = vmatprep.subr.mxu0 0.0
    %1428 = vmatpush2.msra.mxu0 0.0
    %1429 = vmatprep.subr.mxu0 0.0
    %1430 = vmatpush2.msra.mxu0 0.0
    %1431 = vmatprep.subr.mxu0 0.0
    %1432 = vmatpush2.msra.mxu0 0.0
    %1433 = vmatprep.subr.mxu0 0.0
    %1434 = vmatpush2.msra.mxu0 0.0
    %1435 = vmatprep.subr.mxu0 0.0
    %1436 = vmatpush2.msra.mxu0 0.0
    %1437 = vmatprep.subr.mxu0 0.0
    %1438 = vmatpush2.msra.mxu0 0.0
    %1439 = vmatprep.subr.mxu0 0.0
    %1440 = vmatpush2.msra.mxu0 0.0
    %1441 = vmatprep.subr.mxu0 0.0
    %1442 = vmatpush2.msra.mxu0 0.0
    %1443 = vmatprep.subr.mxu0 0.0
    %1444 = vmatpush2.msra.mxu0 0.0
    %1445 = vmatprep.subr.mxu0 0.0
    %1446 = vmatpush2.msra.mxu0 0.0
    %1447 = vmatprep.subr.mxu0 0.0
    %1448 = vmatpush2.msra.mxu0 0.0
    %1449 = vmatprep.subr.mxu0 0.0
    %1450 = vmatpush2.msra.mxu0 0.0
    %1451 = vmatprep.subr.mxu0 0.0
    %1452 = vmatpush2.msra.mxu0 0.0
    %1453 = vmatprep.subr.mxu0 0.0
    %1454 = vmatpush2.msra.mxu0 0.0
    %1455 = vmatprep.subr.mxu0 0.0
    %1456 = vmatpush2.msra.mxu0 0.0
    %1457 = vmatprep.subr.mxu0 0.0
    %1458 = vmatpush2.msra.mxu0 0.0
    %1459 = vmatprep.mubr.f32.mxu0 0.0
    %1460 = vmatmul.mubr.f32.gmra.mxu0 %v1393
    %v1461 = vpop.f32.mrf.mxu0
    %v1462 = vadd.f32 0.0, %v1461
    %v1463 = vpop.f32.mrf.mxu0
    %1464 = vdwg.mxu0
    %v1466 = vrot.slane %v1462, 7
    %v1468 = vsel %vm986, %v1385, %v1466
    %v1470 = vsel %vm193, %v1468, 0
    %1472 = vmatprep.subr.mxu0 0.0
    %1473 = vmatpush1.msra.mxu0 0.0
    %1474 = vmatprep.subr.mxu0 0.0
    %1475 = vmatpush1.msra.mxu0 0.0
    %1476 = vmatprep.subr.mxu0 0.0
    %1477 = vmatpush1.msra.mxu0 0.0
    %1478 = vmatprep.subr.mxu0 0.0
    %1479 = vmatpush1.msra.mxu0 0.0
    %1480 = vmatprep.subr.mxu0 0.0
    %1481 = vmatpush1.msra.mxu0 0.0
    %1482 = vmatprep.subr.mxu0 0.0
    %1483 = vmatpush1.msra.mxu0 0.0
    %1484 = vmatprep.subr.mxu0 0.0
    %1485 = vmatpush1.msra.mxu0 0.0
    %1486 = vmatprep.subr.mxu0 0.0
    %1487 = vmatpush1.msra.mxu0 0.0
    %1488 = vmatprep.subr.mxu0 0.0
    %1489 = vmatpush1.msra.mxu0 0.0
    %1490 = vmatprep.subr.mxu0 0.0
    %1491 = vmatpush1.msra.mxu0 0.0
    %1492 = vmatprep.subr.mxu0 0.0
    %1493 = vmatpush1.msra.mxu0 0.0
    %1494 = vmatprep.subr.mxu0 0.0
    %1495 = vmatpush1.msra.mxu0 0.0
    %1496 = vmatprep.subr.mxu0 0.0
    %1497 = vmatpush1.msra.mxu0 %v1204
    %1498 = vmatprep.subr.mxu0 0.0
    %1499 = vmatpush1.msra.mxu0 %v1203
    %1500 = vmatprep.subr.mxu0 0.0
    %1501 = vmatpush1.msra.mxu0 %v1202
    %1502 = vmatprep.subr.mxu0 0.0
    %1503 = vmatpush1.msra.mxu0 %v1201
    %1504 = vmatprep.subr.mxu0 0.0
    %1505 = vmatpush2.msra.mxu0 0.0
    %1506 = vmatprep.subr.mxu0 0.0
    %1507 = vmatpush2.msra.mxu0 0.0
    %1508 = vmatprep.subr.mxu0 0.0
    %1509 = vmatpush2.msra.mxu0 0.0
    %1510 = vmatprep.subr.mxu0 0.0
    %1511 = vmatpush2.msra.mxu0 0.0
    %1512 = vmatprep.subr.mxu0 0.0
    %1513 = vmatpush2.msra.mxu0 0.0
    %1514 = vmatprep.subr.mxu0 0.0
    %1515 = vmatpush2.msra.mxu0 0.0
    %1516 = vmatprep.subr.mxu0 0.0
    %1517 = vmatpush2.msra.mxu0 0.0
    %1518 = vmatprep.subr.mxu0 0.0
    %1519 = vmatpush2.msra.mxu0 0.0
    %1520 = vmatprep.subr.mxu0 0.0
    %1521 = vmatpush2.msra.mxu0 0.0
    %1522 = vmatprep.subr.mxu0 0.0
    %1523 = vmatpush2.msra.mxu0 0.0
    %1524 = vmatprep.subr.mxu0 0.0
    %1525 = vmatpush2.msra.mxu0 0.0
    %1526 = vmatprep.subr.mxu0 0.0
    %1527 = vmatpush2.msra.mxu0 0.0
    %1528 = vmatprep.subr.mxu0 0.0
    %1529 = vmatpush2.msra.mxu0 0.0
    %1530 = vmatprep.subr.mxu0 0.0
    %1531 = vmatpush2.msra.mxu0 0.0
    %1532 = vmatprep.subr.mxu0 0.0
    %1533 = vmatpush2.msra.mxu0 0.0
    %1534 = vmatprep.subr.mxu0 0.0
    %1535 = vmatpush2.msra.mxu0 0.0
    %1536 = vmatprep.mubr.f32.mxu0 0.0
    %1537 = vmatmul.mubr.f32.gmra.mxu0 %v1470
    %v1538 = vpop.f32.mrf.mxu0
    %v1539 = vadd.f32 0.0, %v1538
    %v1540 = vpop.f32.mrf.mxu0
    %1541 = vdwg.mxu0
    %v1542 = vadd.f32 %v1189, %v1539
    %v1543 = vmax.f32 %v1542, 0.0
    %v1545 = vsel %vm193, %v1543, 0
    %1547 = vmatprep.subr.mxu0 0.0
    %1548 = vmatpush1.msra.mxu0 0.0
    %1549 = vmatprep.subr.mxu0 0.0
    %1550 = vmatpush1.msra.mxu0 0.0
    %1551 = vmatprep.subr.mxu0 0.0
    %1552 = vmatpush1.msra.mxu0 0.0
    %1553 = vmatprep.subr.mxu0 0.0
    %1554 = vmatpush1.msra.mxu0 0.0
    %1555 = vmatprep.subr.mxu0 0.0
    %1556 = vmatpush1.msra.mxu0 0.0
    %1557 = vmatprep.subr.mxu0 0.0
    %1558 = vmatpush1.msra.mxu0 0.0
    %1559 = vmatprep.subr.mxu0 0.0
    %1560 = vmatpush1.msra.mxu0 0.0
    %1561 = vmatprep.subr.mxu0 0.0
    %1562 = vmatpush1.msra.mxu0 0.0
    %1563 = vmatprep.subr.mxu0 0.0
    %1564 = vmatpush1.msra.mxu0 0.0
    %1565 = vmatprep.subr.mxu0 0.0
    %1566 = vmatpush1.msra.mxu0 0.0
    %1567 = vmatprep.subr.mxu0 0.0
    %1568 = vmatpush1.msra.mxu0 0.0
    %1569 = vmatprep.subr.mxu0 0.0
    %1570 = vmatpush1.msra.mxu0 0.0
    %1571 = vmatprep.subr.mxu0 0.0
    %1572 = vmatpush1.msra.mxu0 %v1208
    %1573 = vmatprep.subr.mxu0 0.0
    %1574 = vmatpush1.msra.mxu0 %v1207
    %1575 = vmatprep.subr.mxu0 0.0
    %1576 = vmatpush1.msra.mxu0 %v1206
    %1577 = vmatprep.subr.mxu0 0.0
    %1578 = vmatpush1.msra.mxu0 %v1205
    %1579 = vmatprep.subr.mxu0 0.0
    %1580 = vmatpush2.msra.mxu0 0.0
    %1581 = vmatprep.subr.mxu0 0.0
    %1582 = vmatpush2.msra.mxu0 0.0
    %1583 = vmatprep.subr.mxu0 0.0
    %1584 = vmatpush2.msra.mxu0 0.0
    %1585 = vmatprep.subr.mxu0 0.0
    %1586 = vmatpush2.msra.mxu0 0.0
    %1587 = vmatprep.subr.mxu0 0.0
    %1588 = vmatpush2.msra.mxu0 0.0
    %1589 = vmatprep.subr.mxu0 0.0
    %1590 = vmatpush2.msra.mxu0 0.0
    %1591 = vmatprep.subr.mxu0 0.0
    %1592 = vmatpush2.msra.mxu0 0.0
    %1593 = vmatprep.subr.mxu0 0.0
    %1594 = vmatpush2.msra.mxu0 0.0
    %1595 = vmatprep.subr.mxu0 0.0
    %1596 = vmatpush2.msra.mxu0 0.0
    %1597 = vmatprep.subr.mxu0 0.0
    %1598 = vmatpush2.msra.mxu0 0.0
    %1599 = vmatprep.subr.mxu0 0.0
    %1600 = vmatpush2.msra.mxu0 0.0
    %1601 = vmatprep.subr.mxu0 0.0
    %1602 = vmatpush2.msra.mxu0 0.0
    %1603 = vmatprep.subr.mxu0 0.0
    %1604 = vmatpush2.msra.mxu0 0.0
    %1605 = vmatprep.subr.mxu0 0.0
    %1606 = vmatpush2.msra.mxu0 0.0
    %1607 = vmatprep.subr.mxu0 0.0
    %1608 = vmatpush2.msra.mxu0 0.0
    %1609 = vmatprep.subr.mxu0 0.0
    %1610 = vmatpush2.msra.mxu0 0.0
    %1611 = vmatprep.mubr.f32.mxu0 0.0
    %1612 = vmatmul.mubr.f32.gmra.mxu0 %v1545
    %v1613 = vpop.f32.mrf.mxu0
    %v1614 = vadd.f32 %v1218, %v1613
    %v1615 = vpop.f32.mrf.mxu0
    %1616 = vdwg.mxu0
    %1617 = vmatprep.subr.mxu0 0.0
    %1618 = vmatpush1.msra.mxu0 0.0
    %1619 = vmatprep.subr.mxu0 0.0
    %1620 = vmatpush1.msra.mxu0 0.0
    %1621 = vmatprep.subr.mxu0 0.0
    %1622 = vmatpush1.msra.mxu0 0.0
    %1623 = vmatprep.subr.mxu0 0.0
    %1624 = vmatpush1.msra.mxu0 0.0
    %1625 = vmatprep.subr.mxu0 0.0
    %1626 = vmatpush1.msra.mxu0 0.0
    %1627 = vmatprep.subr.mxu0 0.0
    %1628 = vmatpush1.msra.mxu0 0.0
    %1629 = vmatprep.subr.mxu0 0.0
    %1630 = vmatpush1.msra.mxu0 0.0
    %1631 = vmatprep.subr.mxu0 0.0
    %1632 = vmatpush1.msra.mxu0 0.0
    %1633 = vmatprep.subr.mxu0 0.0
    %1634 = vmatpush1.msra.mxu0 0.0
    %1635 = vmatprep.subr.mxu0 0.0
    %1636 = vmatpush1.msra.mxu0 0.0
    %1637 = vmatprep.subr.mxu0 0.0
    %1638 = vmatpush1.msra.mxu0 0.0
    %1639 = vmatprep.subr.mxu0 0.0
    %1640 = vmatpush1.msra.mxu0 0.0
    %1641 = vmatprep.subr.mxu0 0.0
    %1642 = vmatpush1.msra.mxu0 %v1212
    %1643 = vmatprep.subr.mxu0 0.0
    %1644 = vmatpush1.msra.mxu0 %v1211
    %1645 = vmatprep.subr.mxu0 0.0
    %1646 = vmatpush1.msra.mxu0 %v1210
    %1647 = vmatprep.subr.mxu0 0.0
    %1648 = vmatpush1.msra.mxu0 %v1209
    %1649 = vmatprep.subr.mxu0 0.0
    %1650 = vmatpush2.msra.mxu0 0.0
    %1651 = vmatprep.subr.mxu0 0.0
    %1652 = vmatpush2.msra.mxu0 0.0
    %1653 = vmatprep.subr.mxu0 0.0
    %1654 = vmatpush2.msra.mxu0 0.0
    %1655 = vmatprep.subr.mxu0 0.0
    %1656 = vmatpush2.msra.mxu0 0.0
    %1657 = vmatprep.subr.mxu0 0.0
    %1658 = vmatpush2.msra.mxu0 0.0
    %1659 = vmatprep.subr.mxu0 0.0
    %1660 = vmatpush2.msra.mxu0 0.0
    %1661 = vmatprep.subr.mxu0 0.0
    %1662 = vmatpush2.msra.mxu0 0.0
    %1663 = vmatprep.subr.mxu0 0.0
    %1664 = vmatpush2.msra.mxu0 0.0
    %1665 = vmatprep.subr.mxu0 0.0
    %1666 = vmatpush2.msra.mxu0 0.0
    %1667 = vmatprep.subr.mxu0 0.0
    %1668 = vmatpush2.msra.mxu0 0.0
    %1669 = vmatprep.subr.mxu0 0.0
    %1670 = vmatpush2.msra.mxu0 0.0
    %1671 = vmatprep.subr.mxu0 0.0
    %1672 = vmatpush2.msra.mxu0 0.0
    %1673 = vmatprep.subr.mxu0 0.0
    %1674 = vmatpush2.msra.mxu0 0.0
    %1675 = vmatprep.subr.mxu0 0.0
    %1676 = vmatpush2.msra.mxu0 0.0
    %1677 = vmatprep.subr.mxu0 0.0
    %1678 = vmatpush2.msra.mxu0 0.0
    %1679 = vmatprep.subr.mxu0 0.0
    %1680 = vmatpush2.msra.mxu0 0.0
    %1681 = vmatprep.mubr.f32.mxu0 0.0
    %1682 = vmatmul.mubr.f32.gmra.mxu0 %v286
    %v1683 = vpop.f32.mrf.mxu0
    %v1684 = vadd.f32 0.0, %v1683
    %v1685 = vpop.f32.mrf.mxu0
    %1686 = vdwg.mxu0
    %v1687 = vadd.f32 %v1614, %v1684
    %v1688 = vxor.u32 %v1687, 2147483648
    %v1689 = vmul.f32 %v1688, 1.442695
    %v1690 = vpow.pop %v1689
    %v1691 = vadd.f32 %v1690, 1.0
    %v1692 = vrcp.pop %v1691
    %v1693 = vmul.f32 1.0, %v1692
    %1694 = vrot.lane.b32.xlu0 %v1225, 64
    %v1695 = vpop.permute.xlu0 %1694
    %v1697 = vadd.f32 %v1684, %v1695
    %1699 = vrot.lane.b32.xlu0 %v1697, 64
    %v1700 = vpop.permute.xlu0 %1699
    %v1702 = vmul.f32 %v1693, %v1700
    %1704 = vrot.lane.b32.xlu0 %v1702, 64
    %v1705 = vpop.permute.xlu0 %1704
    %v1707 = vadd.f32 %v1614, %v1705
    %v1708 = vtanh.pop %v1707
    %v1709 = vsub.f32 1.0, %v1693
    %1711 = vrot.lane.b32.xlu0 %v1708, 96
    %v1712 = vpop.permute.xlu0 %1711
    %v1714 = vmul.f32 %v1709, %v1712
    %v1715 = vmul.f32 %v1693, 0.0
    %v1716 = vadd.f32 %v1714, %v1715
    %v1717 = vadd.f32 %v1716, 0.0
    %1719 = vrot.lane.b32.xlu0 %v1716, 96
    %v1720 = vpop.permute.xlu0 %1719
    %v1721 = vsel %vm193, %v1720, 0
    %1723 = vmatprep.subr.mxu0 0.0
    %1724 = vmatpush1.msra.mxu0 0.0
    %1725 = vmatprep.subr.mxu0 0.0
    %1726 = vmatpush1.msra.mxu0 0.0
    %1727 = vmatprep.subr.mxu0 0.0
    %1728 = vmatpush1.msra.mxu0 0.0
    %1729 = vmatprep.subr.mxu0 0.0
    %1730 = vmatpush1.msra.mxu0 0.0
    %1731 = vmatprep.subr.mxu0 0.0
    %1732 = vmatpush1.msra.mxu0 0.0
    %1733 = vmatprep.subr.mxu0 0.0
    %1734 = vmatpush1.msra.mxu0 0.0
    %1735 = vmatprep.subr.mxu0 0.0
    %1736 = vmatpush1.msra.mxu0 0.0
    %1737 = vmatprep.subr.mxu0 0.0
    %1738 = vmatpush1.msra.mxu0 0.0
    %1739 = vmatprep.subr.mxu0 0.0
    %1740 = vmatpush1.msra.mxu0 0.0
    %1741 = vmatprep.subr.mxu0 0.0
    %1742 = vmatpush1.msra.mxu0 0.0
    %1743 = vmatprep.subr.mxu0 0.0
    %1744 = vmatpush1.msra.mxu0 0.0
    %1745 = vmatprep.subr.mxu0 0.0
    %1746 = vmatpush1.msra.mxu0 0.0
    %1747 = vmatprep.subr.mxu0 0.0
    %1748 = vmatpush1.msra.mxu0 %v1200
    %1749 = vmatprep.subr.mxu0 0.0
    %1750 = vmatpush1.msra.mxu0 %v1199
    %1751 = vmatprep.subr.mxu0 0.0
    %1752 = vmatpush1.msra.mxu0 %v1198
    %1753 = vmatprep.subr.mxu0 0.0
    %1754 = vmatpush1.msra.mxu0 %v1197
    %1755 = vmatprep.subr.mxu0 0.0
    %1756 = vmatpush2.msra.mxu0 0.0
    %1757 = vmatprep.subr.mxu0 0.0
    %1758 = vmatpush2.msra.mxu0 0.0
    %1759 = vmatprep.subr.mxu0 0.0
    %1760 = vmatpush2.msra.mxu0 0.0
    %1761 = vmatprep.subr.mxu0 0.0
    %1762 = vmatpush2.msra.mxu0 0.0
    %1763 = vmatprep.subr.mxu0 0.0
    %1764 = vmatpush2.msra.mxu0 0.0
    %1765 = vmatprep.subr.mxu0 0.0
    %1766 = vmatpush2.msra.mxu0 0.0
    %1767 = vmatprep.subr.mxu0 0.0
    %1768 = vmatpush2.msra.mxu0 0.0
    %1769 = vmatprep.subr.mxu0 0.0
    %1770 = vmatpush2.msra.mxu0 0.0
    %1771 = vmatprep.subr.mxu0 0.0
    %1772 = vmatpush2.msra.mxu0 0.0
    %1773 = vmatprep.subr.mxu0 0.0
    %1774 = vmatpush2.msra.mxu0 0.0
    %1775 = vmatprep.subr.mxu0 0.0
    %1776 = vmatpush2.msra.mxu0 0.0
    %1777 = vmatprep.subr.mxu0 0.0
    %1778 = vmatpush2.msra.mxu0 0.0
    %1779 = vmatprep.subr.mxu0 0.0
    %1780 = vmatpush2.msra.mxu0 0.0
    %1781 = vmatprep.subr.mxu0 0.0
    %1782 = vmatpush2.msra.mxu0 0.0
    %1783 = vmatprep.subr.mxu0 0.0
    %1784 = vmatpush2.msra.mxu0 0.0
    %1785 = vmatprep.subr.mxu0 0.0
    %1786 = vmatpush2.msra.mxu0 0.0
    %1787 = vmatprep.mubr.f32.mxu0 0.0
    %1788 = vmatmul.mubr.f32.gmra.mxu0 %v1721
    %v1789 = vpop.f32.mrf.mxu0
    %v1790 = vadd.f32 0.0, %v1789
    %v1791 = vpop.f32.mrf.mxu0
    %1792 = vdwg.mxu0
    %v1794 = vrot.slane %v1790, 6
    %v1796 = vadd.f32 %v1103, %v1794
    %vm1797 = vcmask 60418
    %v1798 = vsel %vm1797, %v1796, -inf
    %1799 = vmax.xlane.f32.xlu0 %v1798
    %v1800 = vpop.xlane.xlu0 %1799
    %v1801 = vsub.f32 %v1796, %v1800
    %v1802 = vmul.f32 %v1801, 1.442695
    %v1803 = vpow.pop %v1802
    %v1804 = vsel %vm1797, %v1803, 0.0
    %1805 = vadd.xlane.f32.xlu0 %v1804
    %v1806 = vpop.xlane.xlu0 %1805
    %v1807 = vrcp.pop %v1806
    %v1808 = vmul.f32 %v1803, %v1807
    %s1809 = scalar_lea.vmem [#allocation18], 2
    %1810 = vst.msk [vmem:[%s1809 - $0x2] sm:$0xc] %vm1797, %v1808
    %v1812 = vrot.slane %v1808, 2
    %v1813 = vsel %vm1314, %v1812, 0
    %1815 = vmatprep.subr.mxu0 0.0
    %1816 = vmatpush1.msra.mxu0 0.0
    %1817 = vmatprep.subr.mxu0 0.0
    %1818 = vmatpush1.msra.mxu0 0.0
    %1819 = vmatprep.subr.mxu0 0.0
    %1820 = vmatpush1.msra.mxu0 0.0
    %1821 = vmatprep.subr.mxu0 0.0
    %1822 = vmatpush1.msra.mxu0 0.0
    %1823 = vmatprep.subr.mxu0 0.0
    %1824 = vmatpush1.msra.mxu0 0.0
    %1825 = vmatprep.subr.mxu0 0.0
    %1826 = vmatpush1.msra.mxu0 0.0
    %1827 = vmatprep.subr.mxu0 0.0
    %1828 = vmatpush1.msra.mxu0 0.0
    %1829 = vmatprep.subr.mxu0 0.0
    %1830 = vmatpush1.msra.mxu0 0.0
    %1831 = vmatprep.subr.mxu0 0.0
    %1832 = vmatpush1.msra.mxu0 0.0
    %1833 = vmatprep.subr.mxu0 0.0
    %1834 = vmatpush1.msra.mxu0 0.0
    %1835 = vmatprep.subr.mxu0 0.0
    %1836 = vmatpush1.msra.mxu0 0.0
    %1837 = vmatprep.subr.mxu0 0.0
    %1838 = vmatpush1.msra.mxu0 0.0
    %1839 = vmatprep.subr.mxu0 0.0
    %1840 = vmatpush1.msra.mxu0 0.0
    %1841 = vmatprep.subr.mxu0 0.0
    %1842 = vmatpush1.msra.mxu0 0.0
    %1843 = vmatprep.subr.mxu0 0.0
    %1844 = vmatpush1.msra.mxu0 0.0
    %1845 = vmatprep.subr.mxu0 0.0
    %1846 = vmatpush1.msra.mxu0 %v1312
    %1847 = vmatprep.subr.mxu0 0.0
    %1848 = vmatpush2.msra.mxu0 0.0
    %1849 = vmatprep.subr.mxu0 0.0
    %1850 = vmatpush2.msra.mxu0 0.0
    %1851 = vmatprep.subr.mxu0 0.0
    %1852 = vmatpush2.msra.mxu0 0.0
    %1853 = vmatprep.subr.mxu0 0.0
    %1854 = vmatpush2.msra.mxu0 0.0
    %1855 = vmatprep.subr.mxu0 0.0
    %1856 = vmatpush2.msra.mxu0 0.0
    %1857 = vmatprep.subr.mxu0 0.0
    %1858 = vmatpush2.msra.mxu0 0.0
    %1859 = vmatprep.subr.mxu0 0.0
    %1860 = vmatpush2.msra.mxu0 0.0
    %1861 = vmatprep.subr.mxu0 0.0
    %1862 = vmatpush2.msra.mxu0 0.0
    %1863 = vmatprep.subr.mxu0 0.0
    %1864 = vmatpush2.msra.mxu0 0.0
    %1865 = vmatprep.subr.mxu0 0.0
    %1866 = vmatpush2.msra.mxu0 0.0
    %1867 = vmatprep.subr.mxu0 0.0
    %1868 = vmatpush2.msra.mxu0 0.0
    %1869 = vmatprep.subr.mxu0 0.0
    %1870 = vmatpush2.msra.mxu0 0.0
    %1871 = vmatprep.subr.mxu0 0.0
    %1872 = vmatpush2.msra.mxu0 0.0
    %1873 = vmatprep.subr.mxu0 0.0
    %1874 = vmatpush2.msra.mxu0 0.0
    %1875 = vmatprep.subr.mxu0 0.0
    %1876 = vmatpush2.msra.mxu0 0.0
    %1877 = vmatprep.subr.mxu0 0.0
    %1878 = vmatpush2.msra.mxu0 0.0
    %1879 = vmatprep.mubr.f32.mxu0 0.0
    %1880 = vmatmul.mubr.f32.gmra.mxu0 %v1813
    %v1881 = vpop.f32.mrf.mxu0
    %v1882 = vadd.f32 0.0, %v1881
    %v1883 = vpop.f32.mrf.mxu0
    %1884 = vdwg.mxu0
    %v1885 = vrot.slane %v1808, 3
    %v1886 = vsel %vm1314, %v1885, 0
    %1888 = vmatprep.subr.mxu0 0.0
    %1889 = vmatpush1.msra.mxu0 0.0
    %1890 = vmatprep.subr.mxu0 0.0
    %1891 = vmatpush1.msra.mxu0 0.0
    %1892 = vmatprep.subr.mxu0 0.0
    %1893 = vmatpush1.msra.mxu0 0.0
    %1894 = vmatprep.subr.mxu0 0.0
    %1895 = vmatpush1.msra.mxu0 0.0
    %1896 = vmatprep.subr.mxu0 0.0
    %1897 = vmatpush1.msra.mxu0 0.0
    %1898 = vmatprep.subr.mxu0 0.0
    %1899 = vmatpush1.msra.mxu0 0.0
    %1900 = vmatprep.subr.mxu0 0.0
    %1901 = vmatpush1.msra.mxu0 0.0
    %1902 = vmatprep.subr.mxu0 0.0
    %1903 = vmatpush1.msra.mxu0 0.0
    %1904 = vmatprep.subr.mxu0 0.0
    %1905 = vmatpush1.msra.mxu0 0.0
    %1906 = vmatprep.subr.mxu0 0.0
    %1907 = vmatpush1.msra.mxu0 0.0
    %1908 = vmatprep.subr.mxu0 0.0
    %1909 = vmatpush1.msra.mxu0 0.0
    %1910 = vmatprep.subr.mxu0 0.0
    %1911 = vmatpush1.msra.mxu0 0.0
    %1912 = vmatprep.subr.mxu0 0.0
    %1913 = vmatpush1.msra.mxu0 0.0
    %1914 = vmatprep.subr.mxu0 0.0
    %1915 = vmatpush1.msra.mxu0 0.0
    %1916 = vmatprep.subr.mxu0 0.0
    %1917 = vmatpush1.msra.mxu0 0.0
    %1918 = vmatprep.subr.mxu0 0.0
    %1919 = vmatpush1.msra.mxu0 %v1391
    %1920 = vmatprep.subr.mxu0 0.0
    %1921 = vmatpush2.msra.mxu0 0.0
    %1922 = vmatprep.subr.mxu0 0.0
    %1923 = vmatpush2.msra.mxu0 0.0
    %1924 = vmatprep.subr.mxu0 0.0
    %1925 = vmatpush2.msra.mxu0 0.0
    %1926 = vmatprep.subr.mxu0 0.0
    %1927 = vmatpush2.msra.mxu0 0.0
    %1928 = vmatprep.subr.mxu0 0.0
    %1929 = vmatpush2.msra.mxu0 0.0
    %1930 = vmatprep.subr.mxu0 0.0
    %1931 = vmatpush2.msra.mxu0 0.0
    %1932 = vmatprep.subr.mxu0 0.0
    %1933 = vmatpush2.msra.mxu0 0.0
    %1934 = vmatprep.subr.mxu0 0.0
    %1935 = vmatpush2.msra.mxu0 0.0
    %1936 = vmatprep.subr.mxu0 0.0
    %1937 = vmatpush2.msra.mxu0 0.0
    %1938 = vmatprep.subr.mxu0 0.0
    %1939 = vmatpush2.msra.mxu0 0.0
    %1940 = vmatprep.subr.mxu0 0.0
    %1941 = vmatpush2.msra.mxu0 0.0
    %1942 = vmatprep.subr.mxu0 0.0
    %1943 = vmatpush2.msra.mxu0 0.0
    %1944 = vmatprep.subr.mxu0 0.0
    %1945 = vmatpush2.msra.mxu0 0.0
    %1946 = vmatprep.subr.mxu0 0.0
    %1947 = vmatpush2.msra.mxu0 0.0
    %1948 = vmatprep.subr.mxu0 0.0
    %1949 = vmatpush2.msra.mxu0 0.0
    %1950 = vmatprep.subr.mxu0 0.0
    %1951 = vmatpush2.msra.mxu0 0.0
    %1952 = vmatprep.mubr.f32.mxu0 0.0
    %1953 = vmatmul.mubr.f32.gmra.mxu0 %v1886
    %v1954 = vpop.f32.mrf.mxu0
    %v1955 = vadd.f32 0.0, %v1954
    %v1956 = vpop.f32.mrf.mxu0
    %1957 = vdwg.mxu0
    %v1959 = vrot.slane %v1955, 7
    %v1961 = vsel %vm986, %v1882, %v1959
    %v1963 = vsel %vm193, %v1961, 0
    %1965 = vmatprep.subr.mxu0 0.0
    %1966 = vmatpush1.msra.mxu0 0.0
    %1967 = vmatprep.subr.mxu0 0.0
    %1968 = vmatpush1.msra.mxu0 0.0
    %1969 = vmatprep.subr.mxu0 0.0
    %1970 = vmatpush1.msra.mxu0 0.0
    %1971 = vmatprep.subr.mxu0 0.0
    %1972 = vmatpush1.msra.mxu0 0.0
    %1973 = vmatprep.subr.mxu0 0.0
    %1974 = vmatpush1.msra.mxu0 0.0
    %1975 = vmatprep.subr.mxu0 0.0
    %1976 = vmatpush1.msra.mxu0 0.0
    %1977 = vmatprep.subr.mxu0 0.0
    %1978 = vmatpush1.msra.mxu0 0.0
    %1979 = vmatprep.subr.mxu0 0.0
    %1980 = vmatpush1.msra.mxu0 0.0
    %1981 = vmatprep.subr.mxu0 0.0
    %1982 = vmatpush1.msra.mxu0 0.0
    %1983 = vmatprep.subr.mxu0 0.0
    %1984 = vmatpush1.msra.mxu0 0.0
    %1985 = vmatprep.subr.mxu0 0.0
    %1986 = vmatpush1.msra.mxu0 0.0
    %1987 = vmatprep.subr.mxu0 0.0
    %1988 = vmatpush1.msra.mxu0 0.0
    %1989 = vmatprep.subr.mxu0 0.0
    %1990 = vmatpush1.msra.mxu0 %v1204
    %1991 = vmatprep.subr.mxu0 0.0
    %1992 = vmatpush1.msra.mxu0 %v1203
    %1993 = vmatprep.subr.mxu0 0.0
    %1994 = vmatpush1.msra.mxu0 %v1202
    %1995 = vmatprep.subr.mxu0 0.0
    %1996 = vmatpush1.msra.mxu0 %v1201
    %1997 = vmatprep.subr.mxu0 0.0
    %1998 = vmatpush2.msra.mxu0 0.0
    %1999 = vmatprep.subr.mxu0 0.0
    %2000 = vmatpush2.msra.mxu0 0.0
    %2001 = vmatprep.subr.mxu0 0.0
    %2002 = vmatpush2.msra.mxu0 0.0
    %2003 = vmatprep.subr.mxu0 0.0
    %2004 = vmatpush2.msra.mxu0 0.0
    %2005 = vmatprep.subr.mxu0 0.0
    %2006 = vmatpush2.msra.mxu0 0.0
    %2007 = vmatprep.subr.mxu0 0.0
    %2008 = vmatpush2.msra.mxu0 0.0
    %2009 = vmatprep.subr.mxu0 0.0
    %2010 = vmatpush2.msra.mxu0 0.0
    %2011 = vmatprep.subr.mxu0 0.0
    %2012 = vmatpush2.msra.mxu0 0.0
    %2013 = vmatprep.subr.mxu0 0.0
    %2014 = vmatpush2.msra.mxu0 0.0
    %2015 = vmatprep.subr.mxu0 0.0
    %2016 = vmatpush2.msra.mxu0 0.0
    %2017 = vmatprep.subr.mxu0 0.0
    %2018 = vmatpush2.msra.mxu0 0.0
    %2019 = vmatprep.subr.mxu0 0.0
    %2020 = vmatpush2.msra.mxu0 0.0
    %2021 = vmatprep.subr.mxu0 0.0
    %2022 = vmatpush2.msra.mxu0 0.0
    %2023 = vmatprep.subr.mxu0 0.0
    %2024 = vmatpush2.msra.mxu0 0.0
    %2025 = vmatprep.subr.mxu0 0.0
    %2026 = vmatpush2.msra.mxu0 0.0
    %2027 = vmatprep.subr.mxu0 0.0
    %2028 = vmatpush2.msra.mxu0 0.0
    %2029 = vmatprep.mubr.f32.mxu0 0.0
    %2030 = vmatmul.mubr.f32.gmra.mxu0 %v1963
    %v2031 = vpop.f32.mrf.mxu0
    %v2032 = vadd.f32 0.0, %v2031
    %v2033 = vpop.f32.mrf.mxu0
    %2034 = vdwg.mxu0
    %v2036 = vrot.slane %v2032, 6
    %v2038 = vadd.f32 %v1189, %v2036
    %v2039 = vmax.f32 %v2038, 0.0
    %v2041 = vrot.slane %v2039, 2
    %v2042 = vsel %vm193, %v2041, 0
    %2044 = vmatprep.subr.mxu0 0.0
    %2045 = vmatpush1.msra.mxu0 0.0
    %2046 = vmatprep.subr.mxu0 0.0
    %2047 = vmatpush1.msra.mxu0 0.0
    %2048 = vmatprep.subr.mxu0 0.0
    %2049 = vmatpush1.msra.mxu0 0.0
    %2050 = vmatprep.subr.mxu0 0.0
    %2051 = vmatpush1.msra.mxu0 0.0
    %2052 = vmatprep.subr.mxu0 0.0
    %2053 = vmatpush1.msra.mxu0 0.0
    %2054 = vmatprep.subr.mxu0 0.0
    %2055 = vmatpush1.msra.mxu0 0.0
    %2056 = vmatprep.subr.mxu0 0.0
    %2057 = vmatpush1.msra.mxu0 0.0
    %2058 = vmatprep.subr.mxu0 0.0
    %2059 = vmatpush1.msra.mxu0 0.0
    %2060 = vmatprep.subr.mxu0 0.0
    %2061 = vmatpush1.msra.mxu0 0.0
    %2062 = vmatprep.subr.mxu0 0.0
    %2063 = vmatpush1.msra.mxu0 0.0
    %2064 = vmatprep.subr.mxu0 0.0
    %2065 = vmatpush1.msra.mxu0 0.0
    %2066 = vmatprep.subr.mxu0 0.0
    %2067 = vmatpush1.msra.mxu0 0.0
    %2068 = vmatprep.subr.mxu0 0.0
    %2069 = vmatpush1.msra.mxu0 %v1208
    %2070 = vmatprep.subr.mxu0 0.0
    %2071 = vmatpush1.msra.mxu0 %v1207
    %2072 = vmatprep.subr.mxu0 0.0
    %2073 = vmatpush1.msra.mxu0 %v1206
    %2074 = vmatprep.subr.mxu0 0.0
    %2075 = vmatpush1.msra.mxu0 %v1205
    %2076 = vmatprep.subr.mxu0 0.0
    %2077 = vmatpush2.msra.mxu0 0.0
    %2078 = vmatprep.subr.mxu0 0.0
    %2079 = vmatpush2.msra.mxu0 0.0
    %2080 = vmatprep.subr.mxu0 0.0
    %2081 = vmatpush2.msra.mxu0 0.0
    %2082 = vmatprep.subr.mxu0 0.0
    %2083 = vmatpush2.msra.mxu0 0.0
    %2084 = vmatprep.subr.mxu0 0.0
    %2085 = vmatpush2.msra.mxu0 0.0
    %2086 = vmatprep.subr.mxu0 0.0
    %2087 = vmatpush2.msra.mxu0 0.0
    %2088 = vmatprep.subr.mxu0 0.0
    %2089 = vmatpush2.msra.mxu0 0.0
    %2090 = vmatprep.subr.mxu0 0.0
    %2091 = vmatpush2.msra.mxu0 0.0
    %2092 = vmatprep.subr.mxu0 0.0
    %2093 = vmatpush2.msra.mxu0 0.0
    %2094 = vmatprep.subr.mxu0 0.0
    %2095 = vmatpush2.msra.mxu0 0.0
    %2096 = vmatprep.subr.mxu0 0.0
    %2097 = vmatpush2.msra.mxu0 0.0
    %2098 = vmatprep.subr.mxu0 0.0
    %2099 = vmatpush2.msra.mxu0 0.0
    %2100 = vmatprep.subr.mxu0 0.0
    %2101 = vmatpush2.msra.mxu0 0.0
    %2102 = vmatprep.subr.mxu0 0.0
    %2103 = vmatpush2.msra.mxu0 0.0
    %2104 = vmatprep.subr.mxu0 0.0
    %2105 = vmatpush2.msra.mxu0 0.0
    %2106 = vmatprep.subr.mxu0 0.0
    %2107 = vmatpush2.msra.mxu0 0.0
    %2108 = vmatprep.mubr.f32.mxu0 0.0
    %2109 = vmatmul.mubr.f32.gmra.mxu0 %v2042
    %v2110 = vpop.f32.mrf.mxu0
    %v2111 = vadd.f32 %v1218, %v2110
    %v2112 = vpop.f32.mrf.mxu0
    %2113 = vdwg.mxu0
    %2114 = vmatprep.subr.mxu0 0.0
    %2115 = vmatpush1.msra.mxu0 0.0
    %2116 = vmatprep.subr.mxu0 0.0
    %2117 = vmatpush1.msra.mxu0 0.0
    %2118 = vmatprep.subr.mxu0 0.0
    %2119 = vmatpush1.msra.mxu0 0.0
    %2120 = vmatprep.subr.mxu0 0.0
    %2121 = vmatpush1.msra.mxu0 0.0
    %2122 = vmatprep.subr.mxu0 0.0
    %2123 = vmatpush1.msra.mxu0 0.0
    %2124 = vmatprep.subr.mxu0 0.0
    %2125 = vmatpush1.msra.mxu0 0.0
    %2126 = vmatprep.subr.mxu0 0.0
    %2127 = vmatpush1.msra.mxu0 0.0
    %2128 = vmatprep.subr.mxu0 0.0
    %2129 = vmatpush1.msra.mxu0 0.0
    %2130 = vmatprep.subr.mxu0 0.0
    %2131 = vmatpush1.msra.mxu0 0.0
    %2132 = vmatprep.subr.mxu0 0.0
    %2133 = vmatpush1.msra.mxu0 0.0
    %2134 = vmatprep.subr.mxu0 0.0
    %2135 = vmatpush1.msra.mxu0 0.0
    %2136 = vmatprep.subr.mxu0 0.0
    %2137 = vmatpush1.msra.mxu0 0.0
    %2138 = vmatprep.subr.mxu0 0.0
    %2139 = vmatpush1.msra.mxu0 %v1212
    %2140 = vmatprep.subr.mxu0 0.0
    %2141 = vmatpush1.msra.mxu0 %v1211
    %2142 = vmatprep.subr.mxu0 0.0
    %2143 = vmatpush1.msra.mxu0 %v1210
    %2144 = vmatprep.subr.mxu0 0.0
    %2145 = vmatpush1.msra.mxu0 %v1209
    %2146 = vmatprep.subr.mxu0 0.0
    %2147 = vmatpush2.msra.mxu0 0.0
    %2148 = vmatprep.subr.mxu0 0.0
    %2149 = vmatpush2.msra.mxu0 0.0
    %2150 = vmatprep.subr.mxu0 0.0
    %2151 = vmatpush2.msra.mxu0 0.0
    %2152 = vmatprep.subr.mxu0 0.0
    %2153 = vmatpush2.msra.mxu0 0.0
    %2154 = vmatprep.subr.mxu0 0.0
    %2155 = vmatpush2.msra.mxu0 0.0
    %2156 = vmatprep.subr.mxu0 0.0
    %2157 = vmatpush2.msra.mxu0 0.0
    %2158 = vmatprep.subr.mxu0 0.0
    %2159 = vmatpush2.msra.mxu0 0.0
    %2160 = vmatprep.subr.mxu0 0.0
    %2161 = vmatpush2.msra.mxu0 0.0
    %2162 = vmatprep.subr.mxu0 0.0
    %2163 = vmatpush2.msra.mxu0 0.0
    %2164 = vmatprep.subr.mxu0 0.0
    %2165 = vmatpush2.msra.mxu0 0.0
    %2166 = vmatprep.subr.mxu0 0.0
    %2167 = vmatpush2.msra.mxu0 0.0
    %2168 = vmatprep.subr.mxu0 0.0
    %2169 = vmatpush2.msra.mxu0 0.0
    %2170 = vmatprep.subr.mxu0 0.0
    %2171 = vmatpush2.msra.mxu0 0.0
    %2172 = vmatprep.subr.mxu0 0.0
    %2173 = vmatpush2.msra.mxu0 0.0
    %2174 = vmatprep.subr.mxu0 0.0
    %2175 = vmatpush2.msra.mxu0 0.0
    %2176 = vmatprep.subr.mxu0 0.0
    %2177 = vmatpush2.msra.mxu0 0.0
    %2178 = vmatprep.mubr.f32.mxu0 0.0
    %2179 = vmatmul.mubr.f32.gmra.mxu0 %v1721
    %v2180 = vpop.f32.mrf.mxu0
    %v2181 = vadd.f32 0.0, %v2180
    %v2182 = vpop.f32.mrf.mxu0
    %2183 = vdwg.mxu0
    %v2184 = vadd.f32 %v2111, %v2181
    %v2185 = vxor.u32 %v2184, 2147483648
    %v2186 = vmul.f32 %v2185, 1.442695
    %v2187 = vpow.pop %v2186
    %v2188 = vadd.f32 %v2187, 1.0
    %v2189 = vrcp.pop %v2188
    %v2190 = vmul.f32 1.0, %v2189
    %v2191 = vadd.f32 %v2181, %v1695
    %2193 = vrot.lane.b32.xlu0 %v2191, 64
    %v2194 = vpop.permute.xlu0 %2193
    %v2196 = vmul.f32 %v2190, %v2194
    %2198 = vrot.lane.b32.xlu0 %v2196, 64
    %v2199 = vpop.permute.xlu0 %2198
    %v2201 = vadd.f32 %v2111, %v2199
    %v2202 = vtanh.pop %v2201
    %v2203 = vsub.f32 1.0, %v2190
    %2205 = vrot.lane.b32.xlu0 %v2202, 96
    %v2206 = vpop.permute.xlu0 %2205
    %v2208 = vmul.f32 %v2203, %v2206
    %v2209 = vmul.f32 %v2190, %v1716
    %v2210 = vadd.f32 %v2208, %v2209
    %v2211 = vadd.f32 %v1717, %v2210
    %2213 = vrot.lane.b32.xlu0 %v2210, 96
    %v2214 = vpop.permute.xlu0 %2213
    %v2215 = vsel %vm193, %v2214, 0
    %2217 = vmatprep.subr.mxu0 0.0
    %2218 = vmatpush1.msra.mxu0 0.0
    %2219 = vmatprep.subr.mxu0 0.0
    %2220 = vmatpush1.msra.mxu0 0.0
    %2221 = vmatprep.subr.mxu0 0.0
    %2222 = vmatpush1.msra.mxu0 0.0
    %2223 = vmatprep.subr.mxu0 0.0
    %2224 = vmatpush1.msra.mxu0 0.0
    %2225 = vmatprep.subr.mxu0 0.0
    %2226 = vmatpush1.msra.mxu0 0.0
    %2227 = vmatprep.subr.mxu0 0.0
    %2228 = vmatpush1.msra.mxu0 0.0
    %2229 = vmatprep.subr.mxu0 0.0
    %2230 = vmatpush1.msra.mxu0 0.0
    %2231 = vmatprep.subr.mxu0 0.0
    %2232 = vmatpush1.msra.mxu0 0.0
    %2233 = vmatprep.subr.mxu0 0.0
    %2234 = vmatpush1.msra.mxu0 0.0
    %2235 = vmatprep.subr.mxu0 0.0
    %2236 = vmatpush1.msra.mxu0 0.0
    %2237 = vmatprep.subr.mxu0 0.0
    %2238 = vmatpush1.msra.mxu0 0.0
    %2239 = vmatprep.subr.mxu0 0.0
    %2240 = vmatpush1.msra.mxu0 0.0
    %2241 = vmatprep.subr.mxu0 0.0
    %2242 = vmatpush1.msra.mxu0 %v1200
    %2243 = vmatprep.subr.mxu0 0.0
    %2244 = vmatpush1.msra.mxu0 %v1199
    %2245 = vmatprep.subr.mxu0 0.0
    %2246 = vmatpush1.msra.mxu0 %v1198
    %2247 = vmatprep.subr.mxu0 0.0
    %2248 = vmatpush1.msra.mxu0 %v1197
    %2249 = vmatprep.subr.mxu0 0.0
    %2250 = vmatpush2.msra.mxu0 0.0
    %2251 = vmatprep.subr.mxu0 0.0
    %2252 = vmatpush2.msra.mxu0 0.0
    %2253 = vmatprep.subr.mxu0 0.0
    %2254 = vmatpush2.msra.mxu0 0.0
    %2255 = vmatprep.subr.mxu0 0.0
    %2256 = vmatpush2.msra.mxu0 0.0
    %2257 = vmatprep.subr.mxu0 0.0
    %2258 = vmatpush2.msra.mxu0 0.0
    %2259 = vmatprep.subr.mxu0 0.0
    %2260 = vmatpush2.msra.mxu0 0.0
    %2261 = vmatprep.subr.mxu0 0.0
    %2262 = vmatpush2.msra.mxu0 0.0
    %2263 = vmatprep.subr.mxu0 0.0
    %2264 = vmatpush2.msra.mxu0 0.0
    %2265 = vmatprep.subr.mxu0 0.0
    %2266 = vmatpush2.msra.mxu0 0.0
    %2267 = vmatprep.subr.mxu0 0.0
    %2268 = vmatpush2.msra.mxu0 0.0
    %2269 = vmatprep.subr.mxu0 0.0
    %2270 = vmatpush2.msra.mxu0 0.0
    %2271 = vmatprep.subr.mxu0 0.0
    %2272 = vmatpush2.msra.mxu0 0.0
    %2273 = vmatprep.subr.mxu0 0.0
    %2274 = vmatpush2.msra.mxu0 0.0
    %2275 = vmatprep.subr.mxu0 0.0
    %2276 = vmatpush2.msra.mxu0 0.0
    %2277 = vmatprep.subr.mxu0 0.0
    %2278 = vmatpush2.msra.mxu0 0.0
    %2279 = vmatprep.subr.mxu0 0.0
    %2280 = vmatpush2.msra.mxu0 0.0
    %2281 = vmatprep.mubr.f32.mxu0 0.0
    %2282 = vmatmul.mubr.f32.gmra.mxu0 %v2215
    %v2283 = vpop.f32.mrf.mxu0
    %v2284 = vadd.f32 0.0, %v2283
    %v2285 = vpop.f32.mrf.mxu0
    %2286 = vdwg.mxu0
    %v2288 = vrot.slane %v2284, 4
    %v2290 = vadd.f32 %v1103, %v2288
    %vm2291 = vcmask 62468
    %v2292 = vsel %vm2291, %v2290, -inf
    %2293 = vmax.xlane.f32.xlu0 %v2292
    %v2294 = vpop.xlane.xlu0 %2293
    %v2295 = vsub.f32 %v2290, %v2294
    %v2296 = vmul.f32 %v2295, 1.442695
    %v2297 = vpow.pop %v2296
    %v2298 = vsel %vm2291, %v2297, 0.0
    %2299 = vadd.xlane.f32.xlu0 %v2298
    %v2300 = vpop.xlane.xlu0 %2299
    %v2301 = vrcp.pop %v2300
    %v2302 = vmul.f32 %v2297, %v2301
    %s2303 = scalar_lea.vmem [#allocation18], 4
    %2304 = vst.msk [vmem:[%s2303 - $0x4] sm:$0x30] %vm2291, %v2302
    %v2306 = vrot.slane %v2302, 4
    %v2307 = vsel %vm1314, %v2306, 0
    %2309 = vmatprep.subr.mxu0 0.0
    %2310 = vmatpush1.msra.mxu0 0.0
    %2311 = vmatprep.subr.mxu0 0.0
    %2312 = vmatpush1.msra.mxu0 0.0
    %2313 = vmatprep.subr.mxu0 0.0
    %2314 = vmatpush1.msra.mxu0 0.0
    %2315 = vmatprep.subr.mxu0 0.0
    %2316 = vmatpush1.msra.mxu0 0.0
    %2317 = vmatprep.subr.mxu0 0.0
    %2318 = vmatpush1.msra.mxu0 0.0
    %2319 = vmatprep.subr.mxu0 0.0
    %2320 = vmatpush1.msra.mxu0 0.0
    %2321 = vmatprep.subr.mxu0 0.0
    %2322 = vmatpush1.msra.mxu0 0.0
    %2323 = vmatprep.subr.mxu0 0.0
    %2324 = vmatpush1.msra.mxu0 0.0
    %2325 = vmatprep.subr.mxu0 0.0
    %2326 = vmatpush1.msra.mxu0 0.0
    %2327 = vmatprep.subr.mxu0 0.0
    %2328 = vmatpush1.msra.mxu0 0.0
    %2329 = vmatprep.subr.mxu0 0.0
    %2330 = vmatpush1.msra.mxu0 0.0
    %2331 = vmatprep.subr.mxu0 0.0
    %2332 = vmatpush1.msra.mxu0 0.0
    %2333 = vmatprep.subr.mxu0 0.0
    %2334 = vmatpush1.msra.mxu0 0.0
    %2335 = vmatprep.subr.mxu0 0.0
    %2336 = vmatpush1.msra.mxu0 0.0
    %2337 = vmatprep.subr.mxu0 0.0
    %2338 = vmatpush1.msra.mxu0 0.0
    %2339 = vmatprep.subr.mxu0 0.0
    %2340 = vmatpush1.msra.mxu0 %v1312
    %2341 = vmatprep.subr.mxu0 0.0
    %2342 = vmatpush2.msra.mxu0 0.0
    %2343 = vmatprep.subr.mxu0 0.0
    %2344 = vmatpush2.msra.mxu0 0.0
    %2345 = vmatprep.subr.mxu0 0.0
    %2346 = vmatpush2.msra.mxu0 0.0
    %2347 = vmatprep.subr.mxu0 0.0
    %2348 = vmatpush2.msra.mxu0 0.0
    %2349 = vmatprep.subr.mxu0 0.0
    %2350 = vmatpush2.msra.mxu0 0.0
    %2351 = vmatprep.subr.mxu0 0.0
    %2352 = vmatpush2.msra.mxu0 0.0
    %2353 = vmatprep.subr.mxu0 0.0
    %2354 = vmatpush2.msra.mxu0 0.0
    %2355 = vmatprep.subr.mxu0 0.0
    %2356 = vmatpush2.msra.mxu0 0.0
    %2357 = vmatprep.subr.mxu0 0.0
    %2358 = vmatpush2.msra.mxu0 0.0
    %2359 = vmatprep.subr.mxu0 0.0
    %2360 = vmatpush2.msra.mxu0 0.0
    %2361 = vmatprep.subr.mxu0 0.0
    %2362 = vmatpush2.msra.mxu0 0.0
    %2363 = vmatprep.subr.mxu0 0.0
    %2364 = vmatpush2.msra.mxu0 0.0
    %2365 = vmatprep.subr.mxu0 0.0
    %2366 = vmatpush2.msra.mxu0 0.0
    %2367 = vmatprep.subr.mxu0 0.0
    %2368 = vmatpush2.msra.mxu0 0.0
    %2369 = vmatprep.subr.mxu0 0.0
    %2370 = vmatpush2.msra.mxu0 0.0
    %2371 = vmatprep.subr.mxu0 0.0
    %2372 = vmatpush2.msra.mxu0 0.0
    %2373 = vmatprep.mubr.f32.mxu0 0.0
    %2374 = vmatmul.mubr.f32.gmra.mxu0 %v2307
    %v2375 = vpop.f32.mrf.mxu0
    %v2376 = vadd.f32 0.0, %v2375
    %v2377 = vpop.f32.mrf.mxu0
    %2378 = vdwg.mxu0
    %v2379 = vrot.slane %v2302, 5
    %v2380 = vsel %vm1314, %v2379, 0
    %2382 = vmatprep.subr.mxu0 0.0
    %2383 = vmatpush1.msra.mxu0 0.0
    %2384 = vmatprep.subr.mxu0 0.0
    %2385 = vmatpush1.msra.mxu0 0.0
    %2386 = vmatprep.subr.mxu0 0.0
    %2387 = vmatpush1.msra.mxu0 0.0
    %2388 = vmatprep.subr.mxu0 0.0
    %2389 = vmatpush1.msra.mxu0 0.0
    %2390 = vmatprep.subr.mxu0 0.0
    %2391 = vmatpush1.msra.mxu0 0.0
    %2392 = vmatprep.subr.mxu0 0.0
    %2393 = vmatpush1.msra.mxu0 0.0
    %2394 = vmatprep.subr.mxu0 0.0
    %2395 = vmatpush1.msra.mxu0 0.0
    %2396 = vmatprep.subr.mxu0 0.0
    %2397 = vmatpush1.msra.mxu0 0.0
    %2398 = vmatprep.subr.mxu0 0.0
    %2399 = vmatpush1.msra.mxu0 0.0
    %2400 = vmatprep.subr.mxu0 0.0
    %2401 = vmatpush1.msra.mxu0 0.0
    %2402 = vmatprep.subr.mxu0 0.0
    %2403 = vmatpush1.msra.mxu0 0.0
    %2404 = vmatprep.subr.mxu0 0.0
    %2405 = vmatpush1.msra.mxu0 0.0
    %2406 = vmatprep.subr.mxu0 0.0
    %2407 = vmatpush1.msra.mxu0 0.0
    %2408 = vmatprep.subr.mxu0 0.0
    %2409 = vmatpush1.msra.mxu0 0.0
    %2410 = vmatprep.subr.mxu0 0.0
    %2411 = vmatpush1.msra.mxu0 0.0
    %2412 = vmatprep.subr.mxu0 0.0
    %2413 = vmatpush1.msra.mxu0 %v1391
    %2414 = vmatprep.subr.mxu0 0.0
    %2415 = vmatpush2.msra.mxu0 0.0
    %2416 = vmatprep.subr.mxu0 0.0
    %2417 = vmatpush2.msra.mxu0 0.0
    %2418 = vmatprep.subr.mxu0 0.0
    %2419 = vmatpush2.msra.mxu0 0.0
    %2420 = vmatprep.subr.mxu0 0.0
    %2421 = vmatpush2.msra.mxu0 0.0
    %2422 = vmatprep.subr.mxu0 0.0
    %2423 = vmatpush2.msra.mxu0 0.0
    %2424 = vmatprep.subr.mxu0 0.0
    %2425 = vmatpush2.msra.mxu0 0.0
    %2426 = vmatprep.subr.mxu0 0.0
    %2427 = vmatpush2.msra.mxu0 0.0
    %2428 = vmatprep.subr.mxu0 0.0
    %2429 = vmatpush2.msra.mxu0 0.0
    %2430 = vmatprep.subr.mxu0 0.0
    %2431 = vmatpush2.msra.mxu0 0.0
    %2432 = vmatprep.subr.mxu0 0.0
    %2433 = vmatpush2.msra.mxu0 0.0
    %2434 = vmatprep.subr.mxu0 0.0
    %2435 = vmatpush2.msra.mxu0 0.0
    %2436 = vmatprep.subr.mxu0 0.0
    %2437 = vmatpush2.msra.mxu0 0.0
    %2438 = vmatprep.subr.mxu0 0.0
    %2439 = vmatpush2.msra.mxu0 0.0
    %2440 = vmatprep.subr.mxu0 0.0
    %2441 = vmatpush2.msra.mxu0 0.0
    %2442 = vmatprep.subr.mxu0 0.0
    %2443 = vmatpush2.msra.mxu0 0.0
    %2444 = vmatprep.subr.mxu0 0.0
    %2445 = vmatpush2.msra.mxu0 0.0
    %2446 = vmatprep.mubr.f32.mxu0 0.0
    %2447 = vmatmul.mubr.f32.gmra.mxu0 %v2380
    %v2448 = vpop.f32.mrf.mxu0
    %v2449 = vadd.f32 0.0, %v2448
    %v2450 = vpop.f32.mrf.mxu0
    %2451 = vdwg.mxu0
    %v2453 = vrot.slane %v2449, 7
    %v2455 = vsel %vm986, %v2376, %v2453
    %v2457 = vsel %vm193, %v2455, 0
    %2459 = vmatprep.subr.mxu0 0.0
    %2460 = vmatpush1.msra.mxu0 0.0
    %2461 = vmatprep.subr.mxu0 0.0
    %2462 = vmatpush1.msra.mxu0 0.0
    %2463 = vmatprep.subr.mxu0 0.0
    %2464 = vmatpush1.msra.mxu0 0.0
    %2465 = vmatprep.subr.mxu0 0.0
    %2466 = vmatpush1.msra.mxu0 0.0
    %2467 = vmatprep.subr.mxu0 0.0
    %2468 = vmatpush1.msra.mxu0 0.0
    %2469 = vmatprep.subr.mxu0 0.0
    %2470 = vmatpush1.msra.mxu0 0.0
    %2471 = vmatprep.subr.mxu0 0.0
    %2472 = vmatpush1.msra.mxu0 0.0
    %2473 = vmatprep.subr.mxu0 0.0
    %2474 = vmatpush1.msra.mxu0 0.0
    %2475 = vmatprep.subr.mxu0 0.0
    %2476 = vmatpush1.msra.mxu0 0.0
    %2477 = vmatprep.subr.mxu0 0.0
    %2478 = vmatpush1.msra.mxu0 0.0
    %2479 = vmatprep.subr.mxu0 0.0
    %2480 = vmatpush1.msra.mxu0 0.0
    %2481 = vmatprep.subr.mxu0 0.0
    %2482 = vmatpush1.msra.mxu0 0.0
    %2483 = vmatprep.subr.mxu0 0.0
    %2484 = vmatpush1.msra.mxu0 %v1204
    %2485 = vmatprep.subr.mxu0 0.0
    %2486 = vmatpush1.msra.mxu0 %v1203
    %2487 = vmatprep.subr.mxu0 0.0
    %2488 = vmatpush1.msra.mxu0 %v1202
    %2489 = vmatprep.subr.mxu0 0.0
    %2490 = vmatpush1.msra.mxu0 %v1201
    %2491 = vmatprep.subr.mxu0 0.0
    %2492 = vmatpush2.msra.mxu0 0.0
    %2493 = vmatprep.subr.mxu0 0.0
    %2494 = vmatpush2.msra.mxu0 0.0
    %2495 = vmatprep.subr.mxu0 0.0
    %2496 = vmatpush2.msra.mxu0 0.0
    %2497 = vmatprep.subr.mxu0 0.0
    %2498 = vmatpush2.msra.mxu0 0.0
    %2499 = vmatprep.subr.mxu0 0.0
    %2500 = vmatpush2.msra.mxu0 0.0
    %2501 = vmatprep.subr.mxu0 0.0
    %2502 = vmatpush2.msra.mxu0 0.0
    %2503 = vmatprep.subr.mxu0 0.0
    %2504 = vmatpush2.msra.mxu0 0.0
    %2505 = vmatprep.subr.mxu0 0.0
    %2506 = vmatpush2.msra.mxu0 0.0
    %2507 = vmatprep.subr.mxu0 0.0
    %2508 = vmatpush2.msra.mxu0 0.0
    %2509 = vmatprep.subr.mxu0 0.0
    %2510 = vmatpush2.msra.mxu0 0.0
    %2511 = vmatprep.subr.mxu0 0.0
    %2512 = vmatpush2.msra.mxu0 0.0
    %2513 = vmatprep.subr.mxu0 0.0
    %2514 = vmatpush2.msra.mxu0 0.0
    %2515 = vmatprep.subr.mxu0 0.0
    %2516 = vmatpush2.msra.mxu0 0.0
    %2517 = vmatprep.subr.mxu0 0.0
    %2518 = vmatpush2.msra.mxu0 0.0
    %2519 = vmatprep.subr.mxu0 0.0
    %2520 = vmatpush2.msra.mxu0 0.0
    %2521 = vmatprep.subr.mxu0 0.0
    %2522 = vmatpush2.msra.mxu0 0.0
    %2523 = vmatprep.mubr.f32.mxu0 0.0
    %2524 = vmatmul.mubr.f32.gmra.mxu0 %v2457
    %v2525 = vpop.f32.mrf.mxu0
    %v2526 = vadd.f32 0.0, %v2525
    %v2527 = vpop.f32.mrf.mxu0
    %2528 = vdwg.mxu0
    %v2530 = vrot.slane %v2526, 4
    %v2532 = vadd.f32 %v1189, %v2530
    %v2533 = vmax.f32 %v2532, 0.0
    %v2535 = vrot.slane %v2533, 4
    %v2536 = vsel %vm193, %v2535, 0
    %2538 = vmatprep.subr.mxu0 0.0
    %2539 = vmatpush1.msra.mxu0 0.0
    %2540 = vmatprep.subr.mxu0 0.0
    %2541 = vmatpush1.msra.mxu0 0.0
    %2542 = vmatprep.subr.mxu0 0.0
    %2543 = vmatpush1.msra.mxu0 0.0
    %2544 = vmatprep.subr.mxu0 0.0
    %2545 = vmatpush1.msra.mxu0 0.0
    %2546 = vmatprep.subr.mxu0 0.0
    %2547 = vmatpush1.msra.mxu0 0.0
    %2548 = vmatprep.subr.mxu0 0.0
    %2549 = vmatpush1.msra.mxu0 0.0
    %2550 = vmatprep.subr.mxu0 0.0
    %2551 = vmatpush1.msra.mxu0 0.0
    %2552 = vmatprep.subr.mxu0 0.0
    %2553 = vmatpush1.msra.mxu0 0.0
    %2554 = vmatprep.subr.mxu0 0.0
    %2555 = vmatpush1.msra.mxu0 0.0
    %2556 = vmatprep.subr.mxu0 0.0
    %2557 = vmatpush1.msra.mxu0 0.0
    %2558 = vmatprep.subr.mxu0 0.0
    %2559 = vmatpush1.msra.mxu0 0.0
    %2560 = vmatprep.subr.mxu0 0.0
    %2561 = vmatpush1.msra.mxu0 0.0
    %2562 = vmatprep.subr.mxu0 0.0
    %2563 = vmatpush1.msra.mxu0 %v1208
    %2564 = vmatprep.subr.mxu0 0.0
    %2565 = vmatpush1.msra.mxu0 %v1207
    %2566 = vmatprep.subr.mxu0 0.0
    %2567 = vmatpush1.msra.mxu0 %v1206
    %2568 = vmatprep.subr.mxu0 0.0
    %2569 = vmatpush1.msra.mxu0 %v1205
    %2570 = vmatprep.subr.mxu0 0.0
    %2571 = vmatpush2.msra.mxu0 0.0
    %2572 = vmatprep.subr.mxu0 0.0
    %2573 = vmatpush2.msra.mxu0 0.0
    %2574 = vmatprep.subr.mxu0 0.0
    %2575 = vmatpush2.msra.mxu0 0.0
    %2576 = vmatprep.subr.mxu0 0.0
    %2577 = vmatpush2.msra.mxu0 0.0
    %2578 = vmatprep.subr.mxu0 0.0
    %2579 = vmatpush2.msra.mxu0 0.0
    %2580 = vmatprep.subr.mxu0 0.0
    %2581 = vmatpush2.msra.mxu0 0.0
    %2582 = vmatprep.subr.mxu0 0.0
    %2583 = vmatpush2.msra.mxu0 0.0
    %2584 = vmatprep.subr.mxu0 0.0
    %2585 = vmatpush2.msra.mxu0 0.0
    %2586 = vmatprep.subr.mxu0 0.0
    %2587 = vmatpush2.msra.mxu0 0.0
    %2588 = vmatprep.subr.mxu0 0.0
    %2589 = vmatpush2.msra.mxu0 0.0
    %2590 = vmatprep.subr.mxu0 0.0
    %2591 = vmatpush2.msra.mxu0 0.0
    %2592 = vmatprep.subr.mxu0 0.0
    %2593 = vmatpush2.msra.mxu0 0.0
    %2594 = vmatprep.subr.mxu0 0.0
    %2595 = vmatpush2.msra.mxu0 0.0
    %2596 = vmatprep.subr.mxu0 0.0
    %2597 = vmatpush2.msra.mxu0 0.0
    %2598 = vmatprep.subr.mxu0 0.0
    %2599 = vmatpush2.msra.mxu0 0.0
    %2600 = vmatprep.subr.mxu0 0.0
    %2601 = vmatpush2.msra.mxu0 0.0
    %2602 = vmatprep.mubr.f32.mxu0 0.0
    %2603 = vmatmul.mubr.f32.gmra.mxu0 %v2536
    %v2604 = vpop.f32.mrf.mxu0
    %v2605 = vadd.f32 %v1218, %v2604
    %v2606 = vpop.f32.mrf.mxu0
    %2607 = vdwg.mxu0
    %2608 = vmatprep.subr.mxu0 0.0
    %2609 = vmatpush1.msra.mxu0 0.0
    %2610 = vmatprep.subr.mxu0 0.0
    %2611 = vmatpush1.msra.mxu0 0.0
    %2612 = vmatprep.subr.mxu0 0.0
    %2613 = vmatpush1.msra.mxu0 0.0
    %2614 = vmatprep.subr.mxu0 0.0
    %2615 = vmatpush1.msra.mxu0 0.0
    %2616 = vmatprep.subr.mxu0 0.0
    %2617 = vmatpush1.msra.mxu0 0.0
    %2618 = vmatprep.subr.mxu0 0.0
    %2619 = vmatpush1.msra.mxu0 0.0
    %2620 = vmatprep.subr.mxu0 0.0
    %2621 = vmatpush1.msra.mxu0 0.0
    %2622 = vmatprep.subr.mxu0 0.0
    %2623 = vmatpush1.msra.mxu0 0.0
    %2624 = vmatprep.subr.mxu0 0.0
    %2625 = vmatpush1.msra.mxu0 0.0
    %2626 = vmatprep.subr.mxu0 0.0
    %2627 = vmatpush1.msra.mxu0 0.0
    %2628 = vmatprep.subr.mxu0 0.0
    %2629 = vmatpush1.msra.mxu0 0.0
    %2630 = vmatprep.subr.mxu0 0.0
    %2631 = vmatpush1.msra.mxu0 0.0
    %2632 = vmatprep.subr.mxu0 0.0
    %2633 = vmatpush1.msra.mxu0 %v1212
    %2634 = vmatprep.subr.mxu0 0.0
    %2635 = vmatpush1.msra.mxu0 %v1211
    %2636 = vmatprep.subr.mxu0 0.0
    %2637 = vmatpush1.msra.mxu0 %v1210
    %2638 = vmatprep.subr.mxu0 0.0
    %2639 = vmatpush1.msra.mxu0 %v1209
    %2640 = vmatprep.subr.mxu0 0.0
    %2641 = vmatpush2.msra.mxu0 0.0
    %2642 = vmatprep.subr.mxu0 0.0
    %2643 = vmatpush2.msra.mxu0 0.0
    %2644 = vmatprep.subr.mxu0 0.0
    %2645 = vmatpush2.msra.mxu0 0.0
    %2646 = vmatprep.subr.mxu0 0.0
    %2647 = vmatpush2.msra.mxu0 0.0
    %2648 = vmatprep.subr.mxu0 0.0
    %2649 = vmatpush2.msra.mxu0 0.0
    %2650 = vmatprep.subr.mxu0 0.0
    %2651 = vmatpush2.msra.mxu0 0.0
    %2652 = vmatprep.subr.mxu0 0.0
    %2653 = vmatpush2.msra.mxu0 0.0
    %2654 = vmatprep.subr.mxu0 0.0
    %2655 = vmatpush2.msra.mxu0 0.0
    %2656 = vmatprep.subr.mxu0 0.0
    %2657 = vmatpush2.msra.mxu0 0.0
    %2658 = vmatprep.subr.mxu0 0.0
    %2659 = vmatpush2.msra.mxu0 0.0
    %2660 = vmatprep.subr.mxu0 0.0
    %2661 = vmatpush2.msra.mxu0 0.0
    %2662 = vmatprep.subr.mxu0 0.0
    %2663 = vmatpush2.msra.mxu0 0.0
    %2664 = vmatprep.subr.mxu0 0.0
    %2665 = vmatpush2.msra.mxu0 0.0
    %2666 = vmatprep.subr.mxu0 0.0
    %2667 = vmatpush2.msra.mxu0 0.0
    %2668 = vmatprep.subr.mxu0 0.0
    %2669 = vmatpush2.msra.mxu0 0.0
    %2670 = vmatprep.subr.mxu0 0.0
    %2671 = vmatpush2.msra.mxu0 0.0
    %2672 = vmatprep.mubr.f32.mxu0 0.0
    %2673 = vmatmul.mubr.f32.gmra.mxu0 %v2215
    %v2674 = vpop.f32.mrf.mxu0
    %v2675 = vadd.f32 0.0, %v2674
    %v2676 = vpop.f32.mrf.mxu0
    %2677 = vdwg.mxu0
    %v2678 = vadd.f32 %v2605, %v2675
    %v2679 = vxor.u32 %v2678, 2147483648
    %v2680 = vmul.f32 %v2679, 1.442695
    %v2681 = vpow.pop %v2680
    %v2682 = vadd.f32 %v2681, 1.0
    %v2683 = vrcp.pop %v2682
    %v2684 = vmul.f32 1.0, %v2683
    %v2685 = vadd.f32 %v2675, %v1695
    %2687 = vrot.lane.b32.xlu0 %v2685, 64
    %v2688 = vpop.permute.xlu0 %2687
    %v2690 = vmul.f32 %v2684, %v2688
    %2692 = vrot.lane.b32.xlu0 %v2690, 64
    %v2693 = vpop.permute.xlu0 %2692
    %v2695 = vadd.f32 %v2605, %v2693
    %v2696 = vtanh.pop %v2695
    %v2697 = vsub.f32 1.0, %v2684
    %2699 = vrot.lane.b32.xlu0 %v2696, 96
    %v2700 = vpop.permute.xlu0 %2699
    %v2702 = vmul.f32 %v2697, %v2700
    %v2703 = vmul.f32 %v2684, %v2210
    %v2704 = vadd.f32 %v2702, %v2703
    %v2705 = vadd.f32 %v2211, %v2704
    %2707 = vrot.lane.b32.xlu0 %v2704, 96
    %v2708 = vpop.permute.xlu0 %2707
    %v2709 = vsel %vm193, %v2708, 0
    %2711 = vmatprep.subr.mxu0 0.0
    %2712 = vmatpush1.msra.mxu0 0.0
    %2713 = vmatprep.subr.mxu0 0.0
    %2714 = vmatpush1.msra.mxu0 0.0
    %2715 = vmatprep.subr.mxu0 0.0
    %2716 = vmatpush1.msra.mxu0 0.0
    %2717 = vmatprep.subr.mxu0 0.0
    %2718 = vmatpush1.msra.mxu0 0.0
    %2719 = vmatprep.subr.mxu0 0.0
    %2720 = vmatpush1.msra.mxu0 0.0
    %2721 = vmatprep.subr.mxu0 0.0
    %2722 = vmatpush1.msra.mxu0 0.0
    %2723 = vmatprep.subr.mxu0 0.0
    %2724 = vmatpush1.msra.mxu0 0.0
    %2725 = vmatprep.subr.mxu0 0.0
    %2726 = vmatpush1.msra.mxu0 0.0
    %2727 = vmatprep.subr.mxu0 0.0
    %2728 = vmatpush1.msra.mxu0 0.0
    %2729 = vmatprep.subr.mxu0 0.0
    %2730 = vmatpush1.msra.mxu0 0.0
    %2731 = vmatprep.subr.mxu0 0.0
    %2732 = vmatpush1.msra.mxu0 0.0
    %2733 = vmatprep.subr.mxu0 0.0
    %2734 = vmatpush1.msra.mxu0 0.0
    %2735 = vmatprep.subr.mxu0 0.0
    %2736 = vmatpush1.msra.mxu0 %v1200
    %2737 = vmatprep.subr.mxu0 0.0
    %2738 = vmatpush1.msra.mxu0 %v1199
    %2739 = vmatprep.subr.mxu0 0.0
    %2740 = vmatpush1.msra.mxu0 %v1198
    %2741 = vmatprep.subr.mxu0 0.0
    %2742 = vmatpush1.msra.mxu0 %v1197
    %2743 = vmatprep.subr.mxu0 0.0
    %2744 = vmatpush2.msra.mxu0 0.0
    %2745 = vmatprep.subr.mxu0 0.0
    %2746 = vmatpush2.msra.mxu0 0.0
    %2747 = vmatprep.subr.mxu0 0.0
    %2748 = vmatpush2.msra.mxu0 0.0
    %2749 = vmatprep.subr.mxu0 0.0
    %2750 = vmatpush2.msra.mxu0 0.0
    %2751 = vmatprep.subr.mxu0 0.0
    %2752 = vmatpush2.msra.mxu0 0.0
    %2753 = vmatprep.subr.mxu0 0.0
    %2754 = vmatpush2.msra.mxu0 0.0
    %2755 = vmatprep.subr.mxu0 0.0
    %2756 = vmatpush2.msra.mxu0 0.0
    %2757 = vmatprep.subr.mxu0 0.0
    %2758 = vmatpush2.msra.mxu0 0.0
    %2759 = vmatprep.subr.mxu0 0.0
    %2760 = vmatpush2.msra.mxu0 0.0
    %2761 = vmatprep.subr.mxu0 0.0
    %2762 = vmatpush2.msra.mxu0 0.0
    %2763 = vmatprep.subr.mxu0 0.0
    %2764 = vmatpush2.msra.mxu0 0.0
    %2765 = vmatprep.subr.mxu0 0.0
    %2766 = vmatpush2.msra.mxu0 0.0
    %2767 = vmatprep.subr.mxu0 0.0
    %2768 = vmatpush2.msra.mxu0 0.0
    %2769 = vmatprep.subr.mxu0 0.0
    %2770 = vmatpush2.msra.mxu0 0.0
    %2771 = vmatprep.subr.mxu0 0.0
    %2772 = vmatpush2.msra.mxu0 0.0
    %2773 = vmatprep.subr.mxu0 0.0
    %2774 = vmatpush2.msra.mxu0 0.0
    %2775 = vmatprep.mubr.f32.mxu0 0.0
    %2776 = vmatmul.mubr.f32.gmra.mxu0 %v2709
    %v2777 = vpop.f32.mrf.mxu0
    %v2778 = vadd.f32 0.0, %v2777
    %v2779 = vpop.f32.mrf.mxu0
    %2780 = vdwg.mxu0
    %v2782 = vrot.slane %v2778, 2
    %v2784 = vadd.f32 %v1103, %v2782
    %vm2785 = vcmask 64518
    %v2786 = vsel %vm2785, %v2784, -inf
    %2787 = vmax.xlane.f32.xlu0 %v2786
    %v2788 = vpop.xlane.xlu0 %2787
    %v2789 = vsub.f32 %v2784, %v2788
    %v2790 = vmul.f32 %v2789, 1.442695
    %v2791 = vpow.pop %v2790
    %v2792 = vsel %vm2785, %v2791, 0.0
    %2793 = vadd.xlane.f32.xlu0 %v2792
    %v2794 = vpop.xlane.xlu0 %2793
    %v2795 = vrcp.pop %v2794
    %v2796 = vmul.f32 %v2791, %v2795
    %s2797 = scalar_lea.vmem [#allocation18], 6
    %2798 = vst.msk [vmem:[%s2797 - $0x6] sm:$0xc0] %vm2785, %v2796
    %v2800 = vrot.slane %v2796, 6
    %v2801 = vsel %vm1314, %v2800, 0
    %2803 = vmatprep.subr.mxu0 0.0
    %2804 = vmatpush1.msra.mxu0 0.0
    %2805 = vmatprep.subr.mxu0 0.0
    %2806 = vmatpush1.msra.mxu0 0.0
    %2807 = vmatprep.subr.mxu0 0.0
    %2808 = vmatpush1.msra.mxu0 0.0
    %2809 = vmatprep.subr.mxu0 0.0
    %2810 = vmatpush1.msra.mxu0 0.0
    %2811 = vmatprep.subr.mxu0 0.0
    %2812 = vmatpush1.msra.mxu0 0.0
    %2813 = vmatprep.subr.mxu0 0.0
    %2814 = vmatpush1.msra.mxu0 0.0
    %2815 = vmatprep.subr.mxu0 0.0
    %2816 = vmatpush1.msra.mxu0 0.0
    %2817 = vmatprep.subr.mxu0 0.0
    %2818 = vmatpush1.msra.mxu0 0.0
    %2819 = vmatprep.subr.mxu0 0.0
    %2820 = vmatpush1.msra.mxu0 0.0
    %2821 = vmatprep.subr.mxu0 0.0
    %2822 = vmatpush1.msra.mxu0 0.0
    %2823 = vmatprep.subr.mxu0 0.0
    %2824 = vmatpush1.msra.mxu0 0.0
    %2825 = vmatprep.subr.mxu0 0.0
    %2826 = vmatpush1.msra.mxu0 0.0
    %2827 = vmatprep.subr.mxu0 0.0
    %2828 = vmatpush1.msra.mxu0 0.0
    %2829 = vmatprep.subr.mxu0 0.0
    %2830 = vmatpush1.msra.mxu0 0.0
    %2831 = vmatprep.subr.mxu0 0.0
    %2832 = vmatpush1.msra.mxu0 0.0
    %2833 = vmatprep.subr.mxu0 0.0
    %2834 = vmatpush1.msra.mxu0 %v1312
    %2835 = vmatprep.subr.mxu0 0.0
    %2836 = vmatpush2.msra.mxu0 0.0
    %2837 = vmatprep.subr.mxu0 0.0
    %2838 = vmatpush2.msra.mxu0 0.0
    %2839 = vmatprep.subr.mxu0 0.0
    %2840 = vmatpush2.msra.mxu0 0.0
    %2841 = vmatprep.subr.mxu0 0.0
    %2842 = vmatpush2.msra.mxu0 0.0
    %2843 = vmatprep.subr.mxu0 0.0
    %2844 = vmatpush2.msra.mxu0 0.0
    %2845 = vmatprep.subr.mxu0 0.0
    %2846 = vmatpush2.msra.mxu0 0.0
    %2847 = vmatprep.subr.mxu0 0.0
    %2848 = vmatpush2.msra.mxu0 0.0
    %2849 = vmatprep.subr.mxu0 0.0
    %2850 = vmatpush2.msra.mxu0 0.0
    %2851 = vmatprep.subr.mxu0 0.0
    %2852 = vmatpush2.msra.mxu0 0.0
    %2853 = vmatprep.subr.mxu0 0.0
    %2854 = vmatpush2.msra.mxu0 0.0
    %2855 = vmatprep.subr.mxu0 0.0
    %2856 = vmatpush2.msra.mxu0 0.0
    %2857 = vmatprep.subr.mxu0 0.0
    %2858 = vmatpush2.msra.mxu0 0.0
    %2859 = vmatprep.subr.mxu0 0.0
    %2860 = vmatpush2.msra.mxu0 0.0
    %2861 = vmatprep.subr.mxu0 0.0
    %2862 = vmatpush2.msra.mxu0 0.0
    %2863 = vmatprep.subr.mxu0 0.0
    %2864 = vmatpush2.msra.mxu0 0.0
    %2865 = vmatprep.subr.mxu0 0.0
    %2866 = vmatpush2.msra.mxu0 0.0
    %2867 = vmatprep.mubr.f32.mxu0 0.0
    %2868 = vmatmul.mubr.f32.gmra.mxu0 %v2801
    %v2869 = vpop.f32.mrf.mxu0
    %v2870 = vadd.f32 0.0, %v2869
    %v2871 = vpop.f32.mrf.mxu0
    %2872 = vdwg.mxu0
    %v2873 = vrot.slane %v2796, 7
    %v2874 = vsel %vm1314, %v2873, 0
    %2876 = vmatprep.subr.mxu0 0.0
    %2877 = vmatpush1.msra.mxu0 0.0
    %2878 = vmatprep.subr.mxu0 0.0
    %2879 = vmatpush1.msra.mxu0 0.0
    %2880 = vmatprep.subr.mxu0 0.0
    %2881 = vmatpush1.msra.mxu0 0.0
    %2882 = vmatprep.subr.mxu0 0.0
    %2883 = vmatpush1.msra.mxu0 0.0
    %2884 = vmatprep.subr.mxu0 0.0
    %2885 = vmatpush1.msra.mxu0 0.0
    %2886 = vmatprep.subr.mxu0 0.0
    %2887 = vmatpush1.msra.mxu0 0.0
    %2888 = vmatprep.subr.mxu0 0.0
    %2889 = vmatpush1.msra.mxu0 0.0
    %2890 = vmatprep.subr.mxu0 0.0
    %2891 = vmatpush1.msra.mxu0 0.0
    %2892 = vmatprep.subr.mxu0 0.0
    %2893 = vmatpush1.msra.mxu0 0.0
    %2894 = vmatprep.subr.mxu0 0.0
    %2895 = vmatpush1.msra.mxu0 0.0
    %2896 = vmatprep.subr.mxu0 0.0
    %2897 = vmatpush1.msra.mxu0 0.0
    %2898 = vmatprep.subr.mxu0 0.0
    %2899 = vmatpush1.msra.mxu0 0.0
    %2900 = vmatprep.subr.mxu0 0.0
    %2901 = vmatpush1.msra.mxu0 0.0
    %2902 = vmatprep.subr.mxu0 0.0
    %2903 = vmatpush1.msra.mxu0 0.0
    %2904 = vmatprep.subr.mxu0 0.0
    %2905 = vmatpush1.msra.mxu0 0.0
    %2906 = vmatprep.subr.mxu0 0.0
    %2907 = vmatpush1.msra.mxu0 %v1391
    %2908 = vmatprep.subr.mxu0 0.0
    %2909 = vmatpush2.msra.mxu0 0.0
    %2910 = vmatprep.subr.mxu0 0.0
    %2911 = vmatpush2.msra.mxu0 0.0
    %2912 = vmatprep.subr.mxu0 0.0
    %2913 = vmatpush2.msra.mxu0 0.0
    %2914 = vmatprep.subr.mxu0 0.0
    %2915 = vmatpush2.msra.mxu0 0.0
    %2916 = vmatprep.subr.mxu0 0.0
    %2917 = vmatpush2.msra.mxu0 0.0
    %2918 = vmatprep.subr.mxu0 0.0
    %2919 = vmatpush2.msra.mxu0 0.0
    %2920 = vmatprep.subr.mxu0 0.0
    %2921 = vmatpush2.msra.mxu0 0.0
    %2922 = vmatprep.subr.mxu0 0.0
    %2923 = vmatpush2.msra.mxu0 0.0
    %2924 = vmatprep.subr.mxu0 0.0
    %2925 = vmatpush2.msra.mxu0 0.0
    %2926 = vmatprep.subr.mxu0 0.0
    %2927 = vmatpush2.msra.mxu0 0.0
    %2928 = vmatprep.subr.mxu0 0.0
    %2929 = vmatpush2.msra.mxu0 0.0
    %2930 = vmatprep.subr.mxu0 0.0
    %2931 = vmatpush2.msra.mxu0 0.0
    %2932 = vmatprep.subr.mxu0 0.0
    %2933 = vmatpush2.msra.mxu0 0.0
    %2934 = vmatprep.subr.mxu0 0.0
    %2935 = vmatpush2.msra.mxu0 0.0
    %2936 = vmatprep.subr.mxu0 0.0
    %2937 = vmatpush2.msra.mxu0 0.0
    %2938 = vmatprep.subr.mxu0 0.0
    %2939 = vmatpush2.msra.mxu0 0.0
    %2940 = vmatprep.mubr.f32.mxu0 0.0
    %2941 = vmatmul.mubr.f32.gmra.mxu0 %v2874
    %v2942 = vpop.f32.mrf.mxu0
    %v2943 = vadd.f32 0.0, %v2942
    %v2944 = vpop.f32.mrf.mxu0
    %2945 = vdwg.mxu0
    %v2947 = vrot.slane %v2943, 7
    %v2949 = vsel %vm986, %v2870, %v2947
    %v2951 = vsel %vm193, %v2949, 0
    %2953 = vmatprep.subr.mxu0 0.0
    %2954 = vmatpush1.msra.mxu0 0.0
    %2955 = vmatprep.subr.mxu0 0.0
    %2956 = vmatpush1.msra.mxu0 0.0
    %2957 = vmatprep.subr.mxu0 0.0
    %2958 = vmatpush1.msra.mxu0 0.0
    %2959 = vmatprep.subr.mxu0 0.0
    %2960 = vmatpush1.msra.mxu0 0.0
    %2961 = vmatprep.subr.mxu0 0.0
    %2962 = vmatpush1.msra.mxu0 0.0
    %2963 = vmatprep.subr.mxu0 0.0
    %2964 = vmatpush1.msra.mxu0 0.0
    %2965 = vmatprep.subr.mxu0 0.0
    %2966 = vmatpush1.msra.mxu0 0.0
    %2967 = vmatprep.subr.mxu0 0.0
    %2968 = vmatpush1.msra.mxu0 0.0
    %2969 = vmatprep.subr.mxu0 0.0
    %2970 = vmatpush1.msra.mxu0 0.0
    %2971 = vmatprep.subr.mxu0 0.0
    %2972 = vmatpush1.msra.mxu0 0.0
    %2973 = vmatprep.subr.mxu0 0.0
    %2974 = vmatpush1.msra.mxu0 0.0
    %2975 = vmatprep.subr.mxu0 0.0
    %2976 = vmatpush1.msra.mxu0 0.0
    %2977 = vmatprep.subr.mxu0 0.0
    %2978 = vmatpush1.msra.mxu0 %v1204
    %2979 = vmatprep.subr.mxu0 0.0
    %2980 = vmatpush1.msra.mxu0 %v1203
    %2981 = vmatprep.subr.mxu0 0.0
    %2982 = vmatpush1.msra.mxu0 %v1202
    %2983 = vmatprep.subr.mxu0 0.0
    %2984 = vmatpush1.msra.mxu0 %v1201
    %2985 = vmatprep.subr.mxu0 0.0
    %2986 = vmatpush2.msra.mxu0 0.0
    %2987 = vmatprep.subr.mxu0 0.0
    %2988 = vmatpush2.msra.mxu0 0.0
    %2989 = vmatprep.subr.mxu0 0.0
    %2990 = vmatpush2.msra.mxu0 0.0
    %2991 = vmatprep.subr.mxu0 0.0
    %2992 = vmatpush2.msra.mxu0 0.0
    %2993 = vmatprep.subr.mxu0 0.0
    %2994 = vmatpush2.msra.mxu0 0.0
    %2995 = vmatprep.subr.mxu0 0.0
    %2996 = vmatpush2.msra.mxu0 0.0
    %2997 = vmatprep.subr.mxu0 0.0
    %2998 = vmatpush2.msra.mxu0 0.0
    %2999 = vmatprep.subr.mxu0 0.0
    %3000 = vmatpush2.msra.mxu0 0.0
    %3001 = vmatprep.subr.mxu0 0.0
    %3002 = vmatpush2.msra.mxu0 0.0
    %3003 = vmatprep.subr.mxu0 0.0
    %3004 = vmatpush2.msra.mxu0 0.0
    %3005 = vmatprep.subr.mxu0 0.0
    %3006 = vmatpush2.msra.mxu0 0.0
    %3007 = vmatprep.subr.mxu0 0.0
    %3008 = vmatpush2.msra.mxu0 0.0
    %3009 = vmatprep.subr.mxu0 0.0
    %3010 = vmatpush2.msra.mxu0 0.0
    %3011 = vmatprep.subr.mxu0 0.0
    %3012 = vmatpush2.msra.mxu0 0.0
    %3013 = vmatprep.subr.mxu0 0.0
    %3014 = vmatpush2.msra.mxu0 0.0
    %3015 = vmatprep.subr.mxu0 0.0
    %3016 = vmatpush2.msra.mxu0 0.0
    %3017 = vmatprep.mubr.f32.mxu0 0.0
    %3018 = vmatmul.mubr.f32.gmra.mxu0 %v2951
    %v3019 = vpop.f32.mrf.mxu0
    %v3020 = vadd.f32 0.0, %v3019
    %v3021 = vpop.f32.mrf.mxu0
    %3022 = vdwg.mxu0
    %v3024 = vrot.slane %v3020, 2
    %v3026 = vadd.f32 %v1189, %v3024
    %v3027 = vmax.f32 %v3026, 0.0
    %v3029 = vrot.slane %v3027, 6
    %v3030 = vsel %vm193, %v3029, 0
    %3032 = vmatprep.subr.mxu0 0.0
    %3033 = vmatpush1.msra.mxu0 0.0
    %3034 = vmatprep.subr.mxu0 0.0
    %3035 = vmatpush1.msra.mxu0 0.0
    %3036 = vmatprep.subr.mxu0 0.0
    %3037 = vmatpush1.msra.mxu0 0.0
    %3038 = vmatprep.subr.mxu0 0.0
    %3039 = vmatpush1.msra.mxu0 0.0
    %3040 = vmatprep.subr.mxu0 0.0
    %3041 = vmatpush1.msra.mxu0 0.0
    %3042 = vmatprep.subr.mxu0 0.0
    %3043 = vmatpush1.msra.mxu0 0.0
    %3044 = vmatprep.subr.mxu0 0.0
    %3045 = vmatpush1.msra.mxu0 0.0
    %3046 = vmatprep.subr.mxu0 0.0
    %3047 = vmatpush1.msra.mxu0 0.0
    %3048 = vmatprep.subr.mxu0 0.0
    %3049 = vmatpush1.msra.mxu0 0.0
    %3050 = vmatprep.subr.mxu0 0.0
    %3051 = vmatpush1.msra.mxu0 0.0
    %3052 = vmatprep.subr.mxu0 0.0
    %3053 = vmatpush1.msra.mxu0 0.0
    %3054 = vmatprep.subr.mxu0 0.0
    %3055 = vmatpush1.msra.mxu0 0.0
    %3056 = vmatprep.subr.mxu0 0.0
    %3057 = vmatpush1.msra.mxu0 %v1208
    %3058 = vmatprep.subr.mxu0 0.0
    %3059 = vmatpush1.msra.mxu0 %v1207
    %3060 = vmatprep.subr.mxu0 0.0
    %3061 = vmatpush1.msra.mxu0 %v1206
    %3062 = vmatprep.subr.mxu0 0.0
    %3063 = vmatpush1.msra.mxu0 %v1205
    %3064 = vmatprep.subr.mxu0 0.0
    %3065 = vmatpush2.msra.mxu0 0.0
    %3066 = vmatprep.subr.mxu0 0.0
    %3067 = vmatpush2.msra.mxu0 0.0
    %3068 = vmatprep.subr.mxu0 0.0
    %3069 = vmatpush2.msra.mxu0 0.0
    %3070 = vmatprep.subr.mxu0 0.0
    %3071 = vmatpush2.msra.mxu0 0.0
    %3072 = vmatprep.subr.mxu0 0.0
    %3073 = vmatpush2.msra.mxu0 0.0
    %3074 = vmatprep.subr.mxu0 0.0
    %3075 = vmatpush2.msra.mxu0 0.0
    %3076 = vmatprep.subr.mxu0 0.0
    %3077 = vmatpush2.msra.mxu0 0.0
    %3078 = vmatprep.subr.mxu0 0.0
    %3079 = vmatpush2.msra.mxu0 0.0
    %3080 = vmatprep.subr.mxu0 0.0
    %3081 = vmatpush2.msra.mxu0 0.0
    %3082 = vmatprep.subr.mxu0 0.0
    %3083 = vmatpush2.msra.mxu0 0.0
    %3084 = vmatprep.subr.mxu0 0.0
    %3085 = vmatpush2.msra.mxu0 0.0
    %3086 = vmatprep.subr.mxu0 0.0
    %3087 = vmatpush2.msra.mxu0 0.0
    %3088 = vmatprep.subr.mxu0 0.0
    %3089 = vmatpush2.msra.mxu0 0.0
    %3090 = vmatprep.subr.mxu0 0.0
    %3091 = vmatpush2.msra.mxu0 0.0
    %3092 = vmatprep.subr.mxu0 0.0
    %3093 = vmatpush2.msra.mxu0 0.0
    %3094 = vmatprep.subr.mxu0 0.0
    %3095 = vmatpush2.msra.mxu0 0.0
    %3096 = vmatprep.mubr.f32.mxu0 0.0
    %3097 = vmatmul.mubr.f32.gmra.mxu0 %v3030
    %v3098 = vpop.f32.mrf.mxu0
    %v3099 = vadd.f32 %v1218, %v3098
    %v3100 = vpop.f32.mrf.mxu0
    %3101 = vdwg.mxu0
    %3102 = vmatprep.subr.mxu0 0.0
    %3103 = vmatpush1.msra.mxu0 0.0
    %3104 = vmatprep.subr.mxu0 0.0
    %3105 = vmatpush1.msra.mxu0 0.0
    %3106 = vmatprep.subr.mxu0 0.0
    %3107 = vmatpush1.msra.mxu0 0.0
    %3108 = vmatprep.subr.mxu0 0.0
    %3109 = vmatpush1.msra.mxu0 0.0
    %3110 = vmatprep.subr.mxu0 0.0
    %3111 = vmatpush1.msra.mxu0 0.0
    %3112 = vmatprep.subr.mxu0 0.0
    %3113 = vmatpush1.msra.mxu0 0.0
    %3114 = vmatprep.subr.mxu0 0.0
    %3115 = vmatpush1.msra.mxu0 0.0
    %3116 = vmatprep.subr.mxu0 0.0
    %3117 = vmatpush1.msra.mxu0 0.0
    %3118 = vmatprep.subr.mxu0 0.0
    %3119 = vmatpush1.msra.mxu0 0.0
    %3120 = vmatprep.subr.mxu0 0.0
    %3121 = vmatpush1.msra.mxu0 0.0
    %3122 = vmatprep.subr.mxu0 0.0
    %3123 = vmatpush1.msra.mxu0 0.0
    %3124 = vmatprep.subr.mxu0 0.0
    %3125 = vmatpush1.msra.mxu0 0.0
    %3126 = vmatprep.subr.mxu0 0.0
    %3127 = vmatpush1.msra.mxu0 %v1212
    %3128 = vmatprep.subr.mxu0 0.0
    %3129 = vmatpush1.msra.mxu0 %v1211
    %3130 = vmatprep.subr.mxu0 0.0
    %3131 = vmatpush1.msra.mxu0 %v1210
    %3132 = vmatprep.subr.mxu0 0.0
    %3133 = vmatpush1.msra.mxu0 %v1209
    %3134 = vmatprep.subr.mxu0 0.0
    %3135 = vmatpush2.msra.mxu0 0.0
    %3136 = vmatprep.subr.mxu0 0.0
    %3137 = vmatpush2.msra.mxu0 0.0
    %3138 = vmatprep.subr.mxu0 0.0
    %3139 = vmatpush2.msra.mxu0 0.0
    %3140 = vmatprep.subr.mxu0 0.0
    %3141 = vmatpush2.msra.mxu0 0.0
    %3142 = vmatprep.subr.mxu0 0.0
    %3143 = vmatpush2.msra.mxu0 0.0
    %3144 = vmatprep.subr.mxu0 0.0
    %3145 = vmatpush2.msra.mxu0 0.0
    %3146 = vmatprep.subr.mxu0 0.0
    %3147 = vmatpush2.msra.mxu0 0.0
    %3148 = vmatprep.subr.mxu0 0.0
    %3149 = vmatpush2.msra.mxu0 0.0
    %3150 = vmatprep.subr.mxu0 0.0
    %3151 = vmatpush2.msra.mxu0 0.0
    %3152 = vmatprep.subr.mxu0 0.0
    %3153 = vmatpush2.msra.mxu0 0.0
    %3154 = vmatprep.subr.mxu0 0.0
    %3155 = vmatpush2.msra.mxu0 0.0
    %3156 = vmatprep.subr.mxu0 0.0
    %3157 = vmatpush2.msra.mxu0 0.0
    %3158 = vmatprep.subr.mxu0 0.0
    %3159 = vmatpush2.msra.mxu0 0.0
    %3160 = vmatprep.subr.mxu0 0.0
    %3161 = vmatpush2.msra.mxu0 0.0
    %3162 = vmatprep.subr.mxu0 0.0
    %3163 = vmatpush2.msra.mxu0 0.0
    %3164 = vmatprep.subr.mxu0 0.0
    %3165 = vmatpush2.msra.mxu0 0.0
    %3166 = vmatprep.mubr.f32.mxu0 0.0
    %3167 = vmatmul.mubr.f32.gmra.mxu0 %v2709
    %v3168 = vpop.f32.mrf.mxu0
    %v3169 = vadd.f32 0.0, %v3168
    %v3170 = vpop.f32.mrf.mxu0
    %3171 = vdwg.mxu0
    %v3172 = vadd.f32 %v3099, %v3169
    %v3173 = vxor.u32 %v3172, 2147483648
    %v3174 = vmul.f32 %v3173, 1.442695
    %v3175 = vpow.pop %v3174
    %v3176 = vadd.f32 %v3175, 1.0
    %v3177 = vrcp.pop %v3176
    %v3178 = vmul.f32 1.0, %v3177
    %v3179 = vadd.f32 %v3169, %v1695
    %3181 = vrot.lane.b32.xlu0 %v3179, 64
    %v3182 = vpop.permute.xlu0 %3181
    %v3184 = vmul.f32 %v3178, %v3182
    %3186 = vrot.lane.b32.xlu0 %v3184, 64
    %v3187 = vpop.permute.xlu0 %3186
    %v3189 = vadd.f32 %v3099, %v3187
    %v3190 = vtanh.pop %v3189
    %v3191 = vsub.f32 1.0, %v3178
    %3193 = vrot.lane.b32.xlu0 %v3190, 96
    %v3194 = vpop.permute.xlu0 %3193
    %v3196 = vmul.f32 %v3191, %v3194
    %v3197 = vmul.f32 %v3178, %v2704
    %v3198 = vadd.f32 %v3196, %v3197
    %v3199 = vadd.f32 %v2705, %v3198
    %3201 = vrot.lane.b32.xlu0 %v3198, 96
    %v3202 = vpop.permute.xlu0 %3201
    %v3203 = vsel %vm193, %v3202, 0
    %3205 = vmatprep.subr.mxu0 0.0
    %3206 = vmatpush1.msra.mxu0 0.0
    %3207 = vmatprep.subr.mxu0 0.0
    %3208 = vmatpush1.msra.mxu0 0.0
    %3209 = vmatprep.subr.mxu0 0.0
    %3210 = vmatpush1.msra.mxu0 0.0
    %3211 = vmatprep.subr.mxu0 0.0
    %3212 = vmatpush1.msra.mxu0 0.0
    %3213 = vmatprep.subr.mxu0 0.0
    %3214 = vmatpush1.msra.mxu0 0.0
    %3215 = vmatprep.subr.mxu0 0.0
    %3216 = vmatpush1.msra.mxu0 0.0
    %3217 = vmatprep.subr.mxu0 0.0
    %3218 = vmatpush1.msra.mxu0 0.0
    %3219 = vmatprep.subr.mxu0 0.0
    %3220 = vmatpush1.msra.mxu0 0.0
    %3221 = vmatprep.subr.mxu0 0.0
    %3222 = vmatpush1.msra.mxu0 0.0
    %3223 = vmatprep.subr.mxu0 0.0
    %3224 = vmatpush1.msra.mxu0 0.0
    %3225 = vmatprep.subr.mxu0 0.0
    %3226 = vmatpush1.msra.mxu0 0.0
    %3227 = vmatprep.subr.mxu0 0.0
    %3228 = vmatpush1.msra.mxu0 0.0
    %3229 = vmatprep.subr.mxu0 0.0
    %3230 = vmatpush1.msra.mxu0 %v1200
    %3231 = vmatprep.subr.mxu0 0.0
    %3232 = vmatpush1.msra.mxu0 %v1199
    %3233 = vmatprep.subr.mxu0 0.0
    %3234 = vmatpush1.msra.mxu0 %v1198
    %3235 = vmatprep.subr.mxu0 0.0
    %3236 = vmatpush1.msra.mxu0 %v1197
    %3237 = vmatprep.subr.mxu0 0.0
    %3238 = vmatpush2.msra.mxu0 0.0
    %3239 = vmatprep.subr.mxu0 0.0
    %3240 = vmatpush2.msra.mxu0 0.0
    %3241 = vmatprep.subr.mxu0 0.0
    %3242 = vmatpush2.msra.mxu0 0.0
    %3243 = vmatprep.subr.mxu0 0.0
    %3244 = vmatpush2.msra.mxu0 0.0
    %3245 = vmatprep.subr.mxu0 0.0
    %3246 = vmatpush2.msra.mxu0 0.0
    %3247 = vmatprep.subr.mxu0 0.0
    %3248 = vmatpush2.msra.mxu0 0.0
    %3249 = vmatprep.subr.mxu0 0.0
    %3250 = vmatpush2.msra.mxu0 0.0
    %3251 = vmatprep.subr.mxu0 0.0
    %3252 = vmatpush2.msra.mxu0 0.0
    %3253 = vmatprep.subr.mxu0 0.0
    %3254 = vmatpush2.msra.mxu0 0.0
    %3255 = vmatprep.subr.mxu0 0.0
    %3256 = vmatpush2.msra.mxu0 0.0
    %3257 = vmatprep.subr.mxu0 0.0
    %3258 = vmatpush2.msra.mxu0 0.0
    %3259 = vmatprep.subr.mxu0 0.0
    %3260 = vmatpush2.msra.mxu0 0.0
    %3261 = vmatprep.subr.mxu0 0.0
    %3262 = vmatpush2.msra.mxu0 0.0
    %3263 = vmatprep.subr.mxu0 0.0
    %3264 = vmatpush2.msra.mxu0 0.0
    %3265 = vmatprep.subr.mxu0 0.0
    %3266 = vmatpush2.msra.mxu0 0.0
    %3267 = vmatprep.subr.mxu0 0.0
    %3268 = vmatpush2.msra.mxu0 0.0
    %3269 = vmatprep.mubr.f32.mxu0 0.0
    %3270 = vmatmul.mubr.f32.gmra.mxu0 %v3203
    %v3271 = vpop.f32.mrf.mxu0
    %v3272 = vadd.f32 0.0, %v3271
    %v3273 = vpop.f32.mrf.mxu0
    %3274 = vdwg.mxu0
    %v3275 = vadd.f32 %v1108, %v3272
    %v3276 = vsel %vm1297, %v3275, -inf
    %3277 = vmax.xlane.f32.xlu0 %v3276
    %v3278 = vpop.xlane.xlu0 %3277
    %v3279 = vsub.f32 %v3275, %v3278
    %v3280 = vmul.f32 %v3279, 1.442695
    %v3281 = vpow.pop %v3280
    %v3282 = vsel %vm1297, %v3281, 0.0
    %3283 = vadd.xlane.f32.xlu0 %v3282
    %v3284 = vpop.xlane.xlu0 %3283
    %v3285 = vrcp.pop %v3284
    %v3286 = vmul.f32 %v3281, %v3285
    %s3287 = scalar_lea.vmem [#allocation18], 8
    %3288 = vst.msk [vmem:[%s3287] sm:$0x3] %vm1297, %v3286
    %v3290 = vsel %vm1314, %v3286, 0
    %3292 = vmatprep.subr.mxu0 0.0
    %3293 = vmatpush1.msra.mxu0 0.0
    %3294 = vmatprep.subr.mxu0 0.0
    %3295 = vmatpush1.msra.mxu0 0.0
    %3296 = vmatprep.subr.mxu0 0.0
    %3297 = vmatpush1.msra.mxu0 0.0
    %3298 = vmatprep.subr.mxu0 0.0
    %3299 = vmatpush1.msra.mxu0 0.0
    %3300 = vmatprep.subr.mxu0 0.0
    %3301 = vmatpush1.msra.mxu0 0.0
    %3302 = vmatprep.subr.mxu0 0.0
    %3303 = vmatpush1.msra.mxu0 0.0
    %3304 = vmatprep.subr.mxu0 0.0
    %3305 = vmatpush1.msra.mxu0 0.0
    %3306 = vmatprep.subr.mxu0 0.0
    %3307 = vmatpush1.msra.mxu0 0.0
    %3308 = vmatprep.subr.mxu0 0.0
    %3309 = vmatpush1.msra.mxu0 0.0
    %3310 = vmatprep.subr.mxu0 0.0
    %3311 = vmatpush1.msra.mxu0 0.0
    %3312 = vmatprep.subr.mxu0 0.0
    %3313 = vmatpush1.msra.mxu0 0.0
    %3314 = vmatprep.subr.mxu0 0.0
    %3315 = vmatpush1.msra.mxu0 0.0
    %3316 = vmatprep.subr.mxu0 0.0
    %3317 = vmatpush1.msra.mxu0 0.0
    %3318 = vmatprep.subr.mxu0 0.0
    %3319 = vmatpush1.msra.mxu0 0.0
    %3320 = vmatprep.subr.mxu0 0.0
    %3321 = vmatpush1.msra.mxu0 0.0
    %3322 = vmatprep.subr.mxu0 0.0
    %3323 = vmatpush1.msra.mxu0 %v1312
    %3324 = vmatprep.subr.mxu0 0.0
    %3325 = vmatpush2.msra.mxu0 0.0
    %3326 = vmatprep.subr.mxu0 0.0
    %3327 = vmatpush2.msra.mxu0 0.0
    %3328 = vmatprep.subr.mxu0 0.0
    %3329 = vmatpush2.msra.mxu0 0.0
    %3330 = vmatprep.subr.mxu0 0.0
    %3331 = vmatpush2.msra.mxu0 0.0
    %3332 = vmatprep.subr.mxu0 0.0
    %3333 = vmatpush2.msra.mxu0 0.0
    %3334 = vmatprep.subr.mxu0 0.0
    %3335 = vmatpush2.msra.mxu0 0.0
    %3336 = vmatprep.subr.mxu0 0.0
    %3337 = vmatpush2.msra.mxu0 0.0
    %3338 = vmatprep.subr.mxu0 0.0
    %3339 = vmatpush2.msra.mxu0 0.0
    %3340 = vmatprep.subr.mxu0 0.0
    %3341 = vmatpush2.msra.mxu0 0.0
    %3342 = vmatprep.subr.mxu0 0.0
    %3343 = vmatpush2.msra.mxu0 0.0
    %3344 = vmatprep.subr.mxu0 0.0
    %3345 = vmatpush2.msra.mxu0 0.0
    %3346 = vmatprep.subr.mxu0 0.0
    %3347 = vmatpush2.msra.mxu0 0.0
    %3348 = vmatprep.subr.mxu0 0.0
    %3349 = vmatpush2.msra.mxu0 0.0
    %3350 = vmatprep.subr.mxu0 0.0
    %3351 = vmatpush2.msra.mxu0 0.0
    %3352 = vmatprep.subr.mxu0 0.0
    %3353 = vmatpush2.msra.mxu0 0.0
    %3354 = vmatprep.subr.mxu0 0.0
    %3355 = vmatpush2.msra.mxu0 0.0
    %3356 = vmatprep.mubr.f32.mxu0 0.0
    %3357 = vmatmul.mubr.f32.gmra.mxu0 %v3290
    %v3358 = vpop.f32.mrf.mxu0
    %v3359 = vadd.f32 0.0, %v3358
    %v3360 = vpop.f32.mrf.mxu0
    %3361 = vdwg.mxu0
    %v3362 = vrot.slane %v3286, 1
    %v3363 = vsel %vm1314, %v3362, 0
    %3365 = vmatprep.subr.mxu0 0.0
    %3366 = vmatpush1.msra.mxu0 0.0
    %3367 = vmatprep.subr.mxu0 0.0
    %3368 = vmatpush1.msra.mxu0 0.0
    %3369 = vmatprep.subr.mxu0 0.0
    %3370 = vmatpush1.msra.mxu0 0.0
    %3371 = vmatprep.subr.mxu0 0.0
    %3372 = vmatpush1.msra.mxu0 0.0
    %3373 = vmatprep.subr.mxu0 0.0
    %3374 = vmatpush1.msra.mxu0 0.0
    %3375 = vmatprep.subr.mxu0 0.0
    %3376 = vmatpush1.msra.mxu0 0.0
    %3377 = vmatprep.subr.mxu0 0.0
    %3378 = vmatpush1.msra.mxu0 0.0
    %3379 = vmatprep.subr.mxu0 0.0
    %3380 = vmatpush1.msra.mxu0 0.0
    %3381 = vmatprep.subr.mxu0 0.0
    %3382 = vmatpush1.msra.mxu0 0.0
    %3383 = vmatprep.subr.mxu0 0.0
    %3384 = vmatpush1.msra.mxu0 0.0
    %3385 = vmatprep.subr.mxu0 0.0
    %3386 = vmatpush1.msra.mxu0 0.0
    %3387 = vmatprep.subr.mxu0 0.0
    %3388 = vmatpush1.msra.mxu0 0.0
    %3389 = vmatprep.subr.mxu0 0.0
    %3390 = vmatpush1.msra.mxu0 0.0
    %3391 = vmatprep.subr.mxu0 0.0
    %3392 = vmatpush1.msra.mxu0 0.0
    %3393 = vmatprep.subr.mxu0 0.0
    %3394 = vmatpush1.msra.mxu0 0.0
    %3395 = vmatprep.subr.mxu0 0.0
    %3396 = vmatpush1.msra.mxu0 %v1391
    %3397 = vmatprep.subr.mxu0 0.0
    %3398 = vmatpush2.msra.mxu0 0.0
    %3399 = vmatprep.subr.mxu0 0.0
    %3400 = vmatpush2.msra.mxu0 0.0
    %3401 = vmatprep.subr.mxu0 0.0
    %3402 = vmatpush2.msra.mxu0 0.0
    %3403 = vmatprep.subr.mxu0 0.0
    %3404 = vmatpush2.msra.mxu0 0.0
    %3405 = vmatprep.subr.mxu0 0.0
    %3406 = vmatpush2.msra.mxu0 0.0
    %3407 = vmatprep.subr.mxu0 0.0
    %3408 = vmatpush2.msra.mxu0 0.0
    %3409 = vmatprep.subr.mxu0 0.0
    %3410 = vmatpush2.msra.mxu0 0.0
    %3411 = vmatprep.subr.mxu0 0.0
    %3412 = vmatpush2.msra.mxu0 0.0
    %3413 = vmatprep.subr.mxu0 0.0
    %3414 = vmatpush2.msra.mxu0 0.0
    %3415 = vmatprep.subr.mxu0 0.0
    %3416 = vmatpush2.msra.mxu0 0.0
    %3417 = vmatprep.subr.mxu0 0.0
    %3418 = vmatpush2.msra.mxu0 0.0
    %3419 = vmatprep.subr.mxu0 0.0
    %3420 = vmatpush2.msra.mxu0 0.0
    %3421 = vmatprep.subr.mxu0 0.0
    %3422 = vmatpush2.msra.mxu0 0.0
    %3423 = vmatprep.subr.mxu0 0.0
    %3424 = vmatpush2.msra.mxu0 0.0
    %3425 = vmatprep.subr.mxu0 0.0
    %3426 = vmatpush2.msra.mxu0 0.0
    %3427 = vmatprep.subr.mxu0 0.0
    %3428 = vmatpush2.msra.mxu0 0.0
    %3429 = vmatprep.mubr.f32.mxu0 0.0
    %3430 = vmatmul.mubr.f32.gmra.mxu0 %v3363
    %v3431 = vpop.f32.mrf.mxu0
    %v3432 = vadd.f32 0.0, %v3431
    %v3433 = vpop.f32.mrf.mxu0
    %3434 = vdwg.mxu0
    %v3436 = vrot.slane %v3432, 7
    %v3438 = vsel %vm986, %v3359, %v3436
    %v3440 = vsel %vm193, %v3438, 0
    %3442 = vmatprep.subr.mxu0 0.0
    %3443 = vmatpush1.msra.mxu0 0.0
    %3444 = vmatprep.subr.mxu0 0.0
    %3445 = vmatpush1.msra.mxu0 0.0
    %3446 = vmatprep.subr.mxu0 0.0
    %3447 = vmatpush1.msra.mxu0 0.0
    %3448 = vmatprep.subr.mxu0 0.0
    %3449 = vmatpush1.msra.mxu0 0.0
    %3450 = vmatprep.subr.mxu0 0.0
    %3451 = vmatpush1.msra.mxu0 0.0
    %3452 = vmatprep.subr.mxu0 0.0
    %3453 = vmatpush1.msra.mxu0 0.0
    %3454 = vmatprep.subr.mxu0 0.0
    %3455 = vmatpush1.msra.mxu0 0.0
    %3456 = vmatprep.subr.mxu0 0.0
    %3457 = vmatpush1.msra.mxu0 0.0
    %3458 = vmatprep.subr.mxu0 0.0
    %3459 = vmatpush1.msra.mxu0 0.0
    %3460 = vmatprep.subr.mxu0 0.0
    %3461 = vmatpush1.msra.mxu0 0.0
    %3462 = vmatprep.subr.mxu0 0.0
    %3463 = vmatpush1.msra.mxu0 0.0
    %3464 = vmatprep.subr.mxu0 0.0
    %3465 = vmatpush1.msra.mxu0 0.0
    %3466 = vmatprep.subr.mxu0 0.0
    %3467 = vmatpush1.msra.mxu0 %v1204
    %3468 = vmatprep.subr.mxu0 0.0
    %3469 = vmatpush1.msra.mxu0 %v1203
    %3470 = vmatprep.subr.mxu0 0.0
    %3471 = vmatpush1.msra.mxu0 %v1202
    %3472 = vmatprep.subr.mxu0 0.0
    %3473 = vmatpush1.msra.mxu0 %v1201
    %3474 = vmatprep.subr.mxu0 0.0
    %3475 = vmatpush2.msra.mxu0 0.0
    %3476 = vmatprep.subr.mxu0 0.0
    %3477 = vmatpush2.msra.mxu0 0.0
    %3478 = vmatprep.subr.mxu0 0.0
    %3479 = vmatpush2.msra.mxu0 0.0
    %3480 = vmatprep.subr.mxu0 0.0
    %3481 = vmatpush2.msra.mxu0 0.0
    %3482 = vmatprep.subr.mxu0 0.0
    %3483 = vmatpush2.msra.mxu0 0.0
    %3484 = vmatprep.subr.mxu0 0.0
    %3485 = vmatpush2.msra.mxu0 0.0
    %3486 = vmatprep.subr.mxu0 0.0
    %3487 = vmatpush2.msra.mxu0 0.0
    %3488 = vmatprep.subr.mxu0 0.0
    %3489 = vmatpush2.msra.mxu0 0.0
    %3490 = vmatprep.subr.mxu0 0.0
    %3491 = vmatpush2.msra.mxu0 0.0
    %3492 = vmatprep.subr.mxu0 0.0
    %3493 = vmatpush2.msra.mxu0 0.0
    %3494 = vmatprep.subr.mxu0 0.0
    %3495 = vmatpush2.msra.mxu0 0.0
    %3496 = vmatprep.subr.mxu0 0.0
    %3497 = vmatpush2.msra.mxu0 0.0
    %3498 = vmatprep.subr.mxu0 0.0
    %3499 = vmatpush2.msra.mxu0 0.0
    %3500 = vmatprep.subr.mxu0 0.0
    %3501 = vmatpush2.msra.mxu0 0.0
    %3502 = vmatprep.subr.mxu0 0.0
    %3503 = vmatpush2.msra.mxu0 0.0
    %3504 = vmatprep.subr.mxu0 0.0
    %3505 = vmatpush2.msra.mxu0 0.0
    %3506 = vmatprep.mubr.f32.mxu0 0.0
    %3507 = vmatmul.mubr.f32.gmra.mxu0 %v3440
    %v3508 = vpop.f32.mrf.mxu0
    %v3509 = vadd.f32 0.0, %v3508
    %v3510 = vpop.f32.mrf.mxu0
    %3511 = vdwg.mxu0
    %v3512 = vadd.f32 %v1194, %v3509
    %v3513 = vmax.f32 %v3512, 0.0
    %v3515 = vsel %vm193, %v3513, 0
    %3517 = vmatprep.subr.mxu0 0.0
    %3518 = vmatpush1.msra.mxu0 0.0
    %3519 = vmatprep.subr.mxu0 0.0
    %3520 = vmatpush1.msra.mxu0 0.0
    %3521 = vmatprep.subr.mxu0 0.0
    %3522 = vmatpush1.msra.mxu0 0.0
    %3523 = vmatprep.subr.mxu0 0.0
    %3524 = vmatpush1.msra.mxu0 0.0
    %3525 = vmatprep.subr.mxu0 0.0
    %3526 = vmatpush1.msra.mxu0 0.0
    %3527 = vmatprep.subr.mxu0 0.0
    %3528 = vmatpush1.msra.mxu0 0.0
    %3529 = vmatprep.subr.mxu0 0.0
    %3530 = vmatpush1.msra.mxu0 0.0
    %3531 = vmatprep.subr.mxu0 0.0
    %3532 = vmatpush1.msra.mxu0 0.0
    %3533 = vmatprep.subr.mxu0 0.0
    %3534 = vmatpush1.msra.mxu0 0.0
    %3535 = vmatprep.subr.mxu0 0.0
    %3536 = vmatpush1.msra.mxu0 0.0
    %3537 = vmatprep.subr.mxu0 0.0
    %3538 = vmatpush1.msra.mxu0 0.0
    %3539 = vmatprep.subr.mxu0 0.0
    %3540 = vmatpush1.msra.mxu0 0.0
    %3541 = vmatprep.subr.mxu0 0.0
    %3542 = vmatpush1.msra.mxu0 %v1208
    %3543 = vmatprep.subr.mxu0 0.0
    %3544 = vmatpush1.msra.mxu0 %v1207
    %3545 = vmatprep.subr.mxu0 0.0
    %3546 = vmatpush1.msra.mxu0 %v1206
    %3547 = vmatprep.subr.mxu0 0.0
    %3548 = vmatpush1.msra.mxu0 %v1205
    %3549 = vmatprep.subr.mxu0 0.0
    %3550 = vmatpush2.msra.mxu0 0.0
    %3551 = vmatprep.subr.mxu0 0.0
    %3552 = vmatpush2.msra.mxu0 0.0
    %3553 = vmatprep.subr.mxu0 0.0
    %3554 = vmatpush2.msra.mxu0 0.0
    %3555 = vmatprep.subr.mxu0 0.0
    %3556 = vmatpush2.msra.mxu0 0.0
    %3557 = vmatprep.subr.mxu0 0.0
    %3558 = vmatpush2.msra.mxu0 0.0
    %3559 = vmatprep.subr.mxu0 0.0
    %3560 = vmatpush2.msra.mxu0 0.0
    %3561 = vmatprep.subr.mxu0 0.0
    %3562 = vmatpush2.msra.mxu0 0.0
    %3563 = vmatprep.subr.mxu0 0.0
    %3564 = vmatpush2.msra.mxu0 0.0
    %3565 = vmatprep.subr.mxu0 0.0
    %3566 = vmatpush2.msra.mxu0 0.0
    %3567 = vmatprep.subr.mxu0 0.0
    %3568 = vmatpush2.msra.mxu0 0.0
    %3569 = vmatprep.subr.mxu0 0.0
    %3570 = vmatpush2.msra.mxu0 0.0
    %3571 = vmatprep.subr.mxu0 0.0
    %3572 = vmatpush2.msra.mxu0 0.0
    %3573 = vmatprep.subr.mxu0 0.0
    %3574 = vmatpush2.msra.mxu0 0.0
    %3575 = vmatprep.subr.mxu0 0.0
    %3576 = vmatpush2.msra.mxu0 0.0
    %3577 = vmatprep.subr.mxu0 0.0
    %3578 = vmatpush2.msra.mxu0 0.0
    %3579 = vmatprep.subr.mxu0 0.0
    %3580 = vmatpush2.msra.mxu0 0.0
    %3581 = vmatprep.mubr.f32.mxu0 0.0
    %3582 = vmatmul.mubr.f32.gmra.mxu0 %v3515
    %v3583 = vpop.f32.mrf.mxu0
    %v3584 = vadd.f32 %v1218, %v3583
    %v3585 = vpop.f32.mrf.mxu0
    %3586 = vdwg.mxu0
    %3587 = vmatprep.subr.mxu0 0.0
    %3588 = vmatpush1.msra.mxu0 0.0
    %3589 = vmatprep.subr.mxu0 0.0
    %3590 = vmatpush1.msra.mxu0 0.0
    %3591 = vmatprep.subr.mxu0 0.0
    %3592 = vmatpush1.msra.mxu0 0.0
    %3593 = vmatprep.subr.mxu0 0.0
    %3594 = vmatpush1.msra.mxu0 0.0
    %3595 = vmatprep.subr.mxu0 0.0
    %3596 = vmatpush1.msra.mxu0 0.0
    %3597 = vmatprep.subr.mxu0 0.0
    %3598 = vmatpush1.msra.mxu0 0.0
    %3599 = vmatprep.subr.mxu0 0.0
    %3600 = vmatpush1.msra.mxu0 0.0
    %3601 = vmatprep.subr.mxu0 0.0
    %3602 = vmatpush1.msra.mxu0 0.0
    %3603 = vmatprep.subr.mxu0 0.0
    %3604 = vmatpush1.msra.mxu0 0.0
    %3605 = vmatprep.subr.mxu0 0.0
    %3606 = vmatpush1.msra.mxu0 0.0
    %3607 = vmatprep.subr.mxu0 0.0
    %3608 = vmatpush1.msra.mxu0 0.0
    %3609 = vmatprep.subr.mxu0 0.0
    %3610 = vmatpush1.msra.mxu0 0.0
    %3611 = vmatprep.subr.mxu0 0.0
    %3612 = vmatpush1.msra.mxu0 %v1212
    %3613 = vmatprep.subr.mxu0 0.0
    %3614 = vmatpush1.msra.mxu0 %v1211
    %3615 = vmatprep.subr.mxu0 0.0
    %3616 = vmatpush1.msra.mxu0 %v1210
    %3617 = vmatprep.subr.mxu0 0.0
    %3618 = vmatpush1.msra.mxu0 %v1209
    %3619 = vmatprep.subr.mxu0 0.0
    %3620 = vmatpush2.msra.mxu0 0.0
    %3621 = vmatprep.subr.mxu0 0.0
    %3622 = vmatpush2.msra.mxu0 0.0
    %3623 = vmatprep.subr.mxu0 0.0
    %3624 = vmatpush2.msra.mxu0 0.0
    %3625 = vmatprep.subr.mxu0 0.0
    %3626 = vmatpush2.msra.mxu0 0.0
    %3627 = vmatprep.subr.mxu0 0.0
    %3628 = vmatpush2.msra.mxu0 0.0
    %3629 = vmatprep.subr.mxu0 0.0
    %3630 = vmatpush2.msra.mxu0 0.0
    %3631 = vmatprep.subr.mxu0 0.0
    %3632 = vmatpush2.msra.mxu0 0.0
    %3633 = vmatprep.subr.mxu0 0.0
    %3634 = vmatpush2.msra.mxu0 0.0
    %3635 = vmatprep.subr.mxu0 0.0
    %3636 = vmatpush2.msra.mxu0 0.0
    %3637 = vmatprep.subr.mxu0 0.0
    %3638 = vmatpush2.msra.mxu0 0.0
    %3639 = vmatprep.subr.mxu0 0.0
    %3640 = vmatpush2.msra.mxu0 0.0
    %3641 = vmatprep.subr.mxu0 0.0
    %3642 = vmatpush2.msra.mxu0 0.0
    %3643 = vmatprep.subr.mxu0 0.0
    %3644 = vmatpush2.msra.mxu0 0.0
    %3645 = vmatprep.subr.mxu0 0.0
    %3646 = vmatpush2.msra.mxu0 0.0
    %3647 = vmatprep.subr.mxu0 0.0
    %3648 = vmatpush2.msra.mxu0 0.0
    %3649 = vmatprep.subr.mxu0 0.0
    %3650 = vmatpush2.msra.mxu0 0.0
    %3651 = vmatprep.mubr.f32.mxu0 0.0
    %3652 = vmatmul.mubr.f32.gmra.mxu0 %v3203
    %v3653 = vpop.f32.mrf.mxu0
    %v3654 = vadd.f32 0.0, %v3653
    %v3655 = vpop.f32.mrf.mxu0
    %3656 = vdwg.mxu0
    %v3657 = vadd.f32 %v3584, %v3654
    %v3658 = vxor.u32 %v3657, 2147483648
    %v3659 = vmul.f32 %v3658, 1.442695
    %v3660 = vpow.pop %v3659
    %v3661 = vadd.f32 %v3660, 1.0
    %v3662 = vrcp.pop %v3661
    %v3663 = vmul.f32 1.0, %v3662
    %v3664 = vadd.f32 %v3654, %v1695
    %3666 = vrot.lane.b32.xlu0 %v3664, 64
    %v3667 = vpop.permute.xlu0 %3666
    %v3669 = vmul.f32 %v3663, %v3667
    %3671 = vrot.lane.b32.xlu0 %v3669, 64
    %v3672 = vpop.permute.xlu0 %3671
    %v3674 = vadd.f32 %v3584, %v3672
    %v3675 = vtanh.pop %v3674
    %v3676 = vsub.f32 1.0, %v3663
    %3678 = vrot.lane.b32.xlu0 %v3675, 96
    %v3679 = vpop.permute.xlu0 %3678
    %v3681 = vmul.f32 %v3676, %v3679
    %v3682 = vmul.f32 %v3663, %v3198
    %v3683 = vadd.f32 %v3681, %v3682
    %v3684 = vadd.f32 %v3199, %v3683
    %v3685 = vmul.f32 %v3684, 0.2
    %v3686 = vld [vmem:[%s17] sm:$0xff]
    %v3687 = vld [vmem:[%s17 + $0x8] sm:$0xff]
    %v3688 = vld [vmem:[%s17 + $0x10] sm:$0xff]
    %v3689 = vld [vmem:[%s17 + $0x18] sm:$0xff]
    %v3690 = vld [vmem:[%s18] sm:$0x1]
    %v3692 = vlaneseq
    %v3693 = vshrl.u32 %v3692, 7
    %v3694 = vsub.s32 0, %v3693
    %v3695 = vrot.slane %v3690, %v3694
    %3698 = vrot.lane.b32.xlu0 %v3685, 96
    %v3699 = vpop.permute.xlu0 %3698
    %v3700 = vsel %vm193, %v3699, 0
    %3702 = vmatprep.subr.mxu0 0.0
    %3703 = vmatpush1.msra.mxu0 0.0
    %3704 = vmatprep.subr.mxu0 0.0
    %3705 = vmatpush1.msra.mxu0 0.0
    %3706 = vmatprep.subr.mxu0 0.0
    %3707 = vmatpush1.msra.mxu0 0.0
    %3708 = vmatprep.subr.mxu0 0.0
    %3709 = vmatpush1.msra.mxu0 0.0
    %3710 = vmatprep.subr.mxu0 0.0
    %3711 = vmatpush1.msra.mxu0 0.0
    %3712 = vmatprep.subr.mxu0 0.0
    %3713 = vmatpush1.msra.mxu0 0.0
    %3714 = vmatprep.subr.mxu0 0.0
    %3715 = vmatpush1.msra.mxu0 0.0
    %3716 = vmatprep.subr.mxu0 0.0
    %3717 = vmatpush1.msra.mxu0 0.0
    %3718 = vmatprep.subr.mxu0 0.0
    %3719 = vmatpush1.msra.mxu0 0.0
    %3720 = vmatprep.subr.mxu0 0.0
    %3721 = vmatpush1.msra.mxu0 0.0
    %3722 = vmatprep.subr.mxu0 0.0
    %3723 = vmatpush1.msra.mxu0 0.0
    %3724 = vmatprep.subr.mxu0 0.0
    %3725 = vmatpush1.msra.mxu0 0.0
    %3726 = vmatprep.subr.mxu0 0.0
    %3727 = vmatpush1.msra.mxu0 %v3689
    %3728 = vmatprep.subr.mxu0 0.0
    %3729 = vmatpush1.msra.mxu0 %v3688
    %3730 = vmatprep.subr.mxu0 0.0
    %3731 = vmatpush1.msra.mxu0 %v3687
    %3732 = vmatprep.subr.mxu0 0.0
    %3733 = vmatpush1.msra.mxu0 %v3686
    %3734 = vmatprep.subr.mxu0 0.0
    %3735 = vmatpush2.msra.mxu0 0.0
    %3736 = vmatprep.subr.mxu0 0.0
    %3737 = vmatpush2.msra.mxu0 0.0
    %3738 = vmatprep.subr.mxu0 0.0
    %3739 = vmatpush2.msra.mxu0 0.0
    %3740 = vmatprep.subr.mxu0 0.0
    %3741 = vmatpush2.msra.mxu0 0.0
    %3742 = vmatprep.subr.mxu0 0.0
    %3743 = vmatpush2.msra.mxu0 0.0
    %3744 = vmatprep.subr.mxu0 0.0
    %3745 = vmatpush2.msra.mxu0 0.0
    %3746 = vmatprep.subr.mxu0 0.0
    %3747 = vmatpush2.msra.mxu0 0.0
    %3748 = vmatprep.subr.mxu0 0.0
    %3749 = vmatpush2.msra.mxu0 0.0
    %3750 = vmatprep.subr.mxu0 0.0
    %3751 = vmatpush2.msra.mxu0 0.0
    %3752 = vmatprep.subr.mxu0 0.0
    %3753 = vmatpush2.msra.mxu0 0.0
    %3754 = vmatprep.subr.mxu0 0.0
    %3755 = vmatpush2.msra.mxu0 0.0
    %3756 = vmatprep.subr.mxu0 0.0
    %3757 = vmatpush2.msra.mxu0 0.0
    %3758 = vmatprep.subr.mxu0 0.0
    %3759 = vmatpush2.msra.mxu0 0.0
    %3760 = vmatprep.subr.mxu0 0.0
    %3761 = vmatpush2.msra.mxu0 0.0
    %3762 = vmatprep.subr.mxu0 0.0
    %3763 = vmatpush2.msra.mxu0 0.0
    %3764 = vmatprep.subr.mxu0 0.0
    %3765 = vmatpush2.msra.mxu0 0.0
    %3766 = vmatprep.mubr.f32.mxu0 0.0
    %3767 = vmatmul.mubr.f32.gmra.mxu0 %v3700
    %v3768 = vpop.f32.mrf.mxu0
    %v3769 = vadd.f32 %v3695, %v3768
    %v3770 = vpop.f32.mrf.mxu0
    %3771 = vdwg.mxu0
    %vm3772 = vcmask 25600
    %v3773 = vsel %vm3772, %v3769, -inf
    %3774 = vmax.xlane.f32.xlu0 %v3773
    %v3775 = vpop.xlane.xlu0 %3774
    %v3776 = vsub.f32 %v3769, %v3775
    %v3777 = vmul.f32 %v3776, 1.442695
    %v3778 = vpow.pop %v3777
    %v3779 = vsel %vm3772, %v3778, 0.0
    %3780 = vadd.xlane.f32.xlu0 %v3779
    %v3781 = vpop.xlane.xlu0 %3780
    %v3782 = vlog2.pop %v3781
    %v3783 = vmul.f32 %v3782, 0.6931472
    %v3784 = vadd.f32 %v3783, %v3775
    %v3785 = vsub.f32 %v3769, %v3784
    %3786 = vst.msk [vmem:[#allocation17] sm:$0x3] %vm3772, %v3785
    // Predicated region
    $region114: #{tpu_custom_call.1} parent=1 // pred_check
      _
    $region115: #{tpu_custom_call.1} parent=1 // pred_check_branch
      %3788 = sbr.rel (0) target = $region117
    $region116: #{tpu_custom_call.1} parent=1 // pred_region
      %s3790 = ssub.s32 32, 32
      %3791 = vsyncadd [#allocation4], %s3790
      %s3793 = sshll.u32 [#allocation17], 4
      %s3794 = int_to_ptr.vmem [resolvable:$true] %s3793
      %3796 = dma.vmem_to_hbm [thread:$0]  %s3794, 32, %s19, [#allocation4]
    $region117: #{tpu_custom_call.1} parent=1 // pred_fallthru
      _
    // Predicated region
    $region118: #{tpu_custom_call.1} parent=1 // pred_check
      _
    $region119: #{tpu_custom_call.1} parent=1 // pred_check_branch
      %3798 = sbr.rel (0) target = $region121
    $region120: #{tpu_custom_call.1} parent=1 // pred_region
      %s3800 = ssub.s32 160, 160
      %3801 = vsyncadd [#allocation19], %s3800
      %s3802 = sshll.u32 [#allocation18], 4
      %s3803 = int_to_ptr.vmem [resolvable:$true] %s3802
      %3808 = dma.vmem_to_hbm [thread:$0]  %s3803, 160, %s20, [#allocation19], 32, 32, 2
    $region121: #{tpu_custom_call.1} parent=1 // pred_fallthru
      _
    // Predicated region
    $region122: #{tpu_custom_call.1} parent=1 // pred_check
      _
    $region123: #{tpu_custom_call.1} parent=1 // pred_check_branch
      %3810 = sbr.rel (0) target = $region125
    $region124: #{tpu_custom_call.1} parent=1 // pred_region
      %3811 = dma.done [#allocation4], 32
    $region125: #{tpu_custom_call.1} parent=1 // pred_fallthru
      _
    // Predicated region
    $region126: #{tpu_custom_call.1} parent=1 // pred_check
      _
    $region127: #{tpu_custom_call.1} parent=1 // pred_check_branch
      %3813 = sbr.rel (0) target = $region129
    $region128: #{tpu_custom_call.1} parent=1 // pred_region
      %3814 = dma.done [#allocation19], 160
    $region129: #{tpu_custom_call.1} parent=1 // pred_fallthru
      _
    %3815 = vsyncpa [#allocation3], 1
    %3816 = vsyncpa [#allocation6], 1
    %3817 = vsyncpa [#allocation9], 1
    %3818 = vsyncpa [#allocation12], 1
    %3819 = vsyncpa [#allocation15], 1
    %3820 = vsyncpa [#allocation4], 1
    %3821 = vsyncpa [#allocation19], 1

</llo_original>
